<compile_context>
chip_gen: v6e
topology: v6e:2x2x1
jax: 0.10.0
libtpu: 0.0.40
codegen_flags: <defaults>
</compile_context>

<pallas_src>
import functools

import jax
import jax.numpy as jnp
from jax.experimental import pallas as pl
from jax.experimental.pallas import tpu as pltpu

LANE = 128                      # lane width; Cout / K padded to multiples of this
MXU_DTYPE = jnp.bfloat16        # MXU operand dtype (f32 accumulation)
_BN_EPS = 1e-5
_VMEM_LIMIT = 32 * 1024 * 1024  # explicit VMEM budget (safe on v7x's 64 MiB)


def _round_up(x, m):
    return (x + m - 1) // m * m


def _pick_tk(k_pad):
    return 256 if (k_pad % 256 == 0 and k_pad >= 256) else 128


# ---------------------------------------------------------------------------
# Pallas kernels
# ---------------------------------------------------------------------------
def _gemm_bias_act_kernel(p_ref, w_ref, b_ref, o_ref, acc_ref, *, relu):
    """o = act(p @ w + b); grid = (M tiles, K tiles), K innermost (arbitrary)."""
    k = pl.program_id(1)

    @pl.when(k == 0)
    def _():
        acc_ref[...] = jnp.zeros_like(acc_ref)

    acc_ref[...] += jnp.dot(p_ref[...], w_ref[...],
                            preferred_element_type=jnp.float32)

    @pl.when(k == pl.num_programs(1) - 1)
    def _():
        y = acc_ref[...] + b_ref[...]
        if relu:
            y = jnp.maximum(y, 0.0)
        o_ref[...] = y.astype(o_ref.dtype)


def _gemm_bias_add_se_relu_kernel(p_ref, w_ref, b_ref, x3_ref, se_ref,
                                  o_ref, acc_ref):
    """o = relu((p @ w + b) + x3 * se); grid = (N, HW tiles, K tiles)."""
    k = pl.program_id(2)

    @pl.when(k == 0)
    def _():
        acc_ref[...] = jnp.zeros_like(acc_ref)

    acc_ref[...] += jnp.dot(p_ref[0], w_ref[...],
                            preferred_element_type=jnp.float32)

    @pl.when(k == pl.num_programs(2) - 1)
    def _():
        x2 = acc_ref[...] + b_ref[...]          # (tm, Cpad) conv2 + bn2
        x3 = x3_ref[0] * se_ref[0]              # SE-gated shortcut branch
        o_ref[0] = jnp.maximum(x2 + x3, 0.0).astype(o_ref.dtype)


# ---------------------------------------------------------------------------
# pallas_call wrappers
# ---------------------------------------------------------------------------
def _gemm_bias_act(patches, w_mat, bias_row, *, relu, out_dtype):
    m, k_pad = patches.shape
    _, n_pad = w_mat.shape
    tm = min(512, _round_up(m, 16))
    m_pad = _round_up(m, tm)
    if m_pad != m:
        patches = jnp.pad(patches, ((0, m_pad - m), (0, 0)))
    tk = _pick_tk(k_pad)
    grid = (m_pad // tm, k_pad // tk)
    bytes_accessed = int(patches.size * patches.dtype.itemsize
                         + w_mat.size * w_mat.dtype.itemsize * grid[0]
                         + m_pad * n_pad * jnp.dtype(out_dtype).itemsize)
    return pl.pallas_call(
        functools.partial(_gemm_bias_act_kernel, relu=relu),
        out_shape=jax.ShapeDtypeStruct((m_pad, n_pad), out_dtype),
        grid_spec=pltpu.PrefetchScalarGridSpec(
            num_scalar_prefetch=0,
            grid=grid,
            in_specs=[
                pl.BlockSpec((tm, tk), lambda i, k: (i, k)),       # patches tile
                pl.BlockSpec((tk, n_pad), lambda i, k: (k, 0)),    # weight K-slab
                pl.BlockSpec((1, n_pad), lambda i, k: (0, 0)),     # folded BN bias
            ],
            out_specs=pl.BlockSpec((tm, n_pad), lambda i, k: (i, 0)),
            scratch_shapes=[pltpu.VMEM((tm, n_pad), jnp.float32)],
        ),
        compiler_params=pltpu.CompilerParams(
            dimension_semantics=("parallel", "arbitrary"),
            vmem_limit_bytes=_VMEM_LIMIT,
        ),
        cost_estimate=pl.CostEstimate(
            flops=int(2 * m_pad * k_pad * n_pad), transcendentals=0,
            bytes_accessed=bytes_accessed),
    )(patches, w_mat, bias_row)


def _fused_conv2_se_residual(patches, w_mat, bias_row, x3_b, gate_b):
    n, hw_pad, k_pad = patches.shape
    _, n_pad = w_mat.shape
    tm = min(512, hw_pad)
    assert hw_pad % tm == 0
    tk = _pick_tk(k_pad)
    bytes_accessed = int(patches.size * patches.dtype.itemsize
                         + x3_b.size * x3_b.dtype.itemsize
                         + n * hw_pad * n_pad * 4)
    return pl.pallas_call(
        _gemm_bias_add_se_relu_kernel,
        out_shape=jax.ShapeDtypeStruct((n, hw_pad, n_pad), jnp.float32),
        grid_spec=pltpu.PrefetchScalarGridSpec(
            num_scalar_prefetch=0,
            grid=(n, hw_pad // tm, k_pad // tk),
            in_specs=[
                pl.BlockSpec((1, tm, tk), lambda b, i, k: (b, i, k)),     # x1 patches
                pl.BlockSpec((tk, n_pad), lambda b, i, k: (k, 0)),        # conv2 weight
                pl.BlockSpec((1, n_pad), lambda b, i, k: (0, 0)),         # folded bias
                pl.BlockSpec((1, tm, n_pad), lambda b, i, k: (b, i, 0)),  # shortcut x3
                pl.BlockSpec((1, 1, n_pad), lambda b, i, k: (b, 0, 0)),   # SE gate
            ],
            out_specs=pl.BlockSpec((1, tm, n_pad), lambda b, i, k: (b, i, 0)),
            scratch_shapes=[pltpu.VMEM((tm, n_pad), jnp.float32)],
        ),
        compiler_params=pltpu.CompilerParams(
            dimension_semantics=("parallel", "parallel", "arbitrary"),
            vmem_limit_bytes=_VMEM_LIMIT,
        ),
        cost_estimate=pl.CostEstimate(
            flops=int(2 * n * hw_pad * k_pad * n_pad), transcendentals=0,
            bytes_accessed=bytes_accessed),
    )(patches, w_mat, bias_row, x3_b, gate_b)


# ---------------------------------------------------------------------------
# JAX glue: BN folding, im2col, SE gate, layout
# ---------------------------------------------------------------------------
def _fold_bn(w_oihw, conv_b, gamma, beta, mean, var, eps):
    scale = gamma * jax.lax.rsqrt(var + eps)
    return w_oihw * scale[:, None, None, None], (conv_b - mean) * scale + beta


def _im2col_3x3_same(x_nhwc):
    """(N,H,W,C) -> (N, H*W, 9*C); K order = (ky, kx, c). stride=1, pad=1."""
    n, h, w, c = x_nhwc.shape
    xp = jnp.pad(x_nhwc, ((0, 0), (1, 1), (1, 1), (0, 0)))
    taps = [xp[:, i:i + h, j:j + w, :] for i in range(3) for j in range(3)]
    return jnp.concatenate(taps, axis=-1).reshape(n, h * w, 9 * c)


@jax.jit
def residual_block(x, params):
    n, cin, h, w = x.shape
    w1, cb1, g1, be1, rm1, rv1 = params["conv1"]
    w2, cb2, g2, be2, rm2, rv2 = params["conv2"]
    w3, cb3, g3, be3, rm3, rv3 = params["conv3"]
    fc1_w, fc2_w = params["se"]
    cout = w1.shape[0]
    c_pad = _round_up(cout, LANE)
    hw = h * w
    m = n * hw

    w1f, b1 = _fold_bn(w1, cb1, g1, be1, rm1, rv1, _BN_EPS)
    w2f, b2 = _fold_bn(w2, cb2, g2, be2, rm2, rv2, _BN_EPS)
    w3f, b3 = _fold_bn(w3, cb3, g3, be3, rm3, rv3, _BN_EPS)

    def gemm_weight(w_oihw, k_pad):
        co, ci, kh, kw_ = w_oihw.shape
        wm = w_oihw.transpose(2, 3, 1, 0).reshape(kh * kw_ * ci, co)
        wm = jnp.pad(wm, ((0, k_pad - kh * kw_ * ci), (0, c_pad - co)))
        return wm.astype(MXU_DTYPE)

    def bias_row(b):
        return jnp.pad(b, (0, c_pad - cout)).reshape(1, c_pad).astype(jnp.float32)

    x_nhwc = jnp.transpose(x, (0, 2, 3, 1))                        # NCHW -> NHWC

    # ---- branch 1: x1 = relu(bn1(conv1(x)))  (3x3, pad 1) -----------------
    k1 = 9 * cin
    k1_pad = _round_up(k1, LANE)
    p1 = _im2col_3x3_same(x_nhwc).reshape(m, k1)
    p1 = jnp.pad(p1, ((0, 0), (0, k1_pad - k1))).astype(MXU_DTYPE)
    x1_flat = _gemm_bias_act(p1, gemm_weight(w1f, k1_pad), bias_row(b1),
                             relu=True, out_dtype=MXU_DTYPE)[:m]
    x1_nhwc = x1_flat.reshape(n, h, w, c_pad)[..., :cout]

    # ---- branch 3: x3 = bn3(conv3(x))  (1x1, pad 0) ------------------------
    k3_pad = _round_up(cin, LANE)
    p3 = jnp.pad(x_nhwc.reshape(m, cin), ((0, 0), (0, k3_pad - cin))).astype(MXU_DTYPE)
    x3_flat = _gemm_bias_act(p3, gemm_weight(w3f, k3_pad), bias_row(b3),
                             relu=False, out_dtype=jnp.float32)[:m]
    x3_b = x3_flat.reshape(n, hw, c_pad)

    # ---- SE gate (tiny (N, C) matmuls -> plain JAX glue) -------------------
    pooled = jnp.mean(x3_b[:, :, :cout], axis=1)                   # (N, Cout)
    gate = jax.nn.sigmoid(jnp.maximum(pooled @ fc1_w.T, 0.0) @ fc2_w.T)
    gate = jnp.pad(gate, ((0, 0), (0, c_pad - cout))).reshape(n, 1, c_pad)
    gate = gate.astype(jnp.float32)

    # ---- fused: relu(bn2(conv2(x1)) + gate * x3) ---------------------------
    k2 = 9 * cout
    k2_pad = _round_up(k2, LANE)
    p2 = _im2col_3x3_same(x1_nhwc)
    p2 = jnp.pad(p2, ((0, 0), (0, 0), (0, k2_pad - k2))).astype(MXU_DTYPE)

    tm_hw = min(512, _round_up(hw, 16))
    hw_pad = _round_up(hw, tm_hw)
    if hw_pad != hw:
        p2 = jnp.pad(p2, ((0, 0), (0, hw_pad - hw), (0, 0)))
        x3_b = jnp.pad(x3_b, ((0, 0), (0, hw_pad - hw), (0, 0)))

    out = _fused_conv2_se_residual(p2, gemm_weight(w2f, k2_pad), bias_row(b2),
                                   x3_b, gate)

    out = out[:, :hw, :cout].reshape(n, h, w, cout)
    return jnp.transpose(out, (0, 3, 1, 2))                        # back to NCHW


# ---------------------------------------------------------------------------
# Reference (same folded-BN / bf16-operand math via lax.conv)
# ---------------------------------------------------------------------------
def _reference(x, params):
    w1, cb1, g1, be1, rm1, rv1 = params["conv1"]
    w2, cb2, g2, be2, rm2, rv2 = params["conv2"]
    w3, cb3, g3, be3, rm3, rv3 = params["conv3"]
    fc1_w, fc2_w = params["se"]

    w1f, b1 = _fold_bn(w1, cb1, g1, be1, rm1, rv1, _BN_EPS)
    w2f, b2 = _fold_bn(w2, cb2, g2, be2, rm2, rv2, _BN_EPS)
    w3f, b3 = _fold_bn(w3, cb3, g3, be3, rm3, rv3, _BN_EPS)

    def conv(inp, wf, b, pad):
        y = jax.lax.conv_general_dilated(
            inp.astype(MXU_DTYPE), wf.astype(MXU_DTYPE),
            window_strides=(1, 1), padding=((pad, pad), (pad, pad)),
            dimension_numbers=("NCHW", "OIHW", "NCHW"),
            preferred_element_type=jnp.float32)
        return y + b[None, :, None, None]

    x1 = jnp.maximum(conv(x, w1f, b1, 1), 0.0)
    x1 = x1.astype(MXU_DTYPE).astype(jnp.float32)   # mirror bf16 storage of x1
    x2 = conv(x1, w2f, b2, 1)
    x3 = conv(x, w3f, b3, 0)
    pooled = jnp.mean(x3, axis=(2, 3))
    gate = jax.nn.sigmoid(jnp.maximum(pooled @ fc1_w.T, 0.0) @ fc2_w.T)
    return jnp.maximum(x2 + x3 * gate[:, :, None, None], 0.0)


if __name__ == "__main__":
    # ResidualBlock(in_c=4, out_c=32); SELayer(32, reduction=16) -> hidden = 2
    N, CIN, COUT, H, W = 2, 4, 32, 16, 16
    HID = int(COUT / 16)

    key = jax.random.PRNGKey(0)
    ks = jax.random.split(key, 21)

    def conv_bn_params(keys, ci, co, ksz):
        kw_, kcb, kg, kb, km, kv = keys
        wgt = 0.1 * jax.random.normal(kw_, (co, ci, ksz, ksz), dtype=jnp.float32)
        cbias = 0.1 * jax.random.normal(kcb, (co,), dtype=jnp.float32)
        gamma = 1.0 + 0.1 * jax.random.normal(kg, (co,), dtype=jnp.float32)
        beta = 0.1 * jax.random.normal(kb, (co,), dtype=jnp.float32)
        mean = 0.1 * jax.random.normal(km, (co,), dtype=jnp.float32)
        var = 1.0 + 0.1 * jax.random.uniform(kv, (co,), dtype=jnp.float32)
        return (wgt, cbias, gamma, beta, mean, var)

    params = {
        "conv1": conv_bn_params(ks[1:7], CIN, COUT, 3),
        "conv2": conv_bn_params(ks[7:13], COUT, COUT, 3),
        "conv3": conv_bn_params(ks[13:19], CIN, COUT, 1),
        "se": (0.5 * jax.random.normal(ks[19], (HID, COUT), dtype=jnp.float32),
               0.5 * jax.random.normal(ks[20], (COUT, HID), dtype=jnp.float32)),
    }

    x = jax.random.normal(ks[0], (N, CIN, H, W), dtype=jnp.float32)

    out = residual_block(x, params)
    out = jax.block_until_ready(out)

    ref = _reference(x, params)
    assert out.shape == (N, COUT, H, W), out.shape
    max_err = float(jnp.max(jnp.abs(out - ref)))
    assert jnp.allclose(out, ref, atol=1e-2, rtol=1e-2), max_err
    print("KERNEL_OK")
</pallas_src>

<mosaic_0001>
module attributes {stable_mosaic.version = 11 : i64} {
  func.func @_gemm_bias_act_kernel(%arg0: i32, %arg1: i32, %arg2: memref<512x128xbf16, #tpu.memory_space<vmem>>, %arg3: memref<128x128xbf16, #tpu.memory_space<vmem>>, %arg4: memref<1x128xf32, #tpu.memory_space<vmem>>, %arg5: memref<512x128xbf16, #tpu.memory_space<vmem>>, %arg6: memref<512x128xf32, #tpu.memory_space<vmem>>) attributes {dimension_semantics = [#tpu.dimension_semantics<parallel>, #tpu.dimension_semantics<arbitrary>], iteration_bounds = array<i64: 1, 1>, scalar_prefetch = 0 : i64, scratch_operands = 1 : i64, tpu.core_type = #tpu.core_type<tc>, window_params = [{transform_indices = @transform_0, window_bounds = array<i64: 512, 128>}, {transform_indices = @transform_1, window_bounds = array<i64: 128, 128>}, {pipeline_mode = #tpu.pipeline_mode<synchronous>, transform_indices = @transform_2, window_bounds = array<i64: 1, 128>}, {transform_indices = @transform_3, window_bounds = array<i64: 512, 128>}]} {
    %c0_i32 = arith.constant 0 : i32
    %0 = arith.cmpi eq, %arg1, %c0_i32 : i32
    %1 = arith.extui %0 : i1 to i32
    %c0_i32_0 = arith.constant 0 : i32
    %2 = arith.cmpi ne, %1, %c0_i32_0 : i32
    scf.if %2 {
      %cst_10 = arith.constant 0.000000e+00 : f32
      %12 = vector.broadcast %cst_10 : f32 to vector<512x128xf32>
      %c0_11 = arith.constant 0 : index
      %c0_12 = arith.constant 0 : index
      %13 = vector.load %arg6[%c0_11, %c0_12] : memref<512x128xf32, #tpu.memory_space<vmem>>, vector<512x128xf32>
      tpu.vector_store %arg6[%c0_11, %c0_12], %12 {strides = array<i32>} : memref<512x128xf32, #tpu.memory_space<vmem>>, vector<512x128xf32>,
    } else {
    }
    %c0 = arith.constant 0 : index
    %c0_1 = arith.constant 0 : index
    %3 = vector.load %arg6[%c0, %c0_1] : memref<512x128xf32, #tpu.memory_space<vmem>>, vector<512x128xf32>
    %c0_2 = arith.constant 0 : index
    %c0_3 = arith.constant 0 : index
    %4 = vector.load %arg2[%c0_2, %c0_3] : memref<512x128xbf16, #tpu.memory_space<vmem>>, vector<512x128xbf16>
    %c0_4 = arith.constant 0 : index
    %c0_5 = arith.constant 0 : index
    %5 = vector.load %arg3[%c0_4, %c0_5] : memref<128x128xbf16, #tpu.memory_space<vmem>>, vector<128x128xbf16>
    %cst = arith.constant dense<0.000000e+00> : vector<512x128xf32>
    %6 = tpu.matmul %4, %5, %cst {dimension_numbers = #tpu.dot_dimension_numbers<[1], [0], [0], [1], [0, 0, 1, 1], [], []>} : vector<512x128xbf16>, vector<128x128xbf16>, vector<512x128xf32> -> vector<512x128xf32>
    %7 = arith.addf %3, %6 : vector<512x128xf32>
    %c0_6 = arith.constant 0 : index
    %c0_7 = arith.constant 0 : index
    %8 = vector.load %arg6[%c0_6, %c0_7] : memref<512x128xf32, #tpu.memory_space<vmem>>, vector<512x128xf32>
    tpu.vector_store %arg6[%c0_6, %c0_7], %7 {strides = array<i32>} : memref<512x128xf32, #tpu.memory_space<vmem>>, vector<512x128xf32>,
    %c0_i32_8 = arith.constant 0 : i32
    %9 = arith.cmpi eq, %arg1, %c0_i32_8 : i32
    %10 = arith.extui %9 : i1 to i32
    %c0_i32_9 = arith.constant 0 : i32
    %11 = arith.cmpi ne, %10, %c0_i32_9 : i32
    scf.if %11 {
      %c0_10 = arith.constant 0 : index
      %c0_11 = arith.constant 0 : index
      %12 = vector.load %arg6[%c0_10, %c0_11] : memref<512x128xf32, #tpu.memory_space<vmem>>, vector<512x128xf32>
      %c0_12 = arith.constant 0 : index
      %c0_13 = arith.constant 0 : index
      %13 = vector.load %arg4[%c0_12, %c0_13] : memref<1x128xf32, #tpu.memory_space<vmem>>, vector<1x128xf32>
      %14 = vector.broadcast %13 : vector<1x128xf32> to vector<512x128xf32>
      %15 = arith.addf %12, %14 : vector<512x128xf32>
      %cst_14 = arith.constant 0.000000e+00 : f32
      %16 = vector.broadcast %cst_14 : f32 to vector<512x128xf32>
      %17 = arith.maximumf %15, %16 : vector<512x128xf32>
      %18 = arith.truncf %17 : vector<512x128xf32> to vector<512x128xbf16>
      %c0_15 = arith.constant 0 : index
      %c0_16 = arith.constant 0 : index
      %19 = vector.load %arg5[%c0_15, %c0_16] : memref<512x128xbf16, #tpu.memory_space<vmem>>, vector<512x128xbf16>
      tpu.vector_store %arg5[%c0_15, %c0_16], %18 {strides = array<i32>} : memref<512x128xbf16, #tpu.memory_space<vmem>>, vector<512x128xbf16>,
    } else {
    }
    return
  }
  func.func @transform_0(%arg0: i32, %arg1: i32) -> (i32, i32) {
    %c0_i32 = arith.constant 0 : i32
    return %arg0, %arg1 : i32, i32
  }
  func.func @transform_1(%arg0: i32, %arg1: i32) -> (i32, i32) {
    %c0_i32 = arith.constant 0 : i32
    %c0_i32_0 = arith.constant 0 : i32
    return %arg1, %c0_i32 : i32, i32
  }
  func.func @transform_2(%arg0: i32, %arg1: i32) -> (i32, i32) {
    %c0_i32 = arith.constant 0 : i32
    %c0_i32_0 = arith.constant 0 : i32
    %c0_i32_1 = arith.constant 0 : i32
    return %c0_i32, %c0_i32_0 : i32, i32
  }
  func.func @transform_3(%arg0: i32, %arg1: i32) -> (i32, i32) {
    %c0_i32 = arith.constant 0 : i32
    %c0_i32_0 = arith.constant 0 : i32
    return %arg0, %c0_i32 : i32, i32
  }
}

module attributes {stable_mosaic.version = 11 : i64} {
  func.func @_gemm_bias_act_kernel(%arg0: i32, %arg1: i32, %arg2: memref<512x128xbf16, #tpu.memory_space<vmem>>, %arg3: memref<128x128xbf16, #tpu.memory_space<vmem>>, %arg4: memref<1x128xf32, #tpu.memory_space<vmem>>, %arg5: memref<512x128xf32, #tpu.memory_space<vmem>>, %arg6: memref<512x128xf32, #tpu.memory_space<vmem>>) attributes {dimension_semantics = [#tpu.dimension_semantics<parallel>, #tpu.dimension_semantics<arbitrary>], iteration_bounds = array<i64: 1, 1>, scalar_prefetch = 0 : i64, scratch_operands = 1 : i64, tpu.core_type = #tpu.core_type<tc>, window_params = [{transform_indices = @transform_0, window_bounds = array<i64: 512, 128>}, {transform_indices = @transform_1, window_bounds = array<i64: 128, 128>}, {pipeline_mode = #tpu.pipeline_mode<synchronous>, transform_indices = @transform_2, window_bounds = array<i64: 1, 128>}, {transform_indices = @transform_3, window_bounds = array<i64: 512, 128>}]} {
    %c0_i32 = arith.constant 0 : i32
    %0 = arith.cmpi eq, %arg1, %c0_i32 : i32
    %1 = arith.extui %0 : i1 to i32
    %c0_i32_0 = arith.constant 0 : i32
    %2 = arith.cmpi ne, %1, %c0_i32_0 : i32
    scf.if %2 {
      %cst_10 = arith.constant 0.000000e+00 : f32
      %12 = vector.broadcast %cst_10 : f32 to vector<512x128xf32>
      %c0_11 = arith.constant 0 : index
      %c0_12 = arith.constant 0 : index
      %13 = vector.load %arg6[%c0_11, %c0_12] : memref<512x128xf32, #tpu.memory_space<vmem>>, vector<512x128xf32>
      tpu.vector_store %arg6[%c0_11, %c0_12], %12 {strides = array<i32>} : memref<512x128xf32, #tpu.memory_space<vmem>>, vector<512x128xf32>,
    } else {
    }
    %c0 = arith.constant 0 : index
    %c0_1 = arith.constant 0 : index
    %3 = vector.load %arg6[%c0, %c0_1] : memref<512x128xf32, #tpu.memory_space<vmem>>, vector<512x128xf32>
    %c0_2 = arith.constant 0 : index
    %c0_3 = arith.constant 0 : index
    %4 = vector.load %arg2[%c0_2, %c0_3] : memref<512x128xbf16, #tpu.memory_space<vmem>>, vector<512x128xbf16>
    %c0_4 = arith.constant 0 : index
    %c0_5 = arith.constant 0 : index
    %5 = vector.load %arg3[%c0_4, %c0_5] : memref<128x128xbf16, #tpu.memory_space<vmem>>, vector<128x128xbf16>
    %cst = arith.constant dense<0.000000e+00> : vector<512x128xf32>
    %6 = tpu.matmul %4, %5, %cst {dimension_numbers = #tpu.dot_dimension_numbers<[1], [0], [0], [1], [0, 0, 1, 1], [], []>} : vector<512x128xbf16>, vector<128x128xbf16>, vector<512x128xf32> -> vector<512x128xf32>
    %7 = arith.addf %3, %6 : vector<512x128xf32>
    %c0_6 = arith.constant 0 : index
    %c0_7 = arith.constant 0 : index
    %8 = vector.load %arg6[%c0_6, %c0_7] : memref<512x128xf32, #tpu.memory_space<vmem>>, vector<512x128xf32>
    tpu.vector_store %arg6[%c0_6, %c0_7], %7 {strides = array<i32>} : memref<512x128xf32, #tpu.memory_space<vmem>>, vector<512x128xf32>,
    %c0_i32_8 = arith.constant 0 : i32
    %9 = arith.cmpi eq, %arg1, %c0_i32_8 : i32
    %10 = arith.extui %9 : i1 to i32
    %c0_i32_9 = arith.constant 0 : i32
    %11 = arith.cmpi ne, %10, %c0_i32_9 : i32
    scf.if %11 {
      %c0_10 = arith.constant 0 : index
      %c0_11 = arith.constant 0 : index
      %12 = vector.load %arg6[%c0_10, %c0_11] : memref<512x128xf32, #tpu.memory_space<vmem>>, vector<512x128xf32>
      %c0_12 = arith.constant 0 : index
      %c0_13 = arith.constant 0 : index
      %13 = vector.load %arg4[%c0_12, %c0_13] : memref<1x128xf32, #tpu.memory_space<vmem>>, vector<1x128xf32>
      %14 = vector.broadcast %13 : vector<1x128xf32> to vector<512x128xf32>
      %15 = arith.addf %12, %14 : vector<512x128xf32>
      %c0_14 = arith.constant 0 : index
      %c0_15 = arith.constant 0 : index
      %16 = vector.load %arg5[%c0_14, %c0_15] : memref<512x128xf32, #tpu.memory_space<vmem>>, vector<512x128xf32>
      tpu.vector_store %arg5[%c0_14, %c0_15], %15 {strides = array<i32>} : memref<512x128xf32, #tpu.memory_space<vmem>>, vector<512x128xf32>,
    } else {
    }
    return
  }
  func.func @transform_0(%arg0: i32, %arg1: i32) -> (i32, i32) {
    %c0_i32 = arith.constant 0 : i32
    return %arg0, %arg1 : i32, i32
  }
  func.func @transform_1(%arg0: i32, %arg1: i32) -> (i32, i32) {
    %c0_i32 = arith.constant 0 : i32
    %c0_i32_0 = arith.constant 0 : i32
    return %arg1, %c0_i32 : i32, i32
  }
  func.func @transform_2(%arg0: i32, %arg1: i32) -> (i32, i32) {
    %c0_i32 = arith.constant 0 : i32
    %c0_i32_0 = arith.constant 0 : i32
    %c0_i32_1 = arith.constant 0 : i32
    return %c0_i32, %c0_i32_0 : i32, i32
  }
  func.func @transform_3(%arg0: i32, %arg1: i32) -> (i32, i32) {
    %c0_i32 = arith.constant 0 : i32
    %c0_i32_0 = arith.constant 0 : i32
    return %arg0, %c0_i32 : i32, i32
  }
}

module attributes {stable_mosaic.version = 11 : i64} {
  func.func @_gemm_bias_add_se_relu_kernel(%arg0: i32, %arg1: i32, %arg2: i32, %arg3: memref<1x256x128xbf16, #tpu.memory_space<vmem>>, %arg4: memref<128x128xbf16, #tpu.memory_space<vmem>>, %arg5: memref<1x128xf32, #tpu.memory_space<vmem>>, %arg6: memref<1x256x128xf32, #tpu.memory_space<vmem>>, %arg7: memref<1x1x128xf32, #tpu.memory_space<vmem>>, %arg8: memref<1x256x128xf32, #tpu.memory_space<vmem>>, %arg9: memref<256x128xf32, #tpu.memory_space<vmem>>) attributes {dimension_semantics = [#tpu.dimension_semantics<parallel>, #tpu.dimension_semantics<parallel>, #tpu.dimension_semantics<arbitrary>], iteration_bounds = array<i64: 2, 1, 3>, scalar_prefetch = 0 : i64, scratch_operands = 1 : i64, tpu.core_type = #tpu.core_type<tc>, window_params = [{transform_indices = @transform_0, window_bounds = array<i64: 1, 256, 128>}, {transform_indices = @transform_1, window_bounds = array<i64: 128, 128>}, {pipeline_mode = #tpu.pipeline_mode<synchronous>, transform_indices = @transform_2, window_bounds = array<i64: 1, 128>}, {transform_indices = @transform_3, window_bounds = array<i64: 1, 256, 128>}, {transform_indices = @transform_4, window_bounds = array<i64: 1, 1, 128>}, {transform_indices = @transform_5, window_bounds = array<i64: 1, 256, 128>}]} {
    %c0_i32 = arith.constant 0 : i32
    %0 = arith.cmpi eq, %arg2, %c0_i32 : i32
    %1 = arith.extui %0 : i1 to i32
    %c0_i32_0 = arith.constant 0 : i32
    %2 = arith.cmpi ne, %1, %c0_i32_0 : i32
    scf.if %2 {
      %cst_10 = arith.constant 0.000000e+00 : f32
      %13 = vector.broadcast %cst_10 : f32 to vector<256x128xf32>
      %c0_11 = arith.constant 0 : index
      %c0_12 = arith.constant 0 : index
      %14 = vector.load %arg9[%c0_11, %c0_12] : memref<256x128xf32, #tpu.memory_space<vmem>>, vector<256x128xf32>
      tpu.vector_store %arg9[%c0_11, %c0_12], %13 {strides = array<i32>} : memref<256x128xf32, #tpu.memory_space<vmem>>, vector<256x128xf32>,
    } else {
    }
    %c0 = arith.constant 0 : index
    %c0_1 = arith.constant 0 : index
    %3 = vector.load %arg9[%c0, %c0_1] : memref<256x128xf32, #tpu.memory_space<vmem>>, vector<256x128xf32>
    %c0_2 = arith.constant 0 : index
    %c0_3 = arith.constant 0 : index
    %c0_4 = arith.constant 0 : index
    %4 = vector.load %arg3[%c0_2, %c0_3, %c0_4] : memref<1x256x128xbf16, #tpu.memory_space<vmem>>, vector<1x256x128xbf16>
    %5 = vector.shape_cast %4 : vector<1x256x128xbf16> to vector<256x128xbf16>
    %c0_5 = arith.constant 0 : index
    %c0_6 = arith.constant 0 : index
    %6 = vector.load %arg4[%c0_5, %c0_6] : memref<128x128xbf16, #tpu.memory_space<vmem>>, vector<128x128xbf16>
    %cst = arith.constant dense<0.000000e+00> : vector<256x128xf32>
    %7 = tpu.matmul %5, %6, %cst {dimension_numbers = #tpu.dot_dimension_numbers<[1], [0], [0], [1], [0, 0, 1, 1], [], []>} : vector<256x128xbf16>, vector<128x128xbf16>, vector<256x128xf32> -> vector<256x128xf32>
    %8 = arith.addf %3, %7 : vector<256x128xf32>
    %c0_7 = arith.constant 0 : index
    %c0_8 = arith.constant 0 : index
    %9 = vector.load %arg9[%c0_7, %c0_8] : memref<256x128xf32, #tpu.memory_space<vmem>>, vector<256x128xf32>
    tpu.vector_store %arg9[%c0_7, %c0_8], %8 {strides = array<i32>} : memref<256x128xf32, #tpu.memory_space<vmem>>, vector<256x128xf32>,
    %c2_i32 = arith.constant 2 : i32
    %10 = arith.cmpi eq, %arg2, %c2_i32 : i32
    %11 = arith.extui %10 : i1 to i32
    %c0_i32_9 = arith.constant 0 : i32
    %12 = arith.cmpi ne, %11, %c0_i32_9 : i32
    scf.if %12 {
      %c0_10 = arith.constant 0 : index
      %c0_11 = arith.constant 0 : index
      %13 = vector.load %arg9[%c0_10, %c0_11] : memref<256x128xf32, #tpu.memory_space<vmem>>, vector<256x128xf32>
      %c0_12 = arith.constant 0 : index
      %c0_13 = arith.constant 0 : index
      %14 = vector.load %arg5[%c0_12, %c0_13] : memref<1x128xf32, #tpu.memory_space<vmem>>, vector<1x128xf32>
      %15 = vector.broadcast %14 : vector<1x128xf32> to vector<256x128xf32>
      %16 = arith.addf %13, %15 : vector<256x128xf32>
      %c0_14 = arith.constant 0 : index
      %c0_15 = arith.constant 0 : index
      %c0_16 = arith.constant 0 : index
      %17 = vector.load %arg6[%c0_14, %c0_15, %c0_16] : memref<1x256x128xf32, #tpu.memory_space<vmem>>, vector<1x256x128xf32>
      %18 = vector.shape_cast %17 : vector<1x256x128xf32> to vector<256x128xf32>
      %c0_17 = arith.constant 0 : index
      %c0_18 = arith.constant 0 : index
      %c0_19 = arith.constant 0 : index
      %19 = vector.load %arg7[%c0_17, %c0_18, %c0_19] : memref<1x1x128xf32, #tpu.memory_space<vmem>>, vector<1x1x128xf32>
      %20 = vector.shape_cast %19 : vector<1x1x128xf32> to vector<1x128xf32>
      %21 = vector.broadcast %20 : vector<1x128xf32> to vector<256x128xf32>
      %22 = arith.mulf %18, %21 : vector<256x128xf32>
      %23 = arith.addf %16, %22 : vector<256x128xf32>
      %cst_20 = arith.constant 0.000000e+00 : f32
      %24 = vector.broadcast %cst_20 : f32 to vector<256x128xf32>
      %25 = arith.maximumf %23, %24 : vector<256x128xf32>
      %c0_21 = arith.constant 0 : index
      %c0_22 = arith.constant 0 : index
      %c0_23 = arith.constant 0 : index
      %26 = vector.load %arg8[%c0_21, %c0_22, %c0_23] : memref<1x256x128xf32, #tpu.memory_space<vmem>>, vector<1x256x128xf32>
      %27 = vector.shape_cast %26 : vector<1x256x128xf32> to vector<256x128xf32>
      %28 = vector.shape_cast %25 : vector<256x128xf32> to vector<1x256x128xf32>
      tpu.vector_store %arg8[%c0_21, %c0_22, %c0_23], %28 {strides = array<i32>} : memref<1x256x128xf32, #tpu.memory_space<vmem>>, vector<1x256x128xf32>,
    } else {
    }
    return
  }
  func.func @transform_0(%arg0: i32, %arg1: i32, %arg2: i32) -> (i32, i32, i32) {
    %c0_i32 = arith.constant 0 : i32
    return %arg0, %arg1, %arg2 : i32, i32, i32
  }
  func.func @transform_1(%arg0: i32, %arg1: i32, %arg2: i32) -> (i32, i32) {
    %c0_i32 = arith.constant 0 : i32
    %c0_i32_0 = arith.constant 0 : i32
    return %arg2, %c0_i32 : i32, i32
  }
  func.func @transform_2(%arg0: i32, %arg1: i32, %arg2: i32) -> (i32, i32) {
    %c0_i32 = arith.constant 0 : i32
    %c0_i32_0 = arith.constant 0 : i32
    %c0_i32_1 = arith.constant 0 : i32
    return %c0_i32, %c0_i32_0 : i32, i32
  }
  func.func @transform_3(%arg0: i32, %arg1: i32, %arg2: i32) -> (i32, i32, i32) {
    %c0_i32 = arith.constant 0 : i32
    %c0_i32_0 = arith.constant 0 : i32
    return %arg0, %arg1, %c0_i32 : i32, i32, i32
  }
  func.func @transform_4(%arg0: i32, %arg1: i32, %arg2: i32) -> (i32, i32, i32) {
    %c0_i32 = arith.constant 0 : i32
    %c0_i32_0 = arith.constant 0 : i32
    %c0_i32_1 = arith.constant 0 : i32
    return %arg0, %c0_i32, %c0_i32_0 : i32, i32, i32
  }
  func.func @transform_5(%arg0: i32, %arg1: i32, %arg2: i32) -> (i32, i32, i32) {
    %c0_i32 = arith.constant 0 : i32
    %c0_i32_0 = arith.constant 0 : i32
    return %arg0, %arg1, %c0_i32 : i32, i32, i32
  }
}

</mosaic_0001>

<llo_original>
// kernel: residual_block.3
$region0: #{residual_block.3}
  #allocation0 [shape = 'u32[]', space=smem, size = 0x4, offset = 0x4, fixed_abs, tag = 'smem constant byte address 0x4 - core index']
  #allocation1 [shape = 'u32[144,128]{1,0:T(1,128)}', space=vmem, size = 0x12000, scoped, tag = 'internal scratch']
  #allocation2 [shape = 'f32[512,128]{1,0:T(8,128)}', space=vmem, size = 0x40000, scoped, tag = 'scratch operand']
  %s0 = inlined_call_operand.vmem [shape: bf16[512,128], index: 0, kind: input, shape index: {}]
  %s1 = inlined_call_operand.vmem [shape: bf16[128,128], index: 1, kind: input, shape index: {}]
  %s2 = inlined_call_operand.vmem [shape: f32[1,128], index: 2, kind: input, shape index: {}]
  %s3 = inlined_call_operand.vmem [shape: bf16[512,128], index: 3, kind: output, shape index: {}]
  %s4 = sld [smem:[#allocation0]]
  $region30: #{residual_block.3} parent=0
    _
  %s6 = ssub.s32 1, %s4
  %s7 = scalar_select 0, %s6, %s4
  // Predicated region
  $region2: #{residual_block.3} parent=0 // pred_check
    _
  $region3: #{residual_block.3} parent=0 // pred_check_branch
    %9 = sbr.rel (0) target = $region5
  $region4: #{residual_block.3} parent=0 // pred_region
    _
  $region5: #{residual_block.3} parent=0 // pred_fallthru
    _
  // Predicated region
  $region6: #{residual_block.3} parent=0 // pred_check
    _
  $region7: #{residual_block.3} parent=0 // pred_check_branch
    %11 = sbr.rel (0) target = $region9
  $region8: #{residual_block.3} parent=0 // pred_region
    _
  $region9: #{residual_block.3} parent=0 // pred_fallthru
    _
  // Predicated region
  $region10: #{residual_block.3} parent=0 // pred_check
    _
  $region11: #{residual_block.3} parent=0 // pred_check_branch
    %13 = sbr.rel (0) target = $region13
  $region12: #{residual_block.3} parent=0 // pred_region
    _
  $region13: #{residual_block.3} parent=0 // pred_fallthru
    _
  %p15 = scmp.eq.s32.totalorder 0, 0
  // Predicated region
  $region14: #{residual_block.3} parent=0 // pred_check
    %p16 = pneg %p15
  $region15: #{residual_block.3} parent=0 // pred_check_branch
    %18 = sbr.rel (%p16) target = $region17
  $region16: #{residual_block.3} parent=0 // pred_region
    %19 = vst [vmem:[#allocation2] sm:$0xff] 0.0
    %20 = vst [vmem:[#allocation2 + $0x8] sm:$0xff] 0.0
    %21 = vst [vmem:[#allocation2 + $0x10] sm:$0xff] 0.0
    %22 = vst [vmem:[#allocation2 + $0x18] sm:$0xff] 0.0
    %23 = vst [vmem:[#allocation2 + $0x20] sm:$0xff] 0.0
    %24 = vst [vmem:[#allocation2 + $0x28] sm:$0xff] 0.0
    %25 = vst [vmem:[#allocation2 + $0x30] sm:$0xff] 0.0
    %26 = vst [vmem:[#allocation2 + $0x38] sm:$0xff] 0.0
    %27 = vst [vmem:[#allocation2 + $0x40] sm:$0xff] 0.0
    %28 = vst [vmem:[#allocation2 + $0x48] sm:$0xff] 0.0
    %29 = vst [vmem:[#allocation2 + $0x50] sm:$0xff] 0.0
    %30 = vst [vmem:[#allocation2 + $0x58] sm:$0xff] 0.0
    %31 = vst [vmem:[#allocation2 + $0x60] sm:$0xff] 0.0
    %32 = vst [vmem:[#allocation2 + $0x68] sm:$0xff] 0.0
    %33 = vst [vmem:[#allocation2 + $0x70] sm:$0xff] 0.0
    %34 = vst [vmem:[#allocation2 + $0x78] sm:$0xff] 0.0
    %35 = vst [vmem:[#allocation2 + $0x80] sm:$0xff] 0.0
    %36 = vst [vmem:[#allocation2 + $0x88] sm:$0xff] 0.0
    %37 = vst [vmem:[#allocation2 + $0x90] sm:$0xff] 0.0
    %38 = vst [vmem:[#allocation2 + $0x98] sm:$0xff] 0.0
    %39 = vst [vmem:[#allocation2 + $0xa0] sm:$0xff] 0.0
    %40 = vst [vmem:[#allocation2 + $0xa8] sm:$0xff] 0.0
    %41 = vst [vmem:[#allocation2 + $0xb0] sm:$0xff] 0.0
    %42 = vst [vmem:[#allocation2 + $0xb8] sm:$0xff] 0.0
    %43 = vst [vmem:[#allocation2 + $0xc0] sm:$0xff] 0.0
    %44 = vst [vmem:[#allocation2 + $0xc8] sm:$0xff] 0.0
    %45 = vst [vmem:[#allocation2 + $0xd0] sm:$0xff] 0.0
    %46 = vst [vmem:[#allocation2 + $0xd8] sm:$0xff] 0.0
    %47 = vst [vmem:[#allocation2 + $0xe0] sm:$0xff] 0.0
    %48 = vst [vmem:[#allocation2 + $0xe8] sm:$0xff] 0.0
    %49 = vst [vmem:[#allocation2 + $0xf0] sm:$0xff] 0.0
    %50 = vst [vmem:[#allocation2 + $0xf8] sm:$0xff] 0.0
    %51 = vst [vmem:[#allocation2 + $0x100] sm:$0xff] 0.0
    %52 = vst [vmem:[#allocation2 + $0x108] sm:$0xff] 0.0
    %53 = vst [vmem:[#allocation2 + $0x110] sm:$0xff] 0.0
    %54 = vst [vmem:[#allocation2 + $0x118] sm:$0xff] 0.0
    %55 = vst [vmem:[#allocation2 + $0x120] sm:$0xff] 0.0
    %56 = vst [vmem:[#allocation2 + $0x128] sm:$0xff] 0.0
    %57 = vst [vmem:[#allocation2 + $0x130] sm:$0xff] 0.0
    %58 = vst [vmem:[#allocation2 + $0x138] sm:$0xff] 0.0
    %59 = vst [vmem:[#allocation2 + $0x140] sm:$0xff] 0.0
    %60 = vst [vmem:[#allocation2 + $0x148] sm:$0xff] 0.0
    %61 = vst [vmem:[#allocation2 + $0x150] sm:$0xff] 0.0
    %62 = vst [vmem:[#allocation2 + $0x158] sm:$0xff] 0.0
    %63 = vst [vmem:[#allocation2 + $0x160] sm:$0xff] 0.0
    %64 = vst [vmem:[#allocation2 + $0x168] sm:$0xff] 0.0
    %65 = vst [vmem:[#allocation2 + $0x170] sm:$0xff] 0.0
    %66 = vst [vmem:[#allocation2 + $0x178] sm:$0xff] 0.0
    %67 = vst [vmem:[#allocation2 + $0x180] sm:$0xff] 0.0
    %68 = vst [vmem:[#allocation2 + $0x188] sm:$0xff] 0.0
    %69 = vst [vmem:[#allocation2 + $0x190] sm:$0xff] 0.0
    %70 = vst [vmem:[#allocation2 + $0x198] sm:$0xff] 0.0
    %71 = vst [vmem:[#allocation2 + $0x1a0] sm:$0xff] 0.0
    %72 = vst [vmem:[#allocation2 + $0x1a8] sm:$0xff] 0.0
    %73 = vst [vmem:[#allocation2 + $0x1b0] sm:$0xff] 0.0
    %74 = vst [vmem:[#allocation2 + $0x1b8] sm:$0xff] 0.0
    %75 = vst [vmem:[#allocation2 + $0x1c0] sm:$0xff] 0.0
    %76 = vst [vmem:[#allocation2 + $0x1c8] sm:$0xff] 0.0
    %77 = vst [vmem:[#allocation2 + $0x1d0] sm:$0xff] 0.0
    %78 = vst [vmem:[#allocation2 + $0x1d8] sm:$0xff] 0.0
    %79 = vst [vmem:[#allocation2 + $0x1e0] sm:$0xff] 0.0
    %80 = vst [vmem:[#allocation2 + $0x1e8] sm:$0xff] 0.0
    %81 = vst [vmem:[#allocation2 + $0x1f0] sm:$0xff] 0.0
    %82 = vst [vmem:[#allocation2 + $0x1f8] sm:$0xff] 0.0
  $region17: #{residual_block.3} parent=0 // pred_fallthru
    _
  %v83 = vld [vmem:[#allocation2] sm:$0xff]
  %v84 = vld [vmem:[#allocation2 + $0x8] sm:$0xff]
  %v85 = vld [vmem:[#allocation2 + $0x10] sm:$0xff]
  %v86 = vld [vmem:[#allocation2 + $0x18] sm:$0xff]
  %v87 = vld [vmem:[#allocation2 + $0x20] sm:$0xff]
  %v88 = vld [vmem:[#allocation2 + $0x28] sm:$0xff]
  %v89 = vld [vmem:[#allocation2 + $0x30] sm:$0xff]
  %v90 = vld [vmem:[#allocation2 + $0x38] sm:$0xff]
  %v91 = vld [vmem:[#allocation2 + $0x40] sm:$0xff]
  %v92 = vld [vmem:[#allocation2 + $0x48] sm:$0xff]
  %v93 = vld [vmem:[#allocation2 + $0x50] sm:$0xff]
  %v94 = vld [vmem:[#allocation2 + $0x58] sm:$0xff]
  %v95 = vld [vmem:[#allocation2 + $0x60] sm:$0xff]
  %v96 = vld [vmem:[#allocation2 + $0x68] sm:$0xff]
  %v97 = vld [vmem:[#allocation2 + $0x70] sm:$0xff]
  %v98 = vld [vmem:[#allocation2 + $0x78] sm:$0xff]
  %v99 = vld [vmem:[#allocation2 + $0x80] sm:$0xff]
  %v100 = vld [vmem:[#allocation2 + $0x88] sm:$0xff]
  %v101 = vld [vmem:[#allocation2 + $0x90] sm:$0xff]
  %v102 = vld [vmem:[#allocation2 + $0x98] sm:$0xff]
  %v103 = vld [vmem:[#allocation2 + $0xa0] sm:$0xff]
  %v104 = vld [vmem:[#allocation2 + $0xa8] sm:$0xff]
  %v105 = vld [vmem:[#allocation2 + $0xb0] sm:$0xff]
  %v106 = vld [vmem:[#allocation2 + $0xb8] sm:$0xff]
  %v107 = vld [vmem:[#allocation2 + $0xc0] sm:$0xff]
  %v108 = vld [vmem:[#allocation2 + $0xc8] sm:$0xff]
  %v109 = vld [vmem:[#allocation2 + $0xd0] sm:$0xff]
  %v110 = vld [vmem:[#allocation2 + $0xd8] sm:$0xff]
  %v111 = vld [vmem:[#allocation2 + $0xe0] sm:$0xff]
  %v112 = vld [vmem:[#allocation2 + $0xe8] sm:$0xff]
  %v113 = vld [vmem:[#allocation2 + $0xf0] sm:$0xff]
  %v114 = vld [vmem:[#allocation2 + $0xf8] sm:$0xff]
  %v115 = vld [vmem:[#allocation2 + $0x100] sm:$0xff]
  %v116 = vld [vmem:[#allocation2 + $0x108] sm:$0xff]
  %v117 = vld [vmem:[#allocation2 + $0x110] sm:$0xff]
  %v118 = vld [vmem:[#allocation2 + $0x118] sm:$0xff]
  %v119 = vld [vmem:[#allocation2 + $0x120] sm:$0xff]
  %v120 = vld [vmem:[#allocation2 + $0x128] sm:$0xff]
  %v121 = vld [vmem:[#allocation2 + $0x130] sm:$0xff]
  %v122 = vld [vmem:[#allocation2 + $0x138] sm:$0xff]
  %v123 = vld [vmem:[#allocation2 + $0x140] sm:$0xff]
  %v124 = vld [vmem:[#allocation2 + $0x148] sm:$0xff]
  %v125 = vld [vmem:[#allocation2 + $0x150] sm:$0xff]
  %v126 = vld [vmem:[#allocation2 + $0x158] sm:$0xff]
  %v127 = vld [vmem:[#allocation2 + $0x160] sm:$0xff]
  %v128 = vld [vmem:[#allocation2 + $0x168] sm:$0xff]
  %v129 = vld [vmem:[#allocation2 + $0x170] sm:$0xff]
  %v130 = vld [vmem:[#allocation2 + $0x178] sm:$0xff]
  %v131 = vld [vmem:[#allocation2 + $0x180] sm:$0xff]
  %v132 = vld [vmem:[#allocation2 + $0x188] sm:$0xff]
  %v133 = vld [vmem:[#allocation2 + $0x190] sm:$0xff]
  %v134 = vld [vmem:[#allocation2 + $0x198] sm:$0xff]
  %v135 = vld [vmem:[#allocation2 + $0x1a0] sm:$0xff]
  %v136 = vld [vmem:[#allocation2 + $0x1a8] sm:$0xff]
  %v137 = vld [vmem:[#allocation2 + $0x1b0] sm:$0xff]
  %v138 = vld [vmem:[#allocation2 + $0x1b8] sm:$0xff]
  %v139 = vld [vmem:[#allocation2 + $0x1c0] sm:$0xff]
  %v140 = vld [vmem:[#allocation2 + $0x1c8] sm:$0xff]
  %v141 = vld [vmem:[#allocation2 + $0x1d0] sm:$0xff]
  %v142 = vld [vmem:[#allocation2 + $0x1d8] sm:$0xff]
  %v143 = vld [vmem:[#allocation2 + $0x1e0] sm:$0xff]
  %v144 = vld [vmem:[#allocation2 + $0x1e8] sm:$0xff]
  %v145 = vld [vmem:[#allocation2 + $0x1f0] sm:$0xff]
  %v146 = vld [vmem:[#allocation2 + $0x1f8] sm:$0xff]
  %v147 = vld [vmem:[%s0] sm:$0xf]
  %v148 = vld [vmem:[%s0 + $0x4] sm:$0xf]
  %v149 = vld [vmem:[%s0 + $0x8] sm:$0xf]
  %v150 = vld [vmem:[%s0 + $0xc] sm:$0xf]
  %v151 = vld [vmem:[%s0 + $0x10] sm:$0xf]
  %v152 = vld [vmem:[%s0 + $0x14] sm:$0xf]
  %v153 = vld [vmem:[%s0 + $0x18] sm:$0xf]
  %v154 = vld [vmem:[%s0 + $0x1c] sm:$0xf]
  %v155 = vld [vmem:[%s0 + $0x20] sm:$0xf]
  %v156 = vld [vmem:[%s0 + $0x24] sm:$0xf]
  %v157 = vld [vmem:[%s0 + $0x28] sm:$0xf]
  %v158 = vld [vmem:[%s0 + $0x2c] sm:$0xf]
  %v159 = vld [vmem:[%s0 + $0x30] sm:$0xf]
  %v160 = vld [vmem:[%s0 + $0x34] sm:$0xf]
  %v161 = vld [vmem:[%s0 + $0x38] sm:$0xf]
  %v162 = vld [vmem:[%s0 + $0x3c] sm:$0xf]
  %v163 = vld [vmem:[%s0 + $0x40] sm:$0xf]
  %v164 = vld [vmem:[%s0 + $0x44] sm:$0xf]
  %v165 = vld [vmem:[%s0 + $0x48] sm:$0xf]
  %v166 = vld [vmem:[%s0 + $0x4c] sm:$0xf]
  %v167 = vld [vmem:[%s0 + $0x50] sm:$0xf]
  %v168 = vld [vmem:[%s0 + $0x54] sm:$0xf]
  %v169 = vld [vmem:[%s0 + $0x58] sm:$0xf]
  %v170 = vld [vmem:[%s0 + $0x5c] sm:$0xf]
  %v171 = vld [vmem:[%s0 + $0x60] sm:$0xf]
  %v172 = vld [vmem:[%s0 + $0x64] sm:$0xf]
  %v173 = vld [vmem:[%s0 + $0x68] sm:$0xf]
  %v174 = vld [vmem:[%s0 + $0x6c] sm:$0xf]
  %v175 = vld [vmem:[%s0 + $0x70] sm:$0xf]
  %v176 = vld [vmem:[%s0 + $0x74] sm:$0xf]
  %v177 = vld [vmem:[%s0 + $0x78] sm:$0xf]
  %v178 = vld [vmem:[%s0 + $0x7c] sm:$0xf]
  %v179 = vld [vmem:[%s0 + $0x80] sm:$0xf]
  %v180 = vld [vmem:[%s0 + $0x84] sm:$0xf]
  %v181 = vld [vmem:[%s0 + $0x88] sm:$0xf]
  %v182 = vld [vmem:[%s0 + $0x8c] sm:$0xf]
  %v183 = vld [vmem:[%s0 + $0x90] sm:$0xf]
  %v184 = vld [vmem:[%s0 + $0x94] sm:$0xf]
  %v185 = vld [vmem:[%s0 + $0x98] sm:$0xf]
  %v186 = vld [vmem:[%s0 + $0x9c] sm:$0xf]
  %v187 = vld [vmem:[%s0 + $0xa0] sm:$0xf]
  %v188 = vld [vmem:[%s0 + $0xa4] sm:$0xf]
  %v189 = vld [vmem:[%s0 + $0xa8] sm:$0xf]
  %v190 = vld [vmem:[%s0 + $0xac] sm:$0xf]
  %v191 = vld [vmem:[%s0 + $0xb0] sm:$0xf]
  %v192 = vld [vmem:[%s0 + $0xb4] sm:$0xf]
  %v193 = vld [vmem:[%s0 + $0xb8] sm:$0xf]
  %v194 = vld [vmem:[%s0 + $0xbc] sm:$0xf]
  %v195 = vld [vmem:[%s0 + $0xc0] sm:$0xf]
  %v196 = vld [vmem:[%s0 + $0xc4] sm:$0xf]
  %v197 = vld [vmem:[%s0 + $0xc8] sm:$0xf]
  %v198 = vld [vmem:[%s0 + $0xcc] sm:$0xf]
  %v199 = vld [vmem:[%s0 + $0xd0] sm:$0xf]
  %v200 = vld [vmem:[%s0 + $0xd4] sm:$0xf]
  %v201 = vld [vmem:[%s0 + $0xd8] sm:$0xf]
  %v202 = vld [vmem:[%s0 + $0xdc] sm:$0xf]
  %v203 = vld [vmem:[%s0 + $0xe0] sm:$0xf]
  %v204 = vld [vmem:[%s0 + $0xe4] sm:$0xf]
  %v205 = vld [vmem:[%s0 + $0xe8] sm:$0xf]
  %v206 = vld [vmem:[%s0 + $0xec] sm:$0xf]
  %v207 = vld [vmem:[%s0 + $0xf0] sm:$0xf]
  %v208 = vld [vmem:[%s0 + $0xf4] sm:$0xf]
  %v209 = vld [vmem:[%s0 + $0xf8] sm:$0xf]
  %v210 = vld [vmem:[%s0 + $0xfc] sm:$0xf]
  %v211 = vld [vmem:[%s1] sm:$0xf]
  %v212 = vld [vmem:[%s1 + $0x4] sm:$0xf]
  %v213 = vld [vmem:[%s1 + $0x8] sm:$0xf]
  %v214 = vld [vmem:[%s1 + $0xc] sm:$0xf]
  %v215 = vld [vmem:[%s1 + $0x10] sm:$0xf]
  %v216 = vld [vmem:[%s1 + $0x14] sm:$0xf]
  %v217 = vld [vmem:[%s1 + $0x18] sm:$0xf]
  %v218 = vld [vmem:[%s1 + $0x1c] sm:$0xf]
  %v219 = vld [vmem:[%s1 + $0x20] sm:$0xf]
  %v220 = vld [vmem:[%s1 + $0x24] sm:$0xf]
  %v221 = vld [vmem:[%s1 + $0x28] sm:$0xf]
  %v222 = vld [vmem:[%s1 + $0x2c] sm:$0xf]
  %v223 = vld [vmem:[%s1 + $0x30] sm:$0xf]
  %v224 = vld [vmem:[%s1 + $0x34] sm:$0xf]
  %v225 = vld [vmem:[%s1 + $0x38] sm:$0xf]
  %v226 = vld [vmem:[%s1 + $0x3c] sm:$0xf]
  %v291 = vunpack.c.l.b16 %v147
  %v292 = vunpack.c.l.b16 %v148
  %v293 = vunpack.c.l.b16 %v149
  %v294 = vunpack.c.l.b16 %v150
  %v295 = vunpack.c.l.b16 %v151
  %v296 = vunpack.c.l.b16 %v152
  %v297 = vunpack.c.l.b16 %v153
  %v298 = vunpack.c.l.b16 %v154
  %v299 = vunpack.c.l.b16 %v155
  %v300 = vunpack.c.l.b16 %v156
  %v301 = vunpack.c.l.b16 %v157
  %v302 = vunpack.c.l.b16 %v158
  %v303 = vunpack.c.l.b16 %v159
  %v304 = vunpack.c.l.b16 %v160
  %v305 = vunpack.c.l.b16 %v161
  %v306 = vunpack.c.l.b16 %v162
  %v307 = vunpack.c.l.b16 %v163
  %v308 = vunpack.c.l.b16 %v164
  %v309 = vunpack.c.l.b16 %v165
  %v310 = vunpack.c.l.b16 %v166
  %v311 = vunpack.c.l.b16 %v167
  %v312 = vunpack.c.l.b16 %v168
  %v313 = vunpack.c.l.b16 %v169
  %v314 = vunpack.c.l.b16 %v170
  %v315 = vunpack.c.l.b16 %v171
  %v316 = vunpack.c.l.b16 %v172
  %v317 = vunpack.c.l.b16 %v173
  %v318 = vunpack.c.l.b16 %v174
  %v319 = vunpack.c.l.b16 %v175
  %v320 = vunpack.c.l.b16 %v176
  %v321 = vunpack.c.l.b16 %v177
  %v322 = vunpack.c.l.b16 %v178
  %v323 = vunpack.c.l.b16 %v179
  %v324 = vunpack.c.l.b16 %v180
  %v325 = vunpack.c.l.b16 %v181
  %v326 = vunpack.c.l.b16 %v182
  %v327 = vunpack.c.l.b16 %v183
  %v328 = vunpack.c.l.b16 %v184
  %v329 = vunpack.c.l.b16 %v185
  %v330 = vunpack.c.l.b16 %v186
  %v331 = vunpack.c.l.b16 %v187
  %v332 = vunpack.c.l.b16 %v188
  %v333 = vunpack.c.l.b16 %v189
  %v334 = vunpack.c.l.b16 %v190
  %v335 = vunpack.c.l.b16 %v191
  %v336 = vunpack.c.l.b16 %v192
  %v337 = vunpack.c.l.b16 %v193
  %v338 = vunpack.c.l.b16 %v194
  %v339 = vunpack.c.l.b16 %v195
  %v340 = vunpack.c.l.b16 %v196
  %v341 = vunpack.c.l.b16 %v197
  %v342 = vunpack.c.l.b16 %v198
  %v343 = vunpack.c.l.b16 %v199
  %v344 = vunpack.c.l.b16 %v200
  %v345 = vunpack.c.l.b16 %v201
  %v346 = vunpack.c.l.b16 %v202
  %v347 = vunpack.c.l.b16 %v203
  %v348 = vunpack.c.l.b16 %v204
  %v349 = vunpack.c.l.b16 %v205
  %v350 = vunpack.c.l.b16 %v206
  %v351 = vunpack.c.l.b16 %v207
  %v352 = vunpack.c.l.b16 %v208
  %v353 = vunpack.c.l.b16 %v209
  %v354 = vunpack.c.l.b16 %v210
  %v355 = vpack.c.b16 %v292, %v291
  %v356 = vpack.c.b16 %v294, %v293
  %v357 = vpack.c.b16 %v296, %v295
  %v358 = vpack.c.b16 %v298, %v297
  %v359 = vpack.c.b16 %v300, %v299
  %v360 = vpack.c.b16 %v302, %v301
  %v361 = vpack.c.b16 %v304, %v303
  %v362 = vpack.c.b16 %v306, %v305
  %v363 = vpack.c.b16 %v308, %v307
  %v364 = vpack.c.b16 %v310, %v309
  %v365 = vpack.c.b16 %v312, %v311
  %v366 = vpack.c.b16 %v314, %v313
  %v367 = vpack.c.b16 %v316, %v315
  %v368 = vpack.c.b16 %v318, %v317
  %v369 = vpack.c.b16 %v320, %v319
  %v370 = vpack.c.b16 %v322, %v321
  %v371 = vpack.c.b16 %v324, %v323
  %v372 = vpack.c.b16 %v326, %v325
  %v373 = vpack.c.b16 %v328, %v327
  %v374 = vpack.c.b16 %v330, %v329
  %v375 = vpack.c.b16 %v332, %v331
  %v376 = vpack.c.b16 %v334, %v333
  %v377 = vpack.c.b16 %v336, %v335
  %v378 = vpack.c.b16 %v338, %v337
  %v379 = vpack.c.b16 %v340, %v339
  %v380 = vpack.c.b16 %v342, %v341
  %v381 = vpack.c.b16 %v344, %v343
  %v382 = vpack.c.b16 %v346, %v345
  %v383 = vpack.c.b16 %v348, %v347
  %v384 = vpack.c.b16 %v350, %v349
  %v385 = vpack.c.b16 %v352, %v351
  %v386 = vpack.c.b16 %v354, %v353
  %v435 = vunpack.c.l.b16 %v211
  %v436 = vunpack.c.l.b16 %v212
  %v437 = vunpack.c.l.b16 %v213
  %v438 = vunpack.c.l.b16 %v214
  %v439 = vunpack.c.l.b16 %v215
  %v440 = vunpack.c.l.b16 %v216
  %v441 = vunpack.c.l.b16 %v217
  %v442 = vunpack.c.l.b16 %v218
  %v443 = vunpack.c.l.b16 %v219
  %v444 = vunpack.c.l.b16 %v220
  %v445 = vunpack.c.l.b16 %v221
  %v446 = vunpack.c.l.b16 %v222
  %v447 = vunpack.c.l.b16 %v223
  %v448 = vunpack.c.l.b16 %v224
  %v449 = vunpack.c.l.b16 %v225
  %v450 = vunpack.c.l.b16 %v226
  %v451 = vpack.c.b16 %v436, %v435
  %v452 = vpack.c.b16 %v438, %v437
  %v453 = vpack.c.b16 %v440, %v439
  %v454 = vpack.c.b16 %v442, %v441
  %v455 = vpack.c.b16 %v444, %v443
  %v456 = vpack.c.b16 %v446, %v445
  %v457 = vpack.c.b16 %v448, %v447
  %v458 = vpack.c.b16 %v450, %v449
  %467 = vmatprep.subr.bf16.mxu0 0
  %468 = vmatpush1.bf16.msra.mxu0 %v458
  %469 = vmatprep.subr.bf16.mxu0 0
  %470 = vmatpush1.bf16.msra.mxu0 %v457
  %471 = vmatprep.subr.bf16.mxu0 0
  %472 = vmatpush1.bf16.msra.mxu0 %v456
  %473 = vmatprep.subr.bf16.mxu0 0
  %474 = vmatpush1.bf16.msra.mxu0 %v455
  %475 = vmatprep.subr.bf16.mxu0 0
  %476 = vmatpush1.bf16.msra.mxu0 %v454
  %477 = vmatprep.subr.bf16.mxu0 0
  %478 = vmatpush1.bf16.msra.mxu0 %v453
  %479 = vmatprep.subr.bf16.mxu0 0
  %480 = vmatpush1.bf16.msra.mxu0 %v452
  %481 = vmatprep.subr.bf16.mxu0 0
  %482 = vmatpush1.bf16.msra.mxu0 %v451
  %483 = vmatprep.subr.bf16.mxu0 0
  %484 = vmatpush2.bf16.msra.mxu0 0
  %485 = vmatprep.subr.bf16.mxu0 0
  %486 = vmatpush2.bf16.msra.mxu0 0
  %487 = vmatprep.subr.bf16.mxu0 0
  %488 = vmatpush2.bf16.msra.mxu0 0
  %489 = vmatprep.subr.bf16.mxu0 0
  %490 = vmatpush2.bf16.msra.mxu0 0
  %491 = vmatprep.subr.bf16.mxu0 0
  %492 = vmatpush2.bf16.msra.mxu0 0
  %493 = vmatprep.subr.bf16.mxu0 0
  %494 = vmatpush2.bf16.msra.mxu0 0
  %495 = vmatprep.subr.bf16.mxu0 0
  %496 = vmatpush2.bf16.msra.mxu0 0
  %497 = vmatprep.subr.bf16.mxu0 0
  %498 = vmatpush2.bf16.msra.mxu0 0
  %499 = vmatprep.mubr.bf16.mxu0 0
  %500 = vmatmul.mubr.bf16.gmra.mxu0 %v355
  %v501 = vpop.f32.mrf.mxu0
  %v502 = vadd.f32 0.0, %v501
  %v503 = vpop.f32.mrf.mxu0
  %v504 = vpop.f32.mrf.mxu0
  %v505 = vadd.f32 0.0, %v504
  %v506 = vpop.f32.mrf.mxu0
  %507 = vmatprep.mubr.bf16.mxu0 0
  %508 = vmatmul.mubr.bf16.gmra.mxu0 %v356
  %v509 = vpop.f32.mrf.mxu0
  %v510 = vadd.f32 0.0, %v509
  %v511 = vpop.f32.mrf.mxu0
  %v512 = vpop.f32.mrf.mxu0
  %v513 = vadd.f32 0.0, %v512
  %v514 = vpop.f32.mrf.mxu0
  %515 = vmatprep.mubr.bf16.mxu0 0
  %516 = vmatmul.mubr.bf16.gmra.mxu0 %v357
  %v517 = vpop.f32.mrf.mxu0
  %v518 = vadd.f32 0.0, %v517
  %v519 = vpop.f32.mrf.mxu0
  %v520 = vpop.f32.mrf.mxu0
  %v521 = vadd.f32 0.0, %v520
  %v522 = vpop.f32.mrf.mxu0
  %523 = vmatprep.mubr.bf16.mxu0 0
  %524 = vmatmul.mubr.bf16.gmra.mxu0 %v358
  %v525 = vpop.f32.mrf.mxu0
  %v526 = vadd.f32 0.0, %v525
  %v527 = vpop.f32.mrf.mxu0
  %v528 = vpop.f32.mrf.mxu0
  %v529 = vadd.f32 0.0, %v528
  %v530 = vpop.f32.mrf.mxu0
  %531 = vmatprep.mubr.bf16.mxu0 0
  %532 = vmatmul.mubr.bf16.gmra.mxu0 %v359
  %v533 = vpop.f32.mrf.mxu0
  %v534 = vadd.f32 0.0, %v533
  %v535 = vpop.f32.mrf.mxu0
  %v536 = vpop.f32.mrf.mxu0
  %v537 = vadd.f32 0.0, %v536
  %v538 = vpop.f32.mrf.mxu0
  %539 = vmatprep.mubr.bf16.mxu0 0
  %540 = vmatmul.mubr.bf16.gmra.mxu0 %v360
  %v541 = vpop.f32.mrf.mxu0
  %v542 = vadd.f32 0.0, %v541
  %v543 = vpop.f32.mrf.mxu0
  %v544 = vpop.f32.mrf.mxu0
  %v545 = vadd.f32 0.0, %v544
  %v546 = vpop.f32.mrf.mxu0
  %547 = vmatprep.mubr.bf16.mxu0 0
  %548 = vmatmul.mubr.bf16.gmra.mxu0 %v361
  %v549 = vpop.f32.mrf.mxu0
  %v550 = vadd.f32 0.0, %v549
  %v551 = vpop.f32.mrf.mxu0
  %v552 = vpop.f32.mrf.mxu0
  %v553 = vadd.f32 0.0, %v552
  %v554 = vpop.f32.mrf.mxu0
  %555 = vmatprep.mubr.bf16.mxu0 0
  %556 = vmatmul.mubr.bf16.gmra.mxu0 %v362
  %v557 = vpop.f32.mrf.mxu0
  %v558 = vadd.f32 0.0, %v557
  %v559 = vpop.f32.mrf.mxu0
  %v560 = vpop.f32.mrf.mxu0
  %v561 = vadd.f32 0.0, %v560
  %v562 = vpop.f32.mrf.mxu0
  %563 = vmatprep.mubr.bf16.mxu0 0
  %564 = vmatmul.mubr.bf16.gmra.mxu0 %v363
  %v565 = vpop.f32.mrf.mxu0
  %v566 = vadd.f32 0.0, %v565
  %v567 = vpop.f32.mrf.mxu0
  %v568 = vpop.f32.mrf.mxu0
  %v569 = vadd.f32 0.0, %v568
  %v570 = vpop.f32.mrf.mxu0
  %571 = vmatprep.mubr.bf16.mxu0 0
  %572 = vmatmul.mubr.bf16.gmra.mxu0 %v364
  %v573 = vpop.f32.mrf.mxu0
  %v574 = vadd.f32 0.0, %v573
  %v575 = vpop.f32.mrf.mxu0
  %v576 = vpop.f32.mrf.mxu0
  %v577 = vadd.f32 0.0, %v576
  %v578 = vpop.f32.mrf.mxu0
  %579 = vmatprep.mubr.bf16.mxu0 0
  %580 = vmatmul.mubr.bf16.gmra.mxu0 %v365
  %v581 = vpop.f32.mrf.mxu0
  %v582 = vadd.f32 0.0, %v581
  %v583 = vpop.f32.mrf.mxu0
  %v584 = vpop.f32.mrf.mxu0
  %v585 = vadd.f32 0.0, %v584
  %v586 = vpop.f32.mrf.mxu0
  %587 = vmatprep.mubr.bf16.mxu0 0
  %588 = vmatmul.mubr.bf16.gmra.mxu0 %v366
  %v589 = vpop.f32.mrf.mxu0
  %v590 = vadd.f32 0.0, %v589
  %v591 = vpop.f32.mrf.mxu0
  %v592 = vpop.f32.mrf.mxu0
  %v593 = vadd.f32 0.0, %v592
  %v594 = vpop.f32.mrf.mxu0
  %595 = vmatprep.mubr.bf16.mxu0 0
  %596 = vmatmul.mubr.bf16.gmra.mxu0 %v367
  %v597 = vpop.f32.mrf.mxu0
  %v598 = vadd.f32 0.0, %v597
  %v599 = vpop.f32.mrf.mxu0
  %v600 = vpop.f32.mrf.mxu0
  %v601 = vadd.f32 0.0, %v600
  %v602 = vpop.f32.mrf.mxu0
  %603 = vmatprep.mubr.bf16.mxu0 0
  %604 = vmatmul.mubr.bf16.gmra.mxu0 %v368
  %v605 = vpop.f32.mrf.mxu0
  %v606 = vadd.f32 0.0, %v605
  %v607 = vpop.f32.mrf.mxu0
  %v608 = vpop.f32.mrf.mxu0
  %v609 = vadd.f32 0.0, %v608
  %v610 = vpop.f32.mrf.mxu0
  %611 = vmatprep.mubr.bf16.mxu0 0
  %612 = vmatmul.mubr.bf16.gmra.mxu0 %v369
  %v613 = vpop.f32.mrf.mxu0
  %v614 = vadd.f32 0.0, %v613
  %v615 = vpop.f32.mrf.mxu0
  %v616 = vpop.f32.mrf.mxu0
  %v617 = vadd.f32 0.0, %v616
  %v618 = vpop.f32.mrf.mxu0
  %619 = vmatprep.mubr.bf16.mxu0 0
  %620 = vmatmul.mubr.bf16.gmra.mxu0 %v370
  %v621 = vpop.f32.mrf.mxu0
  %v622 = vadd.f32 0.0, %v621
  %v623 = vpop.f32.mrf.mxu0
  %v624 = vpop.f32.mrf.mxu0
  %v625 = vadd.f32 0.0, %v624
  %v626 = vpop.f32.mrf.mxu0
  %627 = vmatprep.mubr.bf16.mxu0 0
  %628 = vmatmul.mubr.bf16.gmra.mxu0 %v371
  %v629 = vpop.f32.mrf.mxu0
  %v630 = vadd.f32 0.0, %v629
  %v631 = vpop.f32.mrf.mxu0
  %v632 = vpop.f32.mrf.mxu0
  %v633 = vadd.f32 0.0, %v632
  %v634 = vpop.f32.mrf.mxu0
  %635 = vmatprep.mubr.bf16.mxu0 0
  %636 = vmatmul.mubr.bf16.gmra.mxu0 %v372
  %v637 = vpop.f32.mrf.mxu0
  %v638 = vadd.f32 0.0, %v637
  %v639 = vpop.f32.mrf.mxu0
  %v640 = vpop.f32.mrf.mxu0
  %v641 = vadd.f32 0.0, %v640
  %v642 = vpop.f32.mrf.mxu0
  %643 = vmatprep.mubr.bf16.mxu0 0
  %644 = vmatmul.mubr.bf16.gmra.mxu0 %v373
  %v645 = vpop.f32.mrf.mxu0
  %v646 = vadd.f32 0.0, %v645
  %v647 = vpop.f32.mrf.mxu0
  %v648 = vpop.f32.mrf.mxu0
  %v649 = vadd.f32 0.0, %v648
  %v650 = vpop.f32.mrf.mxu0
  %651 = vmatprep.mubr.bf16.mxu0 0
  %652 = vmatmul.mubr.bf16.gmra.mxu0 %v374
  %v653 = vpop.f32.mrf.mxu0
  %v654 = vadd.f32 0.0, %v653
  %v655 = vpop.f32.mrf.mxu0
  %v656 = vpop.f32.mrf.mxu0
  %v657 = vadd.f32 0.0, %v656
  %v658 = vpop.f32.mrf.mxu0
  %659 = vmatprep.mubr.bf16.mxu0 0
  %660 = vmatmul.mubr.bf16.gmra.mxu0 %v375
  %v661 = vpop.f32.mrf.mxu0
  %v662 = vadd.f32 0.0, %v661
  %v663 = vpop.f32.mrf.mxu0
  %v664 = vpop.f32.mrf.mxu0
  %v665 = vadd.f32 0.0, %v664
  %v666 = vpop.f32.mrf.mxu0
  %667 = vmatprep.mubr.bf16.mxu0 0
  %668 = vmatmul.mubr.bf16.gmra.mxu0 %v376
  %v669 = vpop.f32.mrf.mxu0
  %v670 = vadd.f32 0.0, %v669
  %v671 = vpop.f32.mrf.mxu0
  %v672 = vpop.f32.mrf.mxu0
  %v673 = vadd.f32 0.0, %v672
  %v674 = vpop.f32.mrf.mxu0
  %675 = vmatprep.mubr.bf16.mxu0 0
  %676 = vmatmul.mubr.bf16.gmra.mxu0 %v377
  %v677 = vpop.f32.mrf.mxu0
  %v678 = vadd.f32 0.0, %v677
  %v679 = vpop.f32.mrf.mxu0
  %v680 = vpop.f32.mrf.mxu0
  %v681 = vadd.f32 0.0, %v680
  %v682 = vpop.f32.mrf.mxu0
  %683 = vmatprep.mubr.bf16.mxu0 0
  %684 = vmatmul.mubr.bf16.gmra.mxu0 %v378
  %v685 = vpop.f32.mrf.mxu0
  %v686 = vadd.f32 0.0, %v685
  %v687 = vpop.f32.mrf.mxu0
  %v688 = vpop.f32.mrf.mxu0
  %v689 = vadd.f32 0.0, %v688
  %v690 = vpop.f32.mrf.mxu0
  %691 = vmatprep.mubr.bf16.mxu0 0
  %692 = vmatmul.mubr.bf16.gmra.mxu0 %v379
  %v693 = vpop.f32.mrf.mxu0
  %v694 = vadd.f32 0.0, %v693
  %v695 = vpop.f32.mrf.mxu0
  %v696 = vpop.f32.mrf.mxu0
  %v697 = vadd.f32 0.0, %v696
  %v698 = vpop.f32.mrf.mxu0
  %699 = vmatprep.mubr.bf16.mxu0 0
  %700 = vmatmul.mubr.bf16.gmra.mxu0 %v380
  %v701 = vpop.f32.mrf.mxu0
  %v702 = vadd.f32 0.0, %v701
  %v703 = vpop.f32.mrf.mxu0
  %v704 = vpop.f32.mrf.mxu0
  %v705 = vadd.f32 0.0, %v704
  %v706 = vpop.f32.mrf.mxu0
  %707 = vmatprep.mubr.bf16.mxu0 0
  %708 = vmatmul.mubr.bf16.gmra.mxu0 %v381
  %v709 = vpop.f32.mrf.mxu0
  %v710 = vadd.f32 0.0, %v709
  %v711 = vpop.f32.mrf.mxu0
  %v712 = vpop.f32.mrf.mxu0
  %v713 = vadd.f32 0.0, %v712
  %v714 = vpop.f32.mrf.mxu0
  %715 = vmatprep.mubr.bf16.mxu0 0
  %716 = vmatmul.mubr.bf16.gmra.mxu0 %v382
  %v717 = vpop.f32.mrf.mxu0
  %v718 = vadd.f32 0.0, %v717
  %v719 = vpop.f32.mrf.mxu0
  %v720 = vpop.f32.mrf.mxu0
  %v721 = vadd.f32 0.0, %v720
  %v722 = vpop.f32.mrf.mxu0
  %723 = vmatprep.mubr.bf16.mxu0 0
  %724 = vmatmul.mubr.bf16.gmra.mxu0 %v383
  %v725 = vpop.f32.mrf.mxu0
  %v726 = vadd.f32 0.0, %v725
  %v727 = vpop.f32.mrf.mxu0
  %v728 = vpop.f32.mrf.mxu0
  %v729 = vadd.f32 0.0, %v728
  %v730 = vpop.f32.mrf.mxu0
  %731 = vmatprep.mubr.bf16.mxu0 0
  %732 = vmatmul.mubr.bf16.gmra.mxu0 %v384
  %v733 = vpop.f32.mrf.mxu0
  %v734 = vadd.f32 0.0, %v733
  %v735 = vpop.f32.mrf.mxu0
  %v736 = vpop.f32.mrf.mxu0
  %v737 = vadd.f32 0.0, %v736
  %v738 = vpop.f32.mrf.mxu0
  %739 = vmatprep.mubr.bf16.mxu0 0
  %740 = vmatmul.mubr.bf16.gmra.mxu0 %v385
  %v741 = vpop.f32.mrf.mxu0
  %v742 = vadd.f32 0.0, %v741
  %v743 = vpop.f32.mrf.mxu0
  %v744 = vpop.f32.mrf.mxu0
  %v745 = vadd.f32 0.0, %v744
  %v746 = vpop.f32.mrf.mxu0
  %747 = vmatprep.mubr.bf16.mxu0 0
  %748 = vmatmul.mubr.bf16.gmra.mxu0 %v386
  %v749 = vpop.f32.mrf.mxu0
  %v750 = vadd.f32 0.0, %v749
  %v751 = vpop.f32.mrf.mxu0
  %v752 = vpop.f32.mrf.mxu0
  %v753 = vadd.f32 0.0, %v752
  %v754 = vpop.f32.mrf.mxu0
  %755 = vdwg.mxu0
  %v756 = vadd.f32 %v83, %v502
  %v757 = vadd.f32 %v84, %v505
  %v758 = vadd.f32 %v85, %v510
  %v759 = vadd.f32 %v86, %v513
  %v760 = vadd.f32 %v87, %v518
  %v761 = vadd.f32 %v88, %v521
  %v762 = vadd.f32 %v89, %v526
  %v763 = vadd.f32 %v90, %v529
  %v764 = vadd.f32 %v91, %v534
  %v765 = vadd.f32 %v92, %v537
  %v766 = vadd.f32 %v93, %v542
  %v767 = vadd.f32 %v94, %v545
  %v768 = vadd.f32 %v95, %v550
  %v769 = vadd.f32 %v96, %v553
  %v770 = vadd.f32 %v97, %v558
  %v771 = vadd.f32 %v98, %v561
  %v772 = vadd.f32 %v99, %v566
  %v773 = vadd.f32 %v100, %v569
  %v774 = vadd.f32 %v101, %v574
  %v775 = vadd.f32 %v102, %v577
  %v776 = vadd.f32 %v103, %v582
  %v777 = vadd.f32 %v104, %v585
  %v778 = vadd.f32 %v105, %v590
  %v779 = vadd.f32 %v106, %v593
  %v780 = vadd.f32 %v107, %v598
  %v781 = vadd.f32 %v108, %v601
  %v782 = vadd.f32 %v109, %v606
  %v783 = vadd.f32 %v110, %v609
  %v784 = vadd.f32 %v111, %v614
  %v785 = vadd.f32 %v112, %v617
  %v786 = vadd.f32 %v113, %v622
  %v787 = vadd.f32 %v114, %v625
  %v788 = vadd.f32 %v115, %v630
  %v789 = vadd.f32 %v116, %v633
  %v790 = vadd.f32 %v117, %v638
  %v791 = vadd.f32 %v118, %v641
  %v792 = vadd.f32 %v119, %v646
  %v793 = vadd.f32 %v120, %v649
  %v794 = vadd.f32 %v121, %v654
  %v795 = vadd.f32 %v122, %v657
  %v796 = vadd.f32 %v123, %v662
  %v797 = vadd.f32 %v124, %v665
  %v798 = vadd.f32 %v125, %v670
  %v799 = vadd.f32 %v126, %v673
  %v800 = vadd.f32 %v127, %v678
  %v801 = vadd.f32 %v128, %v681
  %v802 = vadd.f32 %v129, %v686
  %v803 = vadd.f32 %v130, %v689
  %v804 = vadd.f32 %v131, %v694
  %v805 = vadd.f32 %v132, %v697
  %v806 = vadd.f32 %v133, %v702
  %v807 = vadd.f32 %v134, %v705
  %v808 = vadd.f32 %v135, %v710
  %v809 = vadd.f32 %v136, %v713
  %v810 = vadd.f32 %v137, %v718
  %v811 = vadd.f32 %v138, %v721
  %v812 = vadd.f32 %v139, %v726
  %v813 = vadd.f32 %v140, %v729
  %v814 = vadd.f32 %v141, %v734
  %v815 = vadd.f32 %v142, %v737
  %v816 = vadd.f32 %v143, %v742
  %v817 = vadd.f32 %v144, %v745
  %v818 = vadd.f32 %v145, %v750
  %v819 = vadd.f32 %v146, %v753
  %820 = vst [vmem:[#allocation2] sm:$0xff] %v756
  %821 = vst [vmem:[#allocation2 + $0x8] sm:$0xff] %v757
  %822 = vst [vmem:[#allocation2 + $0x10] sm:$0xff] %v758
  %823 = vst [vmem:[#allocation2 + $0x18] sm:$0xff] %v759
  %824 = vst [vmem:[#allocation2 + $0x20] sm:$0xff] %v760
  %825 = vst [vmem:[#allocation2 + $0x28] sm:$0xff] %v761
  %826 = vst [vmem:[#allocation2 + $0x30] sm:$0xff] %v762
  %827 = vst [vmem:[#allocation2 + $0x38] sm:$0xff] %v763
  %828 = vst [vmem:[#allocation2 + $0x40] sm:$0xff] %v764
  %829 = vst [vmem:[#allocation2 + $0x48] sm:$0xff] %v765
  %830 = vst [vmem:[#allocation2 + $0x50] sm:$0xff] %v766
  %831 = vst [vmem:[#allocation2 + $0x58] sm:$0xff] %v767
  %832 = vst [vmem:[#allocation2 + $0x60] sm:$0xff] %v768
  %833 = vst [vmem:[#allocation2 + $0x68] sm:$0xff] %v769
  %834 = vst [vmem:[#allocation2 + $0x70] sm:$0xff] %v770
  %835 = vst [vmem:[#allocation2 + $0x78] sm:$0xff] %v771
  %836 = vst [vmem:[#allocation2 + $0x80] sm:$0xff] %v772
  %837 = vst [vmem:[#allocation2 + $0x88] sm:$0xff] %v773
  %838 = vst [vmem:[#allocation2 + $0x90] sm:$0xff] %v774
  %839 = vst [vmem:[#allocation2 + $0x98] sm:$0xff] %v775
  %840 = vst [vmem:[#allocation2 + $0xa0] sm:$0xff] %v776
  %841 = vst [vmem:[#allocation2 + $0xa8] sm:$0xff] %v777
  %842 = vst [vmem:[#allocation2 + $0xb0] sm:$0xff] %v778
  %843 = vst [vmem:[#allocation2 + $0xb8] sm:$0xff] %v779
  %844 = vst [vmem:[#allocation2 + $0xc0] sm:$0xff] %v780
  %845 = vst [vmem:[#allocation2 + $0xc8] sm:$0xff] %v781
  %846 = vst [vmem:[#allocation2 + $0xd0] sm:$0xff] %v782
  %847 = vst [vmem:[#allocation2 + $0xd8] sm:$0xff] %v783
  %848 = vst [vmem:[#allocation2 + $0xe0] sm:$0xff] %v784
  %849 = vst [vmem:[#allocation2 + $0xe8] sm:$0xff] %v785
  %850 = vst [vmem:[#allocation2 + $0xf0] sm:$0xff] %v786
  %851 = vst [vmem:[#allocation2 + $0xf8] sm:$0xff] %v787
  %852 = vst [vmem:[#allocation2 + $0x100] sm:$0xff] %v788
  %853 = vst [vmem:[#allocation2 + $0x108] sm:$0xff] %v789
  %854 = vst [vmem:[#allocation2 + $0x110] sm:$0xff] %v790
  %855 = vst [vmem:[#allocation2 + $0x118] sm:$0xff] %v791
  %856 = vst [vmem:[#allocation2 + $0x120] sm:$0xff] %v792
  %857 = vst [vmem:[#allocation2 + $0x128] sm:$0xff] %v793
  %858 = vst [vmem:[#allocation2 + $0x130] sm:$0xff] %v794
  %859 = vst [vmem:[#allocation2 + $0x138] sm:$0xff] %v795
  %860 = vst [vmem:[#allocation2 + $0x140] sm:$0xff] %v796
  %861 = vst [vmem:[#allocation2 + $0x148] sm:$0xff] %v797
  %862 = vst [vmem:[#allocation2 + $0x150] sm:$0xff] %v798
  %863 = vst [vmem:[#allocation2 + $0x158] sm:$0xff] %v799
  %864 = vst [vmem:[#allocation2 + $0x160] sm:$0xff] %v800
  %865 = vst [vmem:[#allocation2 + $0x168] sm:$0xff] %v801
  %866 = vst [vmem:[#allocation2 + $0x170] sm:$0xff] %v802
  %867 = vst [vmem:[#allocation2 + $0x178] sm:$0xff] %v803
  %868 = vst [vmem:[#allocation2 + $0x180] sm:$0xff] %v804
  %869 = vst [vmem:[#allocation2 + $0x188] sm:$0xff] %v805
  %870 = vst [vmem:[#allocation2 + $0x190] sm:$0xff] %v806
  %871 = vst [vmem:[#allocation2 + $0x198] sm:$0xff] %v807
  %872 = vst [vmem:[#allocation2 + $0x1a0] sm:$0xff] %v808
  %873 = vst [vmem:[#allocation2 + $0x1a8] sm:$0xff] %v809
  %874 = vst [vmem:[#allocation2 + $0x1b0] sm:$0xff] %v810
  %875 = vst [vmem:[#allocation2 + $0x1b8] sm:$0xff] %v811
  %876 = vst [vmem:[#allocation2 + $0x1c0] sm:$0xff] %v812
  %877 = vst [vmem:[#allocation2 + $0x1c8] sm:$0xff] %v813
  %878 = vst [vmem:[#allocation2 + $0x1d0] sm:$0xff] %v814
  %879 = vst [vmem:[#allocation2 + $0x1d8] sm:$0xff] %v815
  %880 = vst [vmem:[#allocation2 + $0x1e0] sm:$0xff] %v816
  %881 = vst [vmem:[#allocation2 + $0x1e8] sm:$0xff] %v817
  %882 = vst [vmem:[#allocation2 + $0x1f0] sm:$0xff] %v818
  %883 = vst [vmem:[#allocation2 + $0x1f8] sm:$0xff] %v819
  // Predicated region
  $region18: #{residual_block.3} parent=0 // pred_check
    %p884 = pneg %p15
  $region19: #{residual_block.3} parent=0 // pred_check_branch
    %886 = sbr.rel (%p884) target = $region21
  $region20: #{residual_block.3} parent=0 // pred_region
    %v887 = vld [vmem:[#allocation2] sm:$0xff]
    %v888 = vld [vmem:[#allocation2 + $0x8] sm:$0xff]
    %v889 = vld [vmem:[#allocation2 + $0x10] sm:$0xff]
    %v890 = vld [vmem:[#allocation2 + $0x18] sm:$0xff]
    %v891 = vld [vmem:[#allocation2 + $0x20] sm:$0xff]
    %v892 = vld [vmem:[#allocation2 + $0x28] sm:$0xff]
    %v893 = vld [vmem:[#allocation2 + $0x30] sm:$0xff]
    %v894 = vld [vmem:[#allocation2 + $0x38] sm:$0xff]
    %v895 = vld [vmem:[#allocation2 + $0x40] sm:$0xff]
    %v896 = vld [vmem:[#allocation2 + $0x48] sm:$0xff]
    %v897 = vld [vmem:[#allocation2 + $0x50] sm:$0xff]
    %v898 = vld [vmem:[#allocation2 + $0x58] sm:$0xff]
    %v899 = vld [vmem:[#allocation2 + $0x60] sm:$0xff]
    %v900 = vld [vmem:[#allocation2 + $0x68] sm:$0xff]
    %v901 = vld [vmem:[#allocation2 + $0x70] sm:$0xff]
    %v902 = vld [vmem:[#allocation2 + $0x78] sm:$0xff]
    %v903 = vld [vmem:[#allocation2 + $0x80] sm:$0xff]
    %v904 = vld [vmem:[#allocation2 + $0x88] sm:$0xff]
    %v905 = vld [vmem:[#allocation2 + $0x90] sm:$0xff]
    %v906 = vld [vmem:[#allocation2 + $0x98] sm:$0xff]
    %v907 = vld [vmem:[#allocation2 + $0xa0] sm:$0xff]
    %v908 = vld [vmem:[#allocation2 + $0xa8] sm:$0xff]
    %v909 = vld [vmem:[#allocation2 + $0xb0] sm:$0xff]
    %v910 = vld [vmem:[#allocation2 + $0xb8] sm:$0xff]
    %v911 = vld [vmem:[#allocation2 + $0xc0] sm:$0xff]
    %v912 = vld [vmem:[#allocation2 + $0xc8] sm:$0xff]
    %v913 = vld [vmem:[#allocation2 + $0xd0] sm:$0xff]
    %v914 = vld [vmem:[#allocation2 + $0xd8] sm:$0xff]
    %v915 = vld [vmem:[#allocation2 + $0xe0] sm:$0xff]
    %v916 = vld [vmem:[#allocation2 + $0xe8] sm:$0xff]
    %v917 = vld [vmem:[#allocation2 + $0xf0] sm:$0xff]
    %v918 = vld [vmem:[#allocation2 + $0xf8] sm:$0xff]
    %v919 = vld [vmem:[#allocation2 + $0x100] sm:$0xff]
    %v920 = vld [vmem:[#allocation2 + $0x108] sm:$0xff]
    %v921 = vld [vmem:[#allocation2 + $0x110] sm:$0xff]
    %v922 = vld [vmem:[#allocation2 + $0x118] sm:$0xff]
    %v923 = vld [vmem:[#allocation2 + $0x120] sm:$0xff]
    %v924 = vld [vmem:[#allocation2 + $0x128] sm:$0xff]
    %v925 = vld [vmem:[#allocation2 + $0x130] sm:$0xff]
    %v926 = vld [vmem:[#allocation2 + $0x138] sm:$0xff]
    %v927 = vld [vmem:[#allocation2 + $0x140] sm:$0xff]
    %v928 = vld [vmem:[#allocation2 + $0x148] sm:$0xff]
    %v929 = vld [vmem:[#allocation2 + $0x150] sm:$0xff]
    %v930 = vld [vmem:[#allocation2 + $0x158] sm:$0xff]
    %v931 = vld [vmem:[#allocation2 + $0x160] sm:$0xff]
    %v932 = vld [vmem:[#allocation2 + $0x168] sm:$0xff]
    %v933 = vld [vmem:[#allocation2 + $0x170] sm:$0xff]
    %v934 = vld [vmem:[#allocation2 + $0x178] sm:$0xff]
    %v935 = vld [vmem:[#allocation2 + $0x180] sm:$0xff]
    %v936 = vld [vmem:[#allocation2 + $0x188] sm:$0xff]
    %v937 = vld [vmem:[#allocation2 + $0x190] sm:$0xff]
    %v938 = vld [vmem:[#allocation2 + $0x198] sm:$0xff]
    %v939 = vld [vmem:[#allocation2 + $0x1a0] sm:$0xff]
    %v940 = vld [vmem:[#allocation2 + $0x1a8] sm:$0xff]
    %v941 = vld [vmem:[#allocation2 + $0x1b0] sm:$0xff]
    %v942 = vld [vmem:[#allocation2 + $0x1b8] sm:$0xff]
    %v943 = vld [vmem:[#allocation2 + $0x1c0] sm:$0xff]
    %v944 = vld [vmem:[#allocation2 + $0x1c8] sm:$0xff]
    %v945 = vld [vmem:[#allocation2 + $0x1d0] sm:$0xff]
    %v946 = vld [vmem:[#allocation2 + $0x1d8] sm:$0xff]
    %v947 = vld [vmem:[#allocation2 + $0x1e0] sm:$0xff]
    %v948 = vld [vmem:[#allocation2 + $0x1e8] sm:$0xff]
    %v949 = vld [vmem:[#allocation2 + $0x1f0] sm:$0xff]
    %v950 = vld [vmem:[#allocation2 + $0x1f8] sm:$0xff]
    %v951 = vld [vmem:[%s2] sm:$0x1]
    %v953 = vlaneseq
    %v954 = vshrl.u32 %v953, 7
    %v955 = vsub.s32 0, %v954
    %v956 = vrot.slane %v951, %v955
    %v958 = vadd.f32 %v887, %v956
    %v959 = vadd.f32 %v888, %v956
    %v960 = vadd.f32 %v889, %v956
    %v961 = vadd.f32 %v890, %v956
    %v962 = vadd.f32 %v891, %v956
    %v963 = vadd.f32 %v892, %v956
    %v964 = vadd.f32 %v893, %v956
    %v965 = vadd.f32 %v894, %v956
    %v966 = vadd.f32 %v895, %v956
    %v967 = vadd.f32 %v896, %v956
    %v968 = vadd.f32 %v897, %v956
    %v969 = vadd.f32 %v898, %v956
    %v970 = vadd.f32 %v899, %v956
    %v971 = vadd.f32 %v900, %v956
    %v972 = vadd.f32 %v901, %v956
    %v973 = vadd.f32 %v902, %v956
    %v974 = vadd.f32 %v903, %v956
    %v975 = vadd.f32 %v904, %v956
    %v976 = vadd.f32 %v905, %v956
    %v977 = vadd.f32 %v906, %v956
    %v978 = vadd.f32 %v907, %v956
    %v979 = vadd.f32 %v908, %v956
    %v980 = vadd.f32 %v909, %v956
    %v981 = vadd.f32 %v910, %v956
    %v982 = vadd.f32 %v911, %v956
    %v983 = vadd.f32 %v912, %v956
    %v984 = vadd.f32 %v913, %v956
    %v985 = vadd.f32 %v914, %v956
    %v986 = vadd.f32 %v915, %v956
    %v987 = vadd.f32 %v916, %v956
    %v988 = vadd.f32 %v917, %v956
    %v989 = vadd.f32 %v918, %v956
    %v990 = vadd.f32 %v919, %v956
    %v991 = vadd.f32 %v920, %v956
    %v992 = vadd.f32 %v921, %v956
    %v993 = vadd.f32 %v922, %v956
    %v994 = vadd.f32 %v923, %v956
    %v995 = vadd.f32 %v924, %v956
    %v996 = vadd.f32 %v925, %v956
    %v997 = vadd.f32 %v926, %v956
    %v998 = vadd.f32 %v927, %v956
    %v999 = vadd.f32 %v928, %v956
    %v1000 = vadd.f32 %v929, %v956
    %v1001 = vadd.f32 %v930, %v956
    %v1002 = vadd.f32 %v931, %v956
    %v1003 = vadd.f32 %v932, %v956
    %v1004 = vadd.f32 %v933, %v956
    %v1005 = vadd.f32 %v934, %v956
    %v1006 = vadd.f32 %v935, %v956
    %v1007 = vadd.f32 %v936, %v956
    %v1008 = vadd.f32 %v937, %v956
    %v1009 = vadd.f32 %v938, %v956
    %v1010 = vadd.f32 %v939, %v956
    %v1011 = vadd.f32 %v940, %v956
    %v1012 = vadd.f32 %v941, %v956
    %v1013 = vadd.f32 %v942, %v956
    %v1014 = vadd.f32 %v943, %v956
    %v1015 = vadd.f32 %v944, %v956
    %v1016 = vadd.f32 %v945, %v956
    %v1017 = vadd.f32 %v946, %v956
    %v1018 = vadd.f32 %v947, %v956
    %v1019 = vadd.f32 %v948, %v956
    %v1020 = vadd.f32 %v949, %v956
    %v1021 = vadd.f32 %v950, %v956
    %v1022 = vmax.f32 %v958, 0.0
    %v1023 = vmax.f32 %v959, 0.0
    %v1024 = vmax.f32 %v960, 0.0
    %v1025 = vmax.f32 %v961, 0.0
    %v1026 = vmax.f32 %v962, 0.0
    %v1027 = vmax.f32 %v963, 0.0
    %v1028 = vmax.f32 %v964, 0.0
    %v1029 = vmax.f32 %v965, 0.0
    %v1030 = vmax.f32 %v966, 0.0
    %v1031 = vmax.f32 %v967, 0.0
    %v1032 = vmax.f32 %v968, 0.0
    %v1033 = vmax.f32 %v969, 0.0
    %v1034 = vmax.f32 %v970, 0.0
    %v1035 = vmax.f32 %v971, 0.0
    %v1036 = vmax.f32 %v972, 0.0
    %v1037 = vmax.f32 %v973, 0.0
    %v1038 = vmax.f32 %v974, 0.0
    %v1039 = vmax.f32 %v975, 0.0
    %v1040 = vmax.f32 %v976, 0.0
    %v1041 = vmax.f32 %v977, 0.0
    %v1042 = vmax.f32 %v978, 0.0
    %v1043 = vmax.f32 %v979, 0.0
    %v1044 = vmax.f32 %v980, 0.0
    %v1045 = vmax.f32 %v981, 0.0
    %v1046 = vmax.f32 %v982, 0.0
    %v1047 = vmax.f32 %v983, 0.0
    %v1048 = vmax.f32 %v984, 0.0
    %v1049 = vmax.f32 %v985, 0.0
    %v1050 = vmax.f32 %v986, 0.0
    %v1051 = vmax.f32 %v987, 0.0
    %v1052 = vmax.f32 %v988, 0.0
    %v1053 = vmax.f32 %v989, 0.0
    %v1054 = vmax.f32 %v990, 0.0
    %v1055 = vmax.f32 %v991, 0.0
    %v1056 = vmax.f32 %v992, 0.0
    %v1057 = vmax.f32 %v993, 0.0
    %v1058 = vmax.f32 %v994, 0.0
    %v1059 = vmax.f32 %v995, 0.0
    %v1060 = vmax.f32 %v996, 0.0
    %v1061 = vmax.f32 %v997, 0.0
    %v1062 = vmax.f32 %v998, 0.0
    %v1063 = vmax.f32 %v999, 0.0
    %v1064 = vmax.f32 %v1000, 0.0
    %v1065 = vmax.f32 %v1001, 0.0
    %v1066 = vmax.f32 %v1002, 0.0
    %v1067 = vmax.f32 %v1003, 0.0
    %v1068 = vmax.f32 %v1004, 0.0
    %v1069 = vmax.f32 %v1005, 0.0
    %v1070 = vmax.f32 %v1006, 0.0
    %v1071 = vmax.f32 %v1007, 0.0
    %v1072 = vmax.f32 %v1008, 0.0
    %v1073 = vmax.f32 %v1009, 0.0
    %v1074 = vmax.f32 %v1010, 0.0
    %v1075 = vmax.f32 %v1011, 0.0
    %v1076 = vmax.f32 %v1012, 0.0
    %v1077 = vmax.f32 %v1013, 0.0
    %v1078 = vmax.f32 %v1014, 0.0
    %v1079 = vmax.f32 %v1015, 0.0
    %v1080 = vmax.f32 %v1016, 0.0
    %v1081 = vmax.f32 %v1017, 0.0
    %v1082 = vmax.f32 %v1018, 0.0
    %v1083 = vmax.f32 %v1019, 0.0
    %v1084 = vmax.f32 %v1020, 0.0
    %v1085 = vmax.f32 %v1021, 0.0
    %v1086 = vpack.c.bf16 %v1023, %v1022
    %v1087 = vpack.c.bf16 %v1025, %v1024
    %v1088 = vpack.c.bf16 %v1027, %v1026
    %v1089 = vpack.c.bf16 %v1029, %v1028
    %v1090 = vpack.c.bf16 %v1031, %v1030
    %v1091 = vpack.c.bf16 %v1033, %v1032
    %v1092 = vpack.c.bf16 %v1035, %v1034
    %v1093 = vpack.c.bf16 %v1037, %v1036
    %v1094 = vpack.c.bf16 %v1039, %v1038
    %v1095 = vpack.c.bf16 %v1041, %v1040
    %v1096 = vpack.c.bf16 %v1043, %v1042
    %v1097 = vpack.c.bf16 %v1045, %v1044
    %v1098 = vpack.c.bf16 %v1047, %v1046
    %v1099 = vpack.c.bf16 %v1049, %v1048
    %v1100 = vpack.c.bf16 %v1051, %v1050
    %v1101 = vpack.c.bf16 %v1053, %v1052
    %v1102 = vpack.c.bf16 %v1055, %v1054
    %v1103 = vpack.c.bf16 %v1057, %v1056
    %v1104 = vpack.c.bf16 %v1059, %v1058
    %v1105 = vpack.c.bf16 %v1061, %v1060
    %v1106 = vpack.c.bf16 %v1063, %v1062
    %v1107 = vpack.c.bf16 %v1065, %v1064
    %v1108 = vpack.c.bf16 %v1067, %v1066
    %v1109 = vpack.c.bf16 %v1069, %v1068
    %v1110 = vpack.c.bf16 %v1071, %v1070
    %v1111 = vpack.c.bf16 %v1073, %v1072
    %v1112 = vpack.c.bf16 %v1075, %v1074
    %v1113 = vpack.c.bf16 %v1077, %v1076
    %v1114 = vpack.c.bf16 %v1079, %v1078
    %v1115 = vpack.c.bf16 %v1081, %v1080
    %v1116 = vpack.c.bf16 %v1083, %v1082
    %v1117 = vpack.c.bf16 %v1085, %v1084
    %v1150 = vunpack.c.l.b16 %v1086
    %v1151 = vunpack.c.h.b16 %v1086
    %v1152 = vunpack.c.l.b16 %v1087
    %v1153 = vunpack.c.h.b16 %v1087
    %v1154 = vunpack.c.l.b16 %v1088
    %v1155 = vunpack.c.h.b16 %v1088
    %v1156 = vunpack.c.l.b16 %v1089
    %v1157 = vunpack.c.h.b16 %v1089
    %v1158 = vunpack.c.l.b16 %v1090
    %v1159 = vunpack.c.h.b16 %v1090
    %v1160 = vunpack.c.l.b16 %v1091
    %v1161 = vunpack.c.h.b16 %v1091
    %v1162 = vunpack.c.l.b16 %v1092
    %v1163 = vunpack.c.h.b16 %v1092
    %v1164 = vunpack.c.l.b16 %v1093
    %v1165 = vunpack.c.h.b16 %v1093
    %v1166 = vunpack.c.l.b16 %v1094
    %v1167 = vunpack.c.h.b16 %v1094
    %v1168 = vunpack.c.l.b16 %v1095
    %v1169 = vunpack.c.h.b16 %v1095
    %v1170 = vunpack.c.l.b16 %v1096
    %v1171 = vunpack.c.h.b16 %v1096
    %v1172 = vunpack.c.l.b16 %v1097
    %v1173 = vunpack.c.h.b16 %v1097
    %v1174 = vunpack.c.l.b16 %v1098
    %v1175 = vunpack.c.h.b16 %v1098
    %v1176 = vunpack.c.l.b16 %v1099
    %v1177 = vunpack.c.h.b16 %v1099
    %v1178 = vunpack.c.l.b16 %v1100
    %v1179 = vunpack.c.h.b16 %v1100
    %v1180 = vunpack.c.l.b16 %v1101
    %v1181 = vunpack.c.h.b16 %v1101
    %v1182 = vunpack.c.l.b16 %v1102
    %v1183 = vunpack.c.h.b16 %v1102
    %v1184 = vunpack.c.l.b16 %v1103
    %v1185 = vunpack.c.h.b16 %v1103
    %v1186 = vunpack.c.l.b16 %v1104
    %v1187 = vunpack.c.h.b16 %v1104
    %v1188 = vunpack.c.l.b16 %v1105
    %v1189 = vunpack.c.h.b16 %v1105
    %v1190 = vunpack.c.l.b16 %v1106
    %v1191 = vunpack.c.h.b16 %v1106
    %v1192 = vunpack.c.l.b16 %v1107
    %v1193 = vunpack.c.h.b16 %v1107
    %v1194 = vunpack.c.l.b16 %v1108
    %v1195 = vunpack.c.h.b16 %v1108
    %v1196 = vunpack.c.l.b16 %v1109
    %v1197 = vunpack.c.h.b16 %v1109
    %v1198 = vunpack.c.l.b16 %v1110
    %v1199 = vunpack.c.h.b16 %v1110
    %v1200 = vunpack.c.l.b16 %v1111
    %v1201 = vunpack.c.h.b16 %v1111
    %v1202 = vunpack.c.l.b16 %v1112
    %v1203 = vunpack.c.h.b16 %v1112
    %v1204 = vunpack.c.l.b16 %v1113
    %v1205 = vunpack.c.h.b16 %v1113
    %v1206 = vunpack.c.l.b16 %v1114
    %v1207 = vunpack.c.h.b16 %v1114
    %v1208 = vunpack.c.l.b16 %v1115
    %v1209 = vunpack.c.h.b16 %v1115
    %v1210 = vunpack.c.l.b16 %v1116
    %v1211 = vunpack.c.h.b16 %v1116
    %v1212 = vunpack.c.l.b16 %v1117
    %v1213 = vunpack.c.h.b16 %v1117
    %v1214 = vpack.c.b16 %v1150, %v1150
    %v1215 = vpack.c.b16 %v1151, %v1151
    %v1216 = vpack.c.b16 %v1152, %v1152
    %v1217 = vpack.c.b16 %v1153, %v1153
    %v1218 = vpack.c.b16 %v1154, %v1154
    %v1219 = vpack.c.b16 %v1155, %v1155
    %v1220 = vpack.c.b16 %v1156, %v1156
    %v1221 = vpack.c.b16 %v1157, %v1157
    %v1222 = vpack.c.b16 %v1158, %v1158
    %v1223 = vpack.c.b16 %v1159, %v1159
    %v1224 = vpack.c.b16 %v1160, %v1160
    %v1225 = vpack.c.b16 %v1161, %v1161
    %v1226 = vpack.c.b16 %v1162, %v1162
    %v1227 = vpack.c.b16 %v1163, %v1163
    %v1228 = vpack.c.b16 %v1164, %v1164
    %v1229 = vpack.c.b16 %v1165, %v1165
    %v1230 = vpack.c.b16 %v1166, %v1166
    %v1231 = vpack.c.b16 %v1167, %v1167
    %v1232 = vpack.c.b16 %v1168, %v1168
    %v1233 = vpack.c.b16 %v1169, %v1169
    %v1234 = vpack.c.b16 %v1170, %v1170
    %v1235 = vpack.c.b16 %v1171, %v1171
    %v1236 = vpack.c.b16 %v1172, %v1172
    %v1237 = vpack.c.b16 %v1173, %v1173
    %v1238 = vpack.c.b16 %v1174, %v1174
    %v1239 = vpack.c.b16 %v1175, %v1175
    %v1240 = vpack.c.b16 %v1176, %v1176
    %v1241 = vpack.c.b16 %v1177, %v1177
    %v1242 = vpack.c.b16 %v1178, %v1178
    %v1243 = vpack.c.b16 %v1179, %v1179
    %v1244 = vpack.c.b16 %v1180, %v1180
    %v1245 = vpack.c.b16 %v1181, %v1181
    %v1246 = vpack.c.b16 %v1182, %v1182
    %v1247 = vpack.c.b16 %v1183, %v1183
    %v1248 = vpack.c.b16 %v1184, %v1184
    %v1249 = vpack.c.b16 %v1185, %v1185
    %v1250 = vpack.c.b16 %v1186, %v1186
    %v1251 = vpack.c.b16 %v1187, %v1187
    %v1252 = vpack.c.b16 %v1188, %v1188
    %v1253 = vpack.c.b16 %v1189, %v1189
    %v1254 = vpack.c.b16 %v1190, %v1190
    %v1255 = vpack.c.b16 %v1191, %v1191
    %v1256 = vpack.c.b16 %v1192, %v1192
    %v1257 = vpack.c.b16 %v1193, %v1193
    %v1258 = vpack.c.b16 %v1194, %v1194
    %v1259 = vpack.c.b16 %v1195, %v1195
    %v1260 = vpack.c.b16 %v1196, %v1196
    %v1261 = vpack.c.b16 %v1197, %v1197
    %v1262 = vpack.c.b16 %v1198, %v1198
    %v1263 = vpack.c.b16 %v1199, %v1199
    %v1264 = vpack.c.b16 %v1200, %v1200
    %v1265 = vpack.c.b16 %v1201, %v1201
    %v1266 = vpack.c.b16 %v1202, %v1202
    %v1267 = vpack.c.b16 %v1203, %v1203
    %v1268 = vpack.c.b16 %v1204, %v1204
    %v1269 = vpack.c.b16 %v1205, %v1205
    %v1270 = vpack.c.b16 %v1206, %v1206
    %v1271 = vpack.c.b16 %v1207, %v1207
    %v1272 = vpack.c.b16 %v1208, %v1208
    %v1273 = vpack.c.b16 %v1209, %v1209
    %v1274 = vpack.c.b16 %v1210, %v1210
    %v1275 = vpack.c.b16 %v1211, %v1211
    %v1276 = vpack.c.b16 %v1212, %v1212
    %v1277 = vpack.c.b16 %v1213, %v1213
    %1342 = vst [vmem:[%s3] sm:$0xf] %v1214
    %1343 = vst [vmem:[%s3 + $0x4] sm:$0xf] %v1215
    %1344 = vst [vmem:[%s3 + $0x8] sm:$0xf] %v1216
    %1345 = vst [vmem:[%s3 + $0xc] sm:$0xf] %v1217
    %1346 = vst [vmem:[%s3 + $0x10] sm:$0xf] %v1218
    %1347 = vst [vmem:[%s3 + $0x14] sm:$0xf] %v1219
    %1348 = vst [vmem:[%s3 + $0x18] sm:$0xf] %v1220
    %1349 = vst [vmem:[%s3 + $0x1c] sm:$0xf] %v1221
    %1350 = vst [vmem:[%s3 + $0x20] sm:$0xf] %v1222
    %1351 = vst [vmem:[%s3 + $0x24] sm:$0xf] %v1223
    %1352 = vst [vmem:[%s3 + $0x28] sm:$0xf] %v1224
    %1353 = vst [vmem:[%s3 + $0x2c] sm:$0xf] %v1225
    %1354 = vst [vmem:[%s3 + $0x30] sm:$0xf] %v1226
    %1355 = vst [vmem:[%s3 + $0x34] sm:$0xf] %v1227
    %1356 = vst [vmem:[%s3 + $0x38] sm:$0xf] %v1228
    %1357 = vst [vmem:[%s3 + $0x3c] sm:$0xf] %v1229
    %1358 = vst [vmem:[%s3 + $0x40] sm:$0xf] %v1230
    %1359 = vst [vmem:[%s3 + $0x44] sm:$0xf] %v1231
    %1360 = vst [vmem:[%s3 + $0x48] sm:$0xf] %v1232
    %1361 = vst [vmem:[%s3 + $0x4c] sm:$0xf] %v1233
    %1362 = vst [vmem:[%s3 + $0x50] sm:$0xf] %v1234
    %1363 = vst [vmem:[%s3 + $0x54] sm:$0xf] %v1235
    %1364 = vst [vmem:[%s3 + $0x58] sm:$0xf] %v1236
    %1365 = vst [vmem:[%s3 + $0x5c] sm:$0xf] %v1237
    %1366 = vst [vmem:[%s3 + $0x60] sm:$0xf] %v1238
    %1367 = vst [vmem:[%s3 + $0x64] sm:$0xf] %v1239
    %1368 = vst [vmem:[%s3 + $0x68] sm:$0xf] %v1240
    %1369 = vst [vmem:[%s3 + $0x6c] sm:$0xf] %v1241
    %1370 = vst [vmem:[%s3 + $0x70] sm:$0xf] %v1242
    %1371 = vst [vmem:[%s3 + $0x74] sm:$0xf] %v1243
    %1372 = vst [vmem:[%s3 + $0x78] sm:$0xf] %v1244
    %1373 = vst [vmem:[%s3 + $0x7c] sm:$0xf] %v1245
    %1374 = vst [vmem:[%s3 + $0x80] sm:$0xf] %v1246
    %1375 = vst [vmem:[%s3 + $0x84] sm:$0xf] %v1247
    %1376 = vst [vmem:[%s3 + $0x88] sm:$0xf] %v1248
    %1377 = vst [vmem:[%s3 + $0x8c] sm:$0xf] %v1249
    %1378 = vst [vmem:[%s3 + $0x90] sm:$0xf] %v1250
    %1379 = vst [vmem:[%s3 + $0x94] sm:$0xf] %v1251
    %1380 = vst [vmem:[%s3 + $0x98] sm:$0xf] %v1252
    %1381 = vst [vmem:[%s3 + $0x9c] sm:$0xf] %v1253
    %1382 = vst [vmem:[%s3 + $0xa0] sm:$0xf] %v1254
    %1383 = vst [vmem:[%s3 + $0xa4] sm:$0xf] %v1255
    %1384 = vst [vmem:[%s3 + $0xa8] sm:$0xf] %v1256
    %1385 = vst [vmem:[%s3 + $0xac] sm:$0xf] %v1257
    %1386 = vst [vmem:[%s3 + $0xb0] sm:$0xf] %v1258
    %1387 = vst [vmem:[%s3 + $0xb4] sm:$0xf] %v1259
    %1388 = vst [vmem:[%s3 + $0xb8] sm:$0xf] %v1260
    %1389 = vst [vmem:[%s3 + $0xbc] sm:$0xf] %v1261
    %1390 = vst [vmem:[%s3 + $0xc0] sm:$0xf] %v1262
    %1391 = vst [vmem:[%s3 + $0xc4] sm:$0xf] %v1263
    %1392 = vst [vmem:[%s3 + $0xc8] sm:$0xf] %v1264
    %1393 = vst [vmem:[%s3 + $0xcc] sm:$0xf] %v1265
    %1394 = vst [vmem:[%s3 + $0xd0] sm:$0xf] %v1266
    %1395 = vst [vmem:[%s3 + $0xd4] sm:$0xf] %v1267
    %1396 = vst [vmem:[%s3 + $0xd8] sm:$0xf] %v1268
    %1397 = vst [vmem:[%s3 + $0xdc] sm:$0xf] %v1269
    %1398 = vst [vmem:[%s3 + $0xe0] sm:$0xf] %v1270
    %1399 = vst [vmem:[%s3 + $0xe4] sm:$0xf] %v1271
    %1400 = vst [vmem:[%s3 + $0xe8] sm:$0xf] %v1272
    %1401 = vst [vmem:[%s3 + $0xec] sm:$0xf] %v1273
    %1402 = vst [vmem:[%s3 + $0xf0] sm:$0xf] %v1274
    %1403 = vst [vmem:[%s3 + $0xf4] sm:$0xf] %v1275
    %1404 = vst [vmem:[%s3 + $0xf8] sm:$0xf] %v1276
    %1405 = vst [vmem:[%s3 + $0xfc] sm:$0xf] %v1277
  $region21: #{residual_block.3} parent=0 // pred_fallthru
    _
  // Predicated region
  $region22: #{residual_block.3} parent=0 // pred_check
    _
  $region23: #{residual_block.3} parent=0 // pred_check_branch
    %1407 = sbr.rel (0) target = $region25
  $region24: #{residual_block.3} parent=0 // pred_region
    _
  $region25: #{residual_block.3} parent=0 // pred_fallthru
    _
  // Predicated region
  $region26: #{residual_block.3} parent=0 // pred_check
    _
  $region27: #{residual_block.3} parent=0 // pred_check_branch
    %1409 = sbr.rel (0) target = $region29
  $region28: #{residual_block.3} parent=0 // pred_region
    _
  $region29: #{residual_block.3} parent=0 // pred_fallthru
    _

// kernel: residual_block.4
$region0: #{residual_block.4}
  #allocation0 [shape = 'u32[]', space=smem, size = 0x4, offset = 0x4, fixed_abs, tag = 'smem constant byte address 0x4 - core index']
  #allocation1 [shape = 'u32[144,128]{1,0:T(1,128)}', space=vmem, size = 0x12000, scoped, tag = 'internal scratch']
  #allocation2 [shape = 'f32[512,128]{1,0:T(8,128)}', space=vmem, size = 0x40000, scoped, tag = 'scratch operand']
  %s0 = inlined_call_operand.vmem [shape: bf16[512,128], index: 0, kind: input, shape index: {}]
  %s1 = inlined_call_operand.vmem [shape: bf16[128,128], index: 1, kind: input, shape index: {}]
  %s2 = inlined_call_operand.vmem [shape: f32[1,128], index: 2, kind: input, shape index: {}]
  %s3 = inlined_call_operand.vmem [shape: f32[512,128], index: 3, kind: output, shape index: {}]
  %s4 = sld [smem:[#allocation0]]
  $region30: #{residual_block.4} parent=0
    _
  %s6 = ssub.s32 1, %s4
  %s7 = scalar_select 0, %s6, %s4
  // Predicated region
  $region2: #{residual_block.4} parent=0 // pred_check
    _
  $region3: #{residual_block.4} parent=0 // pred_check_branch
    %9 = sbr.rel (0) target = $region5
  $region4: #{residual_block.4} parent=0 // pred_region
    _
  $region5: #{residual_block.4} parent=0 // pred_fallthru
    _
  // Predicated region
  $region6: #{residual_block.4} parent=0 // pred_check
    _
  $region7: #{residual_block.4} parent=0 // pred_check_branch
    %11 = sbr.rel (0) target = $region9
  $region8: #{residual_block.4} parent=0 // pred_region
    _
  $region9: #{residual_block.4} parent=0 // pred_fallthru
    _
  // Predicated region
  $region10: #{residual_block.4} parent=0 // pred_check
    _
  $region11: #{residual_block.4} parent=0 // pred_check_branch
    %13 = sbr.rel (0) target = $region13
  $region12: #{residual_block.4} parent=0 // pred_region
    _
  $region13: #{residual_block.4} parent=0 // pred_fallthru
    _
  %p15 = scmp.eq.s32.totalorder 0, 0
  // Predicated region
  $region14: #{residual_block.4} parent=0 // pred_check
    %p16 = pneg %p15
  $region15: #{residual_block.4} parent=0 // pred_check_branch
    %18 = sbr.rel (%p16) target = $region17
  $region16: #{residual_block.4} parent=0 // pred_region
    %19 = vst [vmem:[#allocation2] sm:$0xff] 0.0
    %20 = vst [vmem:[#allocation2 + $0x8] sm:$0xff] 0.0
    %21 = vst [vmem:[#allocation2 + $0x10] sm:$0xff] 0.0
    %22 = vst [vmem:[#allocation2 + $0x18] sm:$0xff] 0.0
    %23 = vst [vmem:[#allocation2 + $0x20] sm:$0xff] 0.0
    %24 = vst [vmem:[#allocation2 + $0x28] sm:$0xff] 0.0
    %25 = vst [vmem:[#allocation2 + $0x30] sm:$0xff] 0.0
    %26 = vst [vmem:[#allocation2 + $0x38] sm:$0xff] 0.0
    %27 = vst [vmem:[#allocation2 + $0x40] sm:$0xff] 0.0
    %28 = vst [vmem:[#allocation2 + $0x48] sm:$0xff] 0.0
    %29 = vst [vmem:[#allocation2 + $0x50] sm:$0xff] 0.0
    %30 = vst [vmem:[#allocation2 + $0x58] sm:$0xff] 0.0
    %31 = vst [vmem:[#allocation2 + $0x60] sm:$0xff] 0.0
    %32 = vst [vmem:[#allocation2 + $0x68] sm:$0xff] 0.0
    %33 = vst [vmem:[#allocation2 + $0x70] sm:$0xff] 0.0
    %34 = vst [vmem:[#allocation2 + $0x78] sm:$0xff] 0.0
    %35 = vst [vmem:[#allocation2 + $0x80] sm:$0xff] 0.0
    %36 = vst [vmem:[#allocation2 + $0x88] sm:$0xff] 0.0
    %37 = vst [vmem:[#allocation2 + $0x90] sm:$0xff] 0.0
    %38 = vst [vmem:[#allocation2 + $0x98] sm:$0xff] 0.0
    %39 = vst [vmem:[#allocation2 + $0xa0] sm:$0xff] 0.0
    %40 = vst [vmem:[#allocation2 + $0xa8] sm:$0xff] 0.0
    %41 = vst [vmem:[#allocation2 + $0xb0] sm:$0xff] 0.0
    %42 = vst [vmem:[#allocation2 + $0xb8] sm:$0xff] 0.0
    %43 = vst [vmem:[#allocation2 + $0xc0] sm:$0xff] 0.0
    %44 = vst [vmem:[#allocation2 + $0xc8] sm:$0xff] 0.0
    %45 = vst [vmem:[#allocation2 + $0xd0] sm:$0xff] 0.0
    %46 = vst [vmem:[#allocation2 + $0xd8] sm:$0xff] 0.0
    %47 = vst [vmem:[#allocation2 + $0xe0] sm:$0xff] 0.0
    %48 = vst [vmem:[#allocation2 + $0xe8] sm:$0xff] 0.0
    %49 = vst [vmem:[#allocation2 + $0xf0] sm:$0xff] 0.0
    %50 = vst [vmem:[#allocation2 + $0xf8] sm:$0xff] 0.0
    %51 = vst [vmem:[#allocation2 + $0x100] sm:$0xff] 0.0
    %52 = vst [vmem:[#allocation2 + $0x108] sm:$0xff] 0.0
    %53 = vst [vmem:[#allocation2 + $0x110] sm:$0xff] 0.0
    %54 = vst [vmem:[#allocation2 + $0x118] sm:$0xff] 0.0
    %55 = vst [vmem:[#allocation2 + $0x120] sm:$0xff] 0.0
    %56 = vst [vmem:[#allocation2 + $0x128] sm:$0xff] 0.0
    %57 = vst [vmem:[#allocation2 + $0x130] sm:$0xff] 0.0
    %58 = vst [vmem:[#allocation2 + $0x138] sm:$0xff] 0.0
    %59 = vst [vmem:[#allocation2 + $0x140] sm:$0xff] 0.0
    %60 = vst [vmem:[#allocation2 + $0x148] sm:$0xff] 0.0
    %61 = vst [vmem:[#allocation2 + $0x150] sm:$0xff] 0.0
    %62 = vst [vmem:[#allocation2 + $0x158] sm:$0xff] 0.0
    %63 = vst [vmem:[#allocation2 + $0x160] sm:$0xff] 0.0
    %64 = vst [vmem:[#allocation2 + $0x168] sm:$0xff] 0.0
    %65 = vst [vmem:[#allocation2 + $0x170] sm:$0xff] 0.0
    %66 = vst [vmem:[#allocation2 + $0x178] sm:$0xff] 0.0
    %67 = vst [vmem:[#allocation2 + $0x180] sm:$0xff] 0.0
    %68 = vst [vmem:[#allocation2 + $0x188] sm:$0xff] 0.0
    %69 = vst [vmem:[#allocation2 + $0x190] sm:$0xff] 0.0
    %70 = vst [vmem:[#allocation2 + $0x198] sm:$0xff] 0.0
    %71 = vst [vmem:[#allocation2 + $0x1a0] sm:$0xff] 0.0
    %72 = vst [vmem:[#allocation2 + $0x1a8] sm:$0xff] 0.0
    %73 = vst [vmem:[#allocation2 + $0x1b0] sm:$0xff] 0.0
    %74 = vst [vmem:[#allocation2 + $0x1b8] sm:$0xff] 0.0
    %75 = vst [vmem:[#allocation2 + $0x1c0] sm:$0xff] 0.0
    %76 = vst [vmem:[#allocation2 + $0x1c8] sm:$0xff] 0.0
    %77 = vst [vmem:[#allocation2 + $0x1d0] sm:$0xff] 0.0
    %78 = vst [vmem:[#allocation2 + $0x1d8] sm:$0xff] 0.0
    %79 = vst [vmem:[#allocation2 + $0x1e0] sm:$0xff] 0.0
    %80 = vst [vmem:[#allocation2 + $0x1e8] sm:$0xff] 0.0
    %81 = vst [vmem:[#allocation2 + $0x1f0] sm:$0xff] 0.0
    %82 = vst [vmem:[#allocation2 + $0x1f8] sm:$0xff] 0.0
  $region17: #{residual_block.4} parent=0 // pred_fallthru
    _
  %v83 = vld [vmem:[#allocation2] sm:$0xff]
  %v84 = vld [vmem:[#allocation2 + $0x8] sm:$0xff]
  %v85 = vld [vmem:[#allocation2 + $0x10] sm:$0xff]
  %v86 = vld [vmem:[#allocation2 + $0x18] sm:$0xff]
  %v87 = vld [vmem:[#allocation2 + $0x20] sm:$0xff]
  %v88 = vld [vmem:[#allocation2 + $0x28] sm:$0xff]
  %v89 = vld [vmem:[#allocation2 + $0x30] sm:$0xff]
  %v90 = vld [vmem:[#allocation2 + $0x38] sm:$0xff]
  %v91 = vld [vmem:[#allocation2 + $0x40] sm:$0xff]
  %v92 = vld [vmem:[#allocation2 + $0x48] sm:$0xff]
  %v93 = vld [vmem:[#allocation2 + $0x50] sm:$0xff]
  %v94 = vld [vmem:[#allocation2 + $0x58] sm:$0xff]
  %v95 = vld [vmem:[#allocation2 + $0x60] sm:$0xff]
  %v96 = vld [vmem:[#allocation2 + $0x68] sm:$0xff]
  %v97 = vld [vmem:[#allocation2 + $0x70] sm:$0xff]
  %v98 = vld [vmem:[#allocation2 + $0x78] sm:$0xff]
  %v99 = vld [vmem:[#allocation2 + $0x80] sm:$0xff]
  %v100 = vld [vmem:[#allocation2 + $0x88] sm:$0xff]
  %v101 = vld [vmem:[#allocation2 + $0x90] sm:$0xff]
  %v102 = vld [vmem:[#allocation2 + $0x98] sm:$0xff]
  %v103 = vld [vmem:[#allocation2 + $0xa0] sm:$0xff]
  %v104 = vld [vmem:[#allocation2 + $0xa8] sm:$0xff]
  %v105 = vld [vmem:[#allocation2 + $0xb0] sm:$0xff]
  %v106 = vld [vmem:[#allocation2 + $0xb8] sm:$0xff]
  %v107 = vld [vmem:[#allocation2 + $0xc0] sm:$0xff]
  %v108 = vld [vmem:[#allocation2 + $0xc8] sm:$0xff]
  %v109 = vld [vmem:[#allocation2 + $0xd0] sm:$0xff]
  %v110 = vld [vmem:[#allocation2 + $0xd8] sm:$0xff]
  %v111 = vld [vmem:[#allocation2 + $0xe0] sm:$0xff]
  %v112 = vld [vmem:[#allocation2 + $0xe8] sm:$0xff]
  %v113 = vld [vmem:[#allocation2 + $0xf0] sm:$0xff]
  %v114 = vld [vmem:[#allocation2 + $0xf8] sm:$0xff]
  %v115 = vld [vmem:[#allocation2 + $0x100] sm:$0xff]
  %v116 = vld [vmem:[#allocation2 + $0x108] sm:$0xff]
  %v117 = vld [vmem:[#allocation2 + $0x110] sm:$0xff]
  %v118 = vld [vmem:[#allocation2 + $0x118] sm:$0xff]
  %v119 = vld [vmem:[#allocation2 + $0x120] sm:$0xff]
  %v120 = vld [vmem:[#allocation2 + $0x128] sm:$0xff]
  %v121 = vld [vmem:[#allocation2 + $0x130] sm:$0xff]
  %v122 = vld [vmem:[#allocation2 + $0x138] sm:$0xff]
  %v123 = vld [vmem:[#allocation2 + $0x140] sm:$0xff]
  %v124 = vld [vmem:[#allocation2 + $0x148] sm:$0xff]
  %v125 = vld [vmem:[#allocation2 + $0x150] sm:$0xff]
  %v126 = vld [vmem:[#allocation2 + $0x158] sm:$0xff]
  %v127 = vld [vmem:[#allocation2 + $0x160] sm:$0xff]
  %v128 = vld [vmem:[#allocation2 + $0x168] sm:$0xff]
  %v129 = vld [vmem:[#allocation2 + $0x170] sm:$0xff]
  %v130 = vld [vmem:[#allocation2 + $0x178] sm:$0xff]
  %v131 = vld [vmem:[#allocation2 + $0x180] sm:$0xff]
  %v132 = vld [vmem:[#allocation2 + $0x188] sm:$0xff]
  %v133 = vld [vmem:[#allocation2 + $0x190] sm:$0xff]
  %v134 = vld [vmem:[#allocation2 + $0x198] sm:$0xff]
  %v135 = vld [vmem:[#allocation2 + $0x1a0] sm:$0xff]
  %v136 = vld [vmem:[#allocation2 + $0x1a8] sm:$0xff]
  %v137 = vld [vmem:[#allocation2 + $0x1b0] sm:$0xff]
  %v138 = vld [vmem:[#allocation2 + $0x1b8] sm:$0xff]
  %v139 = vld [vmem:[#allocation2 + $0x1c0] sm:$0xff]
  %v140 = vld [vmem:[#allocation2 + $0x1c8] sm:$0xff]
  %v141 = vld [vmem:[#allocation2 + $0x1d0] sm:$0xff]
  %v142 = vld [vmem:[#allocation2 + $0x1d8] sm:$0xff]
  %v143 = vld [vmem:[#allocation2 + $0x1e0] sm:$0xff]
  %v144 = vld [vmem:[#allocation2 + $0x1e8] sm:$0xff]
  %v145 = vld [vmem:[#allocation2 + $0x1f0] sm:$0xff]
  %v146 = vld [vmem:[#allocation2 + $0x1f8] sm:$0xff]
  %v147 = vld [vmem:[%s0] sm:$0xf]
  %v148 = vld [vmem:[%s0 + $0x4] sm:$0xf]
  %v149 = vld [vmem:[%s0 + $0x8] sm:$0xf]
  %v150 = vld [vmem:[%s0 + $0xc] sm:$0xf]
  %v151 = vld [vmem:[%s0 + $0x10] sm:$0xf]
  %v152 = vld [vmem:[%s0 + $0x14] sm:$0xf]
  %v153 = vld [vmem:[%s0 + $0x18] sm:$0xf]
  %v154 = vld [vmem:[%s0 + $0x1c] sm:$0xf]
  %v155 = vld [vmem:[%s0 + $0x20] sm:$0xf]
  %v156 = vld [vmem:[%s0 + $0x24] sm:$0xf]
  %v157 = vld [vmem:[%s0 + $0x28] sm:$0xf]
  %v158 = vld [vmem:[%s0 + $0x2c] sm:$0xf]
  %v159 = vld [vmem:[%s0 + $0x30] sm:$0xf]
  %v160 = vld [vmem:[%s0 + $0x34] sm:$0xf]
  %v161 = vld [vmem:[%s0 + $0x38] sm:$0xf]
  %v162 = vld [vmem:[%s0 + $0x3c] sm:$0xf]
  %v163 = vld [vmem:[%s0 + $0x40] sm:$0xf]
  %v164 = vld [vmem:[%s0 + $0x44] sm:$0xf]
  %v165 = vld [vmem:[%s0 + $0x48] sm:$0xf]
  %v166 = vld [vmem:[%s0 + $0x4c] sm:$0xf]
  %v167 = vld [vmem:[%s0 + $0x50] sm:$0xf]
  %v168 = vld [vmem:[%s0 + $0x54] sm:$0xf]
  %v169 = vld [vmem:[%s0 + $0x58] sm:$0xf]
  %v170 = vld [vmem:[%s0 + $0x5c] sm:$0xf]
  %v171 = vld [vmem:[%s0 + $0x60] sm:$0xf]
  %v172 = vld [vmem:[%s0 + $0x64] sm:$0xf]
  %v173 = vld [vmem:[%s0 + $0x68] sm:$0xf]
  %v174 = vld [vmem:[%s0 + $0x6c] sm:$0xf]
  %v175 = vld [vmem:[%s0 + $0x70] sm:$0xf]
  %v176 = vld [vmem:[%s0 + $0x74] sm:$0xf]
  %v177 = vld [vmem:[%s0 + $0x78] sm:$0xf]
  %v178 = vld [vmem:[%s0 + $0x7c] sm:$0xf]
  %v179 = vld [vmem:[%s0 + $0x80] sm:$0xf]
  %v180 = vld [vmem:[%s0 + $0x84] sm:$0xf]
  %v181 = vld [vmem:[%s0 + $0x88] sm:$0xf]
  %v182 = vld [vmem:[%s0 + $0x8c] sm:$0xf]
  %v183 = vld [vmem:[%s0 + $0x90] sm:$0xf]
  %v184 = vld [vmem:[%s0 + $0x94] sm:$0xf]
  %v185 = vld [vmem:[%s0 + $0x98] sm:$0xf]
  %v186 = vld [vmem:[%s0 + $0x9c] sm:$0xf]
  %v187 = vld [vmem:[%s0 + $0xa0] sm:$0xf]
  %v188 = vld [vmem:[%s0 + $0xa4] sm:$0xf]
  %v189 = vld [vmem:[%s0 + $0xa8] sm:$0xf]
  %v190 = vld [vmem:[%s0 + $0xac] sm:$0xf]
  %v191 = vld [vmem:[%s0 + $0xb0] sm:$0xf]
  %v192 = vld [vmem:[%s0 + $0xb4] sm:$0xf]
  %v193 = vld [vmem:[%s0 + $0xb8] sm:$0xf]
  %v194 = vld [vmem:[%s0 + $0xbc] sm:$0xf]
  %v195 = vld [vmem:[%s0 + $0xc0] sm:$0xf]
  %v196 = vld [vmem:[%s0 + $0xc4] sm:$0xf]
  %v197 = vld [vmem:[%s0 + $0xc8] sm:$0xf]
  %v198 = vld [vmem:[%s0 + $0xcc] sm:$0xf]
  %v199 = vld [vmem:[%s0 + $0xd0] sm:$0xf]
  %v200 = vld [vmem:[%s0 + $0xd4] sm:$0xf]
  %v201 = vld [vmem:[%s0 + $0xd8] sm:$0xf]
  %v202 = vld [vmem:[%s0 + $0xdc] sm:$0xf]
  %v203 = vld [vmem:[%s0 + $0xe0] sm:$0xf]
  %v204 = vld [vmem:[%s0 + $0xe4] sm:$0xf]
  %v205 = vld [vmem:[%s0 + $0xe8] sm:$0xf]
  %v206 = vld [vmem:[%s0 + $0xec] sm:$0xf]
  %v207 = vld [vmem:[%s0 + $0xf0] sm:$0xf]
  %v208 = vld [vmem:[%s0 + $0xf4] sm:$0xf]
  %v209 = vld [vmem:[%s0 + $0xf8] sm:$0xf]
  %v210 = vld [vmem:[%s0 + $0xfc] sm:$0xf]
  %v211 = vld [vmem:[%s1] sm:$0xf]
  %v212 = vld [vmem:[%s1 + $0x4] sm:$0xf]
  %v213 = vld [vmem:[%s1 + $0x8] sm:$0xf]
  %v214 = vld [vmem:[%s1 + $0xc] sm:$0xf]
  %v215 = vld [vmem:[%s1 + $0x10] sm:$0xf]
  %v216 = vld [vmem:[%s1 + $0x14] sm:$0xf]
  %v217 = vld [vmem:[%s1 + $0x18] sm:$0xf]
  %v218 = vld [vmem:[%s1 + $0x1c] sm:$0xf]
  %v219 = vld [vmem:[%s1 + $0x20] sm:$0xf]
  %v220 = vld [vmem:[%s1 + $0x24] sm:$0xf]
  %v221 = vld [vmem:[%s1 + $0x28] sm:$0xf]
  %v222 = vld [vmem:[%s1 + $0x2c] sm:$0xf]
  %v223 = vld [vmem:[%s1 + $0x30] sm:$0xf]
  %v224 = vld [vmem:[%s1 + $0x34] sm:$0xf]
  %v225 = vld [vmem:[%s1 + $0x38] sm:$0xf]
  %v226 = vld [vmem:[%s1 + $0x3c] sm:$0xf]
  %v291 = vunpack.c.l.b16 %v147
  %v292 = vunpack.c.l.b16 %v148
  %v293 = vunpack.c.l.b16 %v149
  %v294 = vunpack.c.l.b16 %v150
  %v295 = vunpack.c.l.b16 %v151
  %v296 = vunpack.c.l.b16 %v152
  %v297 = vunpack.c.l.b16 %v153
  %v298 = vunpack.c.l.b16 %v154
  %v299 = vunpack.c.l.b16 %v155
  %v300 = vunpack.c.l.b16 %v156
  %v301 = vunpack.c.l.b16 %v157
  %v302 = vunpack.c.l.b16 %v158
  %v303 = vunpack.c.l.b16 %v159
  %v304 = vunpack.c.l.b16 %v160
  %v305 = vunpack.c.l.b16 %v161
  %v306 = vunpack.c.l.b16 %v162
  %v307 = vunpack.c.l.b16 %v163
  %v308 = vunpack.c.l.b16 %v164
  %v309 = vunpack.c.l.b16 %v165
  %v310 = vunpack.c.l.b16 %v166
  %v311 = vunpack.c.l.b16 %v167
  %v312 = vunpack.c.l.b16 %v168
  %v313 = vunpack.c.l.b16 %v169
  %v314 = vunpack.c.l.b16 %v170
  %v315 = vunpack.c.l.b16 %v171
  %v316 = vunpack.c.l.b16 %v172
  %v317 = vunpack.c.l.b16 %v173
  %v318 = vunpack.c.l.b16 %v174
  %v319 = vunpack.c.l.b16 %v175
  %v320 = vunpack.c.l.b16 %v176
  %v321 = vunpack.c.l.b16 %v177
  %v322 = vunpack.c.l.b16 %v178
  %v323 = vunpack.c.l.b16 %v179
  %v324 = vunpack.c.l.b16 %v180
  %v325 = vunpack.c.l.b16 %v181
  %v326 = vunpack.c.l.b16 %v182
  %v327 = vunpack.c.l.b16 %v183
  %v328 = vunpack.c.l.b16 %v184
  %v329 = vunpack.c.l.b16 %v185
  %v330 = vunpack.c.l.b16 %v186
  %v331 = vunpack.c.l.b16 %v187
  %v332 = vunpack.c.l.b16 %v188
  %v333 = vunpack.c.l.b16 %v189
  %v334 = vunpack.c.l.b16 %v190
  %v335 = vunpack.c.l.b16 %v191
  %v336 = vunpack.c.l.b16 %v192
  %v337 = vunpack.c.l.b16 %v193
  %v338 = vunpack.c.l.b16 %v194
  %v339 = vunpack.c.l.b16 %v195
  %v340 = vunpack.c.l.b16 %v196
  %v341 = vunpack.c.l.b16 %v197
  %v342 = vunpack.c.l.b16 %v198
  %v343 = vunpack.c.l.b16 %v199
  %v344 = vunpack.c.l.b16 %v200
  %v345 = vunpack.c.l.b16 %v201
  %v346 = vunpack.c.l.b16 %v202
  %v347 = vunpack.c.l.b16 %v203
  %v348 = vunpack.c.l.b16 %v204
  %v349 = vunpack.c.l.b16 %v205
  %v350 = vunpack.c.l.b16 %v206
  %v351 = vunpack.c.l.b16 %v207
  %v352 = vunpack.c.l.b16 %v208
  %v353 = vunpack.c.l.b16 %v209
  %v354 = vunpack.c.l.b16 %v210
  %v355 = vpack.c.b16 %v292, %v291
  %v356 = vpack.c.b16 %v294, %v293
  %v357 = vpack.c.b16 %v296, %v295
  %v358 = vpack.c.b16 %v298, %v297
  %v359 = vpack.c.b16 %v300, %v299
  %v360 = vpack.c.b16 %v302, %v301
  %v361 = vpack.c.b16 %v304, %v303
  %v362 = vpack.c.b16 %v306, %v305
  %v363 = vpack.c.b16 %v308, %v307
  %v364 = vpack.c.b16 %v310, %v309
  %v365 = vpack.c.b16 %v312, %v311
  %v366 = vpack.c.b16 %v314, %v313
  %v367 = vpack.c.b16 %v316, %v315
  %v368 = vpack.c.b16 %v318, %v317
  %v369 = vpack.c.b16 %v320, %v319
  %v370 = vpack.c.b16 %v322, %v321
  %v371 = vpack.c.b16 %v324, %v323
  %v372 = vpack.c.b16 %v326, %v325
  %v373 = vpack.c.b16 %v328, %v327
  %v374 = vpack.c.b16 %v330, %v329
  %v375 = vpack.c.b16 %v332, %v331
  %v376 = vpack.c.b16 %v334, %v333
  %v377 = vpack.c.b16 %v336, %v335
  %v378 = vpack.c.b16 %v338, %v337
  %v379 = vpack.c.b16 %v340, %v339
  %v380 = vpack.c.b16 %v342, %v341
  %v381 = vpack.c.b16 %v344, %v343
  %v382 = vpack.c.b16 %v346, %v345
  %v383 = vpack.c.b16 %v348, %v347
  %v384 = vpack.c.b16 %v350, %v349
  %v385 = vpack.c.b16 %v352, %v351
  %v386 = vpack.c.b16 %v354, %v353
  %v435 = vunpack.c.l.b16 %v211
  %v436 = vunpack.c.l.b16 %v212
  %v437 = vunpack.c.l.b16 %v213
  %v438 = vunpack.c.l.b16 %v214
  %v439 = vunpack.c.l.b16 %v215
  %v440 = vunpack.c.l.b16 %v216
  %v441 = vunpack.c.l.b16 %v217
  %v442 = vunpack.c.l.b16 %v218
  %v443 = vunpack.c.l.b16 %v219
  %v444 = vunpack.c.l.b16 %v220
  %v445 = vunpack.c.l.b16 %v221
  %v446 = vunpack.c.l.b16 %v222
  %v447 = vunpack.c.l.b16 %v223
  %v448 = vunpack.c.l.b16 %v224
  %v449 = vunpack.c.l.b16 %v225
  %v450 = vunpack.c.l.b16 %v226
  %v451 = vpack.c.b16 %v436, %v435
  %v452 = vpack.c.b16 %v438, %v437
  %v453 = vpack.c.b16 %v440, %v439
  %v454 = vpack.c.b16 %v442, %v441
  %v455 = vpack.c.b16 %v444, %v443
  %v456 = vpack.c.b16 %v446, %v445
  %v457 = vpack.c.b16 %v448, %v447
  %v458 = vpack.c.b16 %v450, %v449
  %467 = vmatprep.subr.bf16.mxu0 0
  %468 = vmatpush1.bf16.msra.mxu0 %v458
  %469 = vmatprep.subr.bf16.mxu0 0
  %470 = vmatpush1.bf16.msra.mxu0 %v457
  %471 = vmatprep.subr.bf16.mxu0 0
  %472 = vmatpush1.bf16.msra.mxu0 %v456
  %473 = vmatprep.subr.bf16.mxu0 0
  %474 = vmatpush1.bf16.msra.mxu0 %v455
  %475 = vmatprep.subr.bf16.mxu0 0
  %476 = vmatpush1.bf16.msra.mxu0 %v454
  %477 = vmatprep.subr.bf16.mxu0 0
  %478 = vmatpush1.bf16.msra.mxu0 %v453
  %479 = vmatprep.subr.bf16.mxu0 0
  %480 = vmatpush1.bf16.msra.mxu0 %v452
  %481 = vmatprep.subr.bf16.mxu0 0
  %482 = vmatpush1.bf16.msra.mxu0 %v451
  %483 = vmatprep.subr.bf16.mxu0 0
  %484 = vmatpush2.bf16.msra.mxu0 0
  %485 = vmatprep.subr.bf16.mxu0 0
  %486 = vmatpush2.bf16.msra.mxu0 0
  %487 = vmatprep.subr.bf16.mxu0 0
  %488 = vmatpush2.bf16.msra.mxu0 0
  %489 = vmatprep.subr.bf16.mxu0 0
  %490 = vmatpush2.bf16.msra.mxu0 0
  %491 = vmatprep.subr.bf16.mxu0 0
  %492 = vmatpush2.bf16.msra.mxu0 0
  %493 = vmatprep.subr.bf16.mxu0 0
  %494 = vmatpush2.bf16.msra.mxu0 0
  %495 = vmatprep.subr.bf16.mxu0 0
  %496 = vmatpush2.bf16.msra.mxu0 0
  %497 = vmatprep.subr.bf16.mxu0 0
  %498 = vmatpush2.bf16.msra.mxu0 0
  %499 = vmatprep.mubr.bf16.mxu0 0
  %500 = vmatmul.mubr.bf16.gmra.mxu0 %v355
  %v501 = vpop.f32.mrf.mxu0
  %v502 = vadd.f32 0.0, %v501
  %v503 = vpop.f32.mrf.mxu0
  %v504 = vpop.f32.mrf.mxu0
  %v505 = vadd.f32 0.0, %v504
  %v506 = vpop.f32.mrf.mxu0
  %507 = vmatprep.mubr.bf16.mxu0 0
  %508 = vmatmul.mubr.bf16.gmra.mxu0 %v356
  %v509 = vpop.f32.mrf.mxu0
  %v510 = vadd.f32 0.0, %v509
  %v511 = vpop.f32.mrf.mxu0
  %v512 = vpop.f32.mrf.mxu0
  %v513 = vadd.f32 0.0, %v512
  %v514 = vpop.f32.mrf.mxu0
  %515 = vmatprep.mubr.bf16.mxu0 0
  %516 = vmatmul.mubr.bf16.gmra.mxu0 %v357
  %v517 = vpop.f32.mrf.mxu0
  %v518 = vadd.f32 0.0, %v517
  %v519 = vpop.f32.mrf.mxu0
  %v520 = vpop.f32.mrf.mxu0
  %v521 = vadd.f32 0.0, %v520
  %v522 = vpop.f32.mrf.mxu0
  %523 = vmatprep.mubr.bf16.mxu0 0
  %524 = vmatmul.mubr.bf16.gmra.mxu0 %v358
  %v525 = vpop.f32.mrf.mxu0
  %v526 = vadd.f32 0.0, %v525
  %v527 = vpop.f32.mrf.mxu0
  %v528 = vpop.f32.mrf.mxu0
  %v529 = vadd.f32 0.0, %v528
  %v530 = vpop.f32.mrf.mxu0
  %531 = vmatprep.mubr.bf16.mxu0 0
  %532 = vmatmul.mubr.bf16.gmra.mxu0 %v359
  %v533 = vpop.f32.mrf.mxu0
  %v534 = vadd.f32 0.0, %v533
  %v535 = vpop.f32.mrf.mxu0
  %v536 = vpop.f32.mrf.mxu0
  %v537 = vadd.f32 0.0, %v536
  %v538 = vpop.f32.mrf.mxu0
  %539 = vmatprep.mubr.bf16.mxu0 0
  %540 = vmatmul.mubr.bf16.gmra.mxu0 %v360
  %v541 = vpop.f32.mrf.mxu0
  %v542 = vadd.f32 0.0, %v541
  %v543 = vpop.f32.mrf.mxu0
  %v544 = vpop.f32.mrf.mxu0
  %v545 = vadd.f32 0.0, %v544
  %v546 = vpop.f32.mrf.mxu0
  %547 = vmatprep.mubr.bf16.mxu0 0
  %548 = vmatmul.mubr.bf16.gmra.mxu0 %v361
  %v549 = vpop.f32.mrf.mxu0
  %v550 = vadd.f32 0.0, %v549
  %v551 = vpop.f32.mrf.mxu0
  %v552 = vpop.f32.mrf.mxu0
  %v553 = vadd.f32 0.0, %v552
  %v554 = vpop.f32.mrf.mxu0
  %555 = vmatprep.mubr.bf16.mxu0 0
  %556 = vmatmul.mubr.bf16.gmra.mxu0 %v362
  %v557 = vpop.f32.mrf.mxu0
  %v558 = vadd.f32 0.0, %v557
  %v559 = vpop.f32.mrf.mxu0
  %v560 = vpop.f32.mrf.mxu0
  %v561 = vadd.f32 0.0, %v560
  %v562 = vpop.f32.mrf.mxu0
  %563 = vmatprep.mubr.bf16.mxu0 0
  %564 = vmatmul.mubr.bf16.gmra.mxu0 %v363
  %v565 = vpop.f32.mrf.mxu0
  %v566 = vadd.f32 0.0, %v565
  %v567 = vpop.f32.mrf.mxu0
  %v568 = vpop.f32.mrf.mxu0
  %v569 = vadd.f32 0.0, %v568
  %v570 = vpop.f32.mrf.mxu0
  %571 = vmatprep.mubr.bf16.mxu0 0
  %572 = vmatmul.mubr.bf16.gmra.mxu0 %v364
  %v573 = vpop.f32.mrf.mxu0
  %v574 = vadd.f32 0.0, %v573
  %v575 = vpop.f32.mrf.mxu0
  %v576 = vpop.f32.mrf.mxu0
  %v577 = vadd.f32 0.0, %v576
  %v578 = vpop.f32.mrf.mxu0
  %579 = vmatprep.mubr.bf16.mxu0 0
  %580 = vmatmul.mubr.bf16.gmra.mxu0 %v365
  %v581 = vpop.f32.mrf.mxu0
  %v582 = vadd.f32 0.0, %v581
  %v583 = vpop.f32.mrf.mxu0
  %v584 = vpop.f32.mrf.mxu0
  %v585 = vadd.f32 0.0, %v584
  %v586 = vpop.f32.mrf.mxu0
  %587 = vmatprep.mubr.bf16.mxu0 0
  %588 = vmatmul.mubr.bf16.gmra.mxu0 %v366
  %v589 = vpop.f32.mrf.mxu0
  %v590 = vadd.f32 0.0, %v589
  %v591 = vpop.f32.mrf.mxu0
  %v592 = vpop.f32.mrf.mxu0
  %v593 = vadd.f32 0.0, %v592
  %v594 = vpop.f32.mrf.mxu0
  %595 = vmatprep.mubr.bf16.mxu0 0
  %596 = vmatmul.mubr.bf16.gmra.mxu0 %v367
  %v597 = vpop.f32.mrf.mxu0
  %v598 = vadd.f32 0.0, %v597
  %v599 = vpop.f32.mrf.mxu0
  %v600 = vpop.f32.mrf.mxu0
  %v601 = vadd.f32 0.0, %v600
  %v602 = vpop.f32.mrf.mxu0
  %603 = vmatprep.mubr.bf16.mxu0 0
  %604 = vmatmul.mubr.bf16.gmra.mxu0 %v368
  %v605 = vpop.f32.mrf.mxu0
  %v606 = vadd.f32 0.0, %v605
  %v607 = vpop.f32.mrf.mxu0
  %v608 = vpop.f32.mrf.mxu0
  %v609 = vadd.f32 0.0, %v608
  %v610 = vpop.f32.mrf.mxu0
  %611 = vmatprep.mubr.bf16.mxu0 0
  %612 = vmatmul.mubr.bf16.gmra.mxu0 %v369
  %v613 = vpop.f32.mrf.mxu0
  %v614 = vadd.f32 0.0, %v613
  %v615 = vpop.f32.mrf.mxu0
  %v616 = vpop.f32.mrf.mxu0
  %v617 = vadd.f32 0.0, %v616
  %v618 = vpop.f32.mrf.mxu0
  %619 = vmatprep.mubr.bf16.mxu0 0
  %620 = vmatmul.mubr.bf16.gmra.mxu0 %v370
  %v621 = vpop.f32.mrf.mxu0
  %v622 = vadd.f32 0.0, %v621
  %v623 = vpop.f32.mrf.mxu0
  %v624 = vpop.f32.mrf.mxu0
  %v625 = vadd.f32 0.0, %v624
  %v626 = vpop.f32.mrf.mxu0
  %627 = vmatprep.mubr.bf16.mxu0 0
  %628 = vmatmul.mubr.bf16.gmra.mxu0 %v371
  %v629 = vpop.f32.mrf.mxu0
  %v630 = vadd.f32 0.0, %v629
  %v631 = vpop.f32.mrf.mxu0
  %v632 = vpop.f32.mrf.mxu0
  %v633 = vadd.f32 0.0, %v632
  %v634 = vpop.f32.mrf.mxu0
  %635 = vmatprep.mubr.bf16.mxu0 0
  %636 = vmatmul.mubr.bf16.gmra.mxu0 %v372
  %v637 = vpop.f32.mrf.mxu0
  %v638 = vadd.f32 0.0, %v637
  %v639 = vpop.f32.mrf.mxu0
  %v640 = vpop.f32.mrf.mxu0
  %v641 = vadd.f32 0.0, %v640
  %v642 = vpop.f32.mrf.mxu0
  %643 = vmatprep.mubr.bf16.mxu0 0
  %644 = vmatmul.mubr.bf16.gmra.mxu0 %v373
  %v645 = vpop.f32.mrf.mxu0
  %v646 = vadd.f32 0.0, %v645
  %v647 = vpop.f32.mrf.mxu0
  %v648 = vpop.f32.mrf.mxu0
  %v649 = vadd.f32 0.0, %v648
  %v650 = vpop.f32.mrf.mxu0
  %651 = vmatprep.mubr.bf16.mxu0 0
  %652 = vmatmul.mubr.bf16.gmra.mxu0 %v374
  %v653 = vpop.f32.mrf.mxu0
  %v654 = vadd.f32 0.0, %v653
  %v655 = vpop.f32.mrf.mxu0
  %v656 = vpop.f32.mrf.mxu0
  %v657 = vadd.f32 0.0, %v656
  %v658 = vpop.f32.mrf.mxu0
  %659 = vmatprep.mubr.bf16.mxu0 0
  %660 = vmatmul.mubr.bf16.gmra.mxu0 %v375
  %v661 = vpop.f32.mrf.mxu0
  %v662 = vadd.f32 0.0, %v661
  %v663 = vpop.f32.mrf.mxu0
  %v664 = vpop.f32.mrf.mxu0
  %v665 = vadd.f32 0.0, %v664
  %v666 = vpop.f32.mrf.mxu0
  %667 = vmatprep.mubr.bf16.mxu0 0
  %668 = vmatmul.mubr.bf16.gmra.mxu0 %v376
  %v669 = vpop.f32.mrf.mxu0
  %v670 = vadd.f32 0.0, %v669
  %v671 = vpop.f32.mrf.mxu0
  %v672 = vpop.f32.mrf.mxu0
  %v673 = vadd.f32 0.0, %v672
  %v674 = vpop.f32.mrf.mxu0
  %675 = vmatprep.mubr.bf16.mxu0 0
  %676 = vmatmul.mubr.bf16.gmra.mxu0 %v377
  %v677 = vpop.f32.mrf.mxu0
  %v678 = vadd.f32 0.0, %v677
  %v679 = vpop.f32.mrf.mxu0
  %v680 = vpop.f32.mrf.mxu0
  %v681 = vadd.f32 0.0, %v680
  %v682 = vpop.f32.mrf.mxu0
  %683 = vmatprep.mubr.bf16.mxu0 0
  %684 = vmatmul.mubr.bf16.gmra.mxu0 %v378
  %v685 = vpop.f32.mrf.mxu0
  %v686 = vadd.f32 0.0, %v685
  %v687 = vpop.f32.mrf.mxu0
  %v688 = vpop.f32.mrf.mxu0
  %v689 = vadd.f32 0.0, %v688
  %v690 = vpop.f32.mrf.mxu0
  %691 = vmatprep.mubr.bf16.mxu0 0
  %692 = vmatmul.mubr.bf16.gmra.mxu0 %v379
  %v693 = vpop.f32.mrf.mxu0
  %v694 = vadd.f32 0.0, %v693
  %v695 = vpop.f32.mrf.mxu0
  %v696 = vpop.f32.mrf.mxu0
  %v697 = vadd.f32 0.0, %v696
  %v698 = vpop.f32.mrf.mxu0
  %699 = vmatprep.mubr.bf16.mxu0 0
  %700 = vmatmul.mubr.bf16.gmra.mxu0 %v380
  %v701 = vpop.f32.mrf.mxu0
  %v702 = vadd.f32 0.0, %v701
  %v703 = vpop.f32.mrf.mxu0
  %v704 = vpop.f32.mrf.mxu0
  %v705 = vadd.f32 0.0, %v704
  %v706 = vpop.f32.mrf.mxu0
  %707 = vmatprep.mubr.bf16.mxu0 0
  %708 = vmatmul.mubr.bf16.gmra.mxu0 %v381
  %v709 = vpop.f32.mrf.mxu0
  %v710 = vadd.f32 0.0, %v709
  %v711 = vpop.f32.mrf.mxu0
  %v712 = vpop.f32.mrf.mxu0
  %v713 = vadd.f32 0.0, %v712
  %v714 = vpop.f32.mrf.mxu0
  %715 = vmatprep.mubr.bf16.mxu0 0
  %716 = vmatmul.mubr.bf16.gmra.mxu0 %v382
  %v717 = vpop.f32.mrf.mxu0
  %v718 = vadd.f32 0.0, %v717
  %v719 = vpop.f32.mrf.mxu0
  %v720 = vpop.f32.mrf.mxu0
  %v721 = vadd.f32 0.0, %v720
  %v722 = vpop.f32.mrf.mxu0
  %723 = vmatprep.mubr.bf16.mxu0 0
  %724 = vmatmul.mubr.bf16.gmra.mxu0 %v383
  %v725 = vpop.f32.mrf.mxu0
  %v726 = vadd.f32 0.0, %v725
  %v727 = vpop.f32.mrf.mxu0
  %v728 = vpop.f32.mrf.mxu0
  %v729 = vadd.f32 0.0, %v728
  %v730 = vpop.f32.mrf.mxu0
  %731 = vmatprep.mubr.bf16.mxu0 0
  %732 = vmatmul.mubr.bf16.gmra.mxu0 %v384
  %v733 = vpop.f32.mrf.mxu0
  %v734 = vadd.f32 0.0, %v733
  %v735 = vpop.f32.mrf.mxu0
  %v736 = vpop.f32.mrf.mxu0
  %v737 = vadd.f32 0.0, %v736
  %v738 = vpop.f32.mrf.mxu0
  %739 = vmatprep.mubr.bf16.mxu0 0
  %740 = vmatmul.mubr.bf16.gmra.mxu0 %v385
  %v741 = vpop.f32.mrf.mxu0
  %v742 = vadd.f32 0.0, %v741
  %v743 = vpop.f32.mrf.mxu0
  %v744 = vpop.f32.mrf.mxu0
  %v745 = vadd.f32 0.0, %v744
  %v746 = vpop.f32.mrf.mxu0
  %747 = vmatprep.mubr.bf16.mxu0 0
  %748 = vmatmul.mubr.bf16.gmra.mxu0 %v386
  %v749 = vpop.f32.mrf.mxu0
  %v750 = vadd.f32 0.0, %v749
  %v751 = vpop.f32.mrf.mxu0
  %v752 = vpop.f32.mrf.mxu0
  %v753 = vadd.f32 0.0, %v752
  %v754 = vpop.f32.mrf.mxu0
  %755 = vdwg.mxu0
  %v756 = vadd.f32 %v83, %v502
  %v757 = vadd.f32 %v84, %v505
  %v758 = vadd.f32 %v85, %v510
  %v759 = vadd.f32 %v86, %v513
  %v760 = vadd.f32 %v87, %v518
  %v761 = vadd.f32 %v88, %v521
  %v762 = vadd.f32 %v89, %v526
  %v763 = vadd.f32 %v90, %v529
  %v764 = vadd.f32 %v91, %v534
  %v765 = vadd.f32 %v92, %v537
  %v766 = vadd.f32 %v93, %v542
  %v767 = vadd.f32 %v94, %v545
  %v768 = vadd.f32 %v95, %v550
  %v769 = vadd.f32 %v96, %v553
  %v770 = vadd.f32 %v97, %v558
  %v771 = vadd.f32 %v98, %v561
  %v772 = vadd.f32 %v99, %v566
  %v773 = vadd.f32 %v100, %v569
  %v774 = vadd.f32 %v101, %v574
  %v775 = vadd.f32 %v102, %v577
  %v776 = vadd.f32 %v103, %v582
  %v777 = vadd.f32 %v104, %v585
  %v778 = vadd.f32 %v105, %v590
  %v779 = vadd.f32 %v106, %v593
  %v780 = vadd.f32 %v107, %v598
  %v781 = vadd.f32 %v108, %v601
  %v782 = vadd.f32 %v109, %v606
  %v783 = vadd.f32 %v110, %v609
  %v784 = vadd.f32 %v111, %v614
  %v785 = vadd.f32 %v112, %v617
  %v786 = vadd.f32 %v113, %v622
  %v787 = vadd.f32 %v114, %v625
  %v788 = vadd.f32 %v115, %v630
  %v789 = vadd.f32 %v116, %v633
  %v790 = vadd.f32 %v117, %v638
  %v791 = vadd.f32 %v118, %v641
  %v792 = vadd.f32 %v119, %v646
  %v793 = vadd.f32 %v120, %v649
  %v794 = vadd.f32 %v121, %v654
  %v795 = vadd.f32 %v122, %v657
  %v796 = vadd.f32 %v123, %v662
  %v797 = vadd.f32 %v124, %v665
  %v798 = vadd.f32 %v125, %v670
  %v799 = vadd.f32 %v126, %v673
  %v800 = vadd.f32 %v127, %v678
  %v801 = vadd.f32 %v128, %v681
  %v802 = vadd.f32 %v129, %v686
  %v803 = vadd.f32 %v130, %v689
  %v804 = vadd.f32 %v131, %v694
  %v805 = vadd.f32 %v132, %v697
  %v806 = vadd.f32 %v133, %v702
  %v807 = vadd.f32 %v134, %v705
  %v808 = vadd.f32 %v135, %v710
  %v809 = vadd.f32 %v136, %v713
  %v810 = vadd.f32 %v137, %v718
  %v811 = vadd.f32 %v138, %v721
  %v812 = vadd.f32 %v139, %v726
  %v813 = vadd.f32 %v140, %v729
  %v814 = vadd.f32 %v141, %v734
  %v815 = vadd.f32 %v142, %v737
  %v816 = vadd.f32 %v143, %v742
  %v817 = vadd.f32 %v144, %v745
  %v818 = vadd.f32 %v145, %v750
  %v819 = vadd.f32 %v146, %v753
  %820 = vst [vmem:[#allocation2] sm:$0xff] %v756
  %821 = vst [vmem:[#allocation2 + $0x8] sm:$0xff] %v757
  %822 = vst [vmem:[#allocation2 + $0x10] sm:$0xff] %v758
  %823 = vst [vmem:[#allocation2 + $0x18] sm:$0xff] %v759
  %824 = vst [vmem:[#allocation2 + $0x20] sm:$0xff] %v760
  %825 = vst [vmem:[#allocation2 + $0x28] sm:$0xff] %v761
  %826 = vst [vmem:[#allocation2 + $0x30] sm:$0xff] %v762
  %827 = vst [vmem:[#allocation2 + $0x38] sm:$0xff] %v763
  %828 = vst [vmem:[#allocation2 + $0x40] sm:$0xff] %v764
  %829 = vst [vmem:[#allocation2 + $0x48] sm:$0xff] %v765
  %830 = vst [vmem:[#allocation2 + $0x50] sm:$0xff] %v766
  %831 = vst [vmem:[#allocation2 + $0x58] sm:$0xff] %v767
  %832 = vst [vmem:[#allocation2 + $0x60] sm:$0xff] %v768
  %833 = vst [vmem:[#allocation2 + $0x68] sm:$0xff] %v769
  %834 = vst [vmem:[#allocation2 + $0x70] sm:$0xff] %v770
  %835 = vst [vmem:[#allocation2 + $0x78] sm:$0xff] %v771
  %836 = vst [vmem:[#allocation2 + $0x80] sm:$0xff] %v772
  %837 = vst [vmem:[#allocation2 + $0x88] sm:$0xff] %v773
  %838 = vst [vmem:[#allocation2 + $0x90] sm:$0xff] %v774
  %839 = vst [vmem:[#allocation2 + $0x98] sm:$0xff] %v775
  %840 = vst [vmem:[#allocation2 + $0xa0] sm:$0xff] %v776
  %841 = vst [vmem:[#allocation2 + $0xa8] sm:$0xff] %v777
  %842 = vst [vmem:[#allocation2 + $0xb0] sm:$0xff] %v778
  %843 = vst [vmem:[#allocation2 + $0xb8] sm:$0xff] %v779
  %844 = vst [vmem:[#allocation2 + $0xc0] sm:$0xff] %v780
  %845 = vst [vmem:[#allocation2 + $0xc8] sm:$0xff] %v781
  %846 = vst [vmem:[#allocation2 + $0xd0] sm:$0xff] %v782
  %847 = vst [vmem:[#allocation2 + $0xd8] sm:$0xff] %v783
  %848 = vst [vmem:[#allocation2 + $0xe0] sm:$0xff] %v784
  %849 = vst [vmem:[#allocation2 + $0xe8] sm:$0xff] %v785
  %850 = vst [vmem:[#allocation2 + $0xf0] sm:$0xff] %v786
  %851 = vst [vmem:[#allocation2 + $0xf8] sm:$0xff] %v787
  %852 = vst [vmem:[#allocation2 + $0x100] sm:$0xff] %v788
  %853 = vst [vmem:[#allocation2 + $0x108] sm:$0xff] %v789
  %854 = vst [vmem:[#allocation2 + $0x110] sm:$0xff] %v790
  %855 = vst [vmem:[#allocation2 + $0x118] sm:$0xff] %v791
  %856 = vst [vmem:[#allocation2 + $0x120] sm:$0xff] %v792
  %857 = vst [vmem:[#allocation2 + $0x128] sm:$0xff] %v793
  %858 = vst [vmem:[#allocation2 + $0x130] sm:$0xff] %v794
  %859 = vst [vmem:[#allocation2 + $0x138] sm:$0xff] %v795
  %860 = vst [vmem:[#allocation2 + $0x140] sm:$0xff] %v796
  %861 = vst [vmem:[#allocation2 + $0x148] sm:$0xff] %v797
  %862 = vst [vmem:[#allocation2 + $0x150] sm:$0xff] %v798
  %863 = vst [vmem:[#allocation2 + $0x158] sm:$0xff] %v799
  %864 = vst [vmem:[#allocation2 + $0x160] sm:$0xff] %v800
  %865 = vst [vmem:[#allocation2 + $0x168] sm:$0xff] %v801
  %866 = vst [vmem:[#allocation2 + $0x170] sm:$0xff] %v802
  %867 = vst [vmem:[#allocation2 + $0x178] sm:$0xff] %v803
  %868 = vst [vmem:[#allocation2 + $0x180] sm:$0xff] %v804
  %869 = vst [vmem:[#allocation2 + $0x188] sm:$0xff] %v805
  %870 = vst [vmem:[#allocation2 + $0x190] sm:$0xff] %v806
  %871 = vst [vmem:[#allocation2 + $0x198] sm:$0xff] %v807
  %872 = vst [vmem:[#allocation2 + $0x1a0] sm:$0xff] %v808
  %873 = vst [vmem:[#allocation2 + $0x1a8] sm:$0xff] %v809
  %874 = vst [vmem:[#allocation2 + $0x1b0] sm:$0xff] %v810
  %875 = vst [vmem:[#allocation2 + $0x1b8] sm:$0xff] %v811
  %876 = vst [vmem:[#allocation2 + $0x1c0] sm:$0xff] %v812
  %877 = vst [vmem:[#allocation2 + $0x1c8] sm:$0xff] %v813
  %878 = vst [vmem:[#allocation2 + $0x1d0] sm:$0xff] %v814
  %879 = vst [vmem:[#allocation2 + $0x1d8] sm:$0xff] %v815
  %880 = vst [vmem:[#allocation2 + $0x1e0] sm:$0xff] %v816
  %881 = vst [vmem:[#allocation2 + $0x1e8] sm:$0xff] %v817
  %882 = vst [vmem:[#allocation2 + $0x1f0] sm:$0xff] %v818
  %883 = vst [vmem:[#allocation2 + $0x1f8] sm:$0xff] %v819
  // Predicated region
  $region18: #{residual_block.4} parent=0 // pred_check
    %p884 = pneg %p15
  $region19: #{residual_block.4} parent=0 // pred_check_branch
    %886 = sbr.rel (%p884) target = $region21
  $region20: #{residual_block.4} parent=0 // pred_region
    %v887 = vld [vmem:[#allocation2] sm:$0xff]
    %v888 = vld [vmem:[#allocation2 + $0x8] sm:$0xff]
    %v889 = vld [vmem:[#allocation2 + $0x10] sm:$0xff]
    %v890 = vld [vmem:[#allocation2 + $0x18] sm:$0xff]
    %v891 = vld [vmem:[#allocation2 + $0x20] sm:$0xff]
    %v892 = vld [vmem:[#allocation2 + $0x28] sm:$0xff]
    %v893 = vld [vmem:[#allocation2 + $0x30] sm:$0xff]
    %v894 = vld [vmem:[#allocation2 + $0x38] sm:$0xff]
    %v895 = vld [vmem:[#allocation2 + $0x40] sm:$0xff]
    %v896 = vld [vmem:[#allocation2 + $0x48] sm:$0xff]
    %v897 = vld [vmem:[#allocation2 + $0x50] sm:$0xff]
    %v898 = vld [vmem:[#allocation2 + $0x58] sm:$0xff]
    %v899 = vld [vmem:[#allocation2 + $0x60] sm:$0xff]
    %v900 = vld [vmem:[#allocation2 + $0x68] sm:$0xff]
    %v901 = vld [vmem:[#allocation2 + $0x70] sm:$0xff]
    %v902 = vld [vmem:[#allocation2 + $0x78] sm:$0xff]
    %v903 = vld [vmem:[#allocation2 + $0x80] sm:$0xff]
    %v904 = vld [vmem:[#allocation2 + $0x88] sm:$0xff]
    %v905 = vld [vmem:[#allocation2 + $0x90] sm:$0xff]
    %v906 = vld [vmem:[#allocation2 + $0x98] sm:$0xff]
    %v907 = vld [vmem:[#allocation2 + $0xa0] sm:$0xff]
    %v908 = vld [vmem:[#allocation2 + $0xa8] sm:$0xff]
    %v909 = vld [vmem:[#allocation2 + $0xb0] sm:$0xff]
    %v910 = vld [vmem:[#allocation2 + $0xb8] sm:$0xff]
    %v911 = vld [vmem:[#allocation2 + $0xc0] sm:$0xff]
    %v912 = vld [vmem:[#allocation2 + $0xc8] sm:$0xff]
    %v913 = vld [vmem:[#allocation2 + $0xd0] sm:$0xff]
    %v914 = vld [vmem:[#allocation2 + $0xd8] sm:$0xff]
    %v915 = vld [vmem:[#allocation2 + $0xe0] sm:$0xff]
    %v916 = vld [vmem:[#allocation2 + $0xe8] sm:$0xff]
    %v917 = vld [vmem:[#allocation2 + $0xf0] sm:$0xff]
    %v918 = vld [vmem:[#allocation2 + $0xf8] sm:$0xff]
    %v919 = vld [vmem:[#allocation2 + $0x100] sm:$0xff]
    %v920 = vld [vmem:[#allocation2 + $0x108] sm:$0xff]
    %v921 = vld [vmem:[#allocation2 + $0x110] sm:$0xff]
    %v922 = vld [vmem:[#allocation2 + $0x118] sm:$0xff]
    %v923 = vld [vmem:[#allocation2 + $0x120] sm:$0xff]
    %v924 = vld [vmem:[#allocation2 + $0x128] sm:$0xff]
    %v925 = vld [vmem:[#allocation2 + $0x130] sm:$0xff]
    %v926 = vld [vmem:[#allocation2 + $0x138] sm:$0xff]
    %v927 = vld [vmem:[#allocation2 + $0x140] sm:$0xff]
    %v928 = vld [vmem:[#allocation2 + $0x148] sm:$0xff]
    %v929 = vld [vmem:[#allocation2 + $0x150] sm:$0xff]
    %v930 = vld [vmem:[#allocation2 + $0x158] sm:$0xff]
    %v931 = vld [vmem:[#allocation2 + $0x160] sm:$0xff]
    %v932 = vld [vmem:[#allocation2 + $0x168] sm:$0xff]
    %v933 = vld [vmem:[#allocation2 + $0x170] sm:$0xff]
    %v934 = vld [vmem:[#allocation2 + $0x178] sm:$0xff]
    %v935 = vld [vmem:[#allocation2 + $0x180] sm:$0xff]
    %v936 = vld [vmem:[#allocation2 + $0x188] sm:$0xff]
    %v937 = vld [vmem:[#allocation2 + $0x190] sm:$0xff]
    %v938 = vld [vmem:[#allocation2 + $0x198] sm:$0xff]
    %v939 = vld [vmem:[#allocation2 + $0x1a0] sm:$0xff]
    %v940 = vld [vmem:[#allocation2 + $0x1a8] sm:$0xff]
    %v941 = vld [vmem:[#allocation2 + $0x1b0] sm:$0xff]
    %v942 = vld [vmem:[#allocation2 + $0x1b8] sm:$0xff]
    %v943 = vld [vmem:[#allocation2 + $0x1c0] sm:$0xff]
    %v944 = vld [vmem:[#allocation2 + $0x1c8] sm:$0xff]
    %v945 = vld [vmem:[#allocation2 + $0x1d0] sm:$0xff]
    %v946 = vld [vmem:[#allocation2 + $0x1d8] sm:$0xff]
    %v947 = vld [vmem:[#allocation2 + $0x1e0] sm:$0xff]
    %v948 = vld [vmem:[#allocation2 + $0x1e8] sm:$0xff]
    %v949 = vld [vmem:[#allocation2 + $0x1f0] sm:$0xff]
    %v950 = vld [vmem:[#allocation2 + $0x1f8] sm:$0xff]
    %v951 = vld [vmem:[%s2] sm:$0x1]
    %v953 = vlaneseq
    %v954 = vshrl.u32 %v953, 7
    %v955 = vsub.s32 0, %v954
    %v956 = vrot.slane %v951, %v955
    %v958 = vadd.f32 %v887, %v956
    %v959 = vadd.f32 %v888, %v956
    %v960 = vadd.f32 %v889, %v956
    %v961 = vadd.f32 %v890, %v956
    %v962 = vadd.f32 %v891, %v956
    %v963 = vadd.f32 %v892, %v956
    %v964 = vadd.f32 %v893, %v956
    %v965 = vadd.f32 %v894, %v956
    %v966 = vadd.f32 %v895, %v956
    %v967 = vadd.f32 %v896, %v956
    %v968 = vadd.f32 %v897, %v956
    %v969 = vadd.f32 %v898, %v956
    %v970 = vadd.f32 %v899, %v956
    %v971 = vadd.f32 %v900, %v956
    %v972 = vadd.f32 %v901, %v956
    %v973 = vadd.f32 %v902, %v956
    %v974 = vadd.f32 %v903, %v956
    %v975 = vadd.f32 %v904, %v956
    %v976 = vadd.f32 %v905, %v956
    %v977 = vadd.f32 %v906, %v956
    %v978 = vadd.f32 %v907, %v956
    %v979 = vadd.f32 %v908, %v956
    %v980 = vadd.f32 %v909, %v956
    %v981 = vadd.f32 %v910, %v956
    %v982 = vadd.f32 %v911, %v956
    %v983 = vadd.f32 %v912, %v956
    %v984 = vadd.f32 %v913, %v956
    %v985 = vadd.f32 %v914, %v956
    %v986 = vadd.f32 %v915, %v956
    %v987 = vadd.f32 %v916, %v956
    %v988 = vadd.f32 %v917, %v956
    %v989 = vadd.f32 %v918, %v956
    %v990 = vadd.f32 %v919, %v956
    %v991 = vadd.f32 %v920, %v956
    %v992 = vadd.f32 %v921, %v956
    %v993 = vadd.f32 %v922, %v956
    %v994 = vadd.f32 %v923, %v956
    %v995 = vadd.f32 %v924, %v956
    %v996 = vadd.f32 %v925, %v956
    %v997 = vadd.f32 %v926, %v956
    %v998 = vadd.f32 %v927, %v956
    %v999 = vadd.f32 %v928, %v956
    %v1000 = vadd.f32 %v929, %v956
    %v1001 = vadd.f32 %v930, %v956
    %v1002 = vadd.f32 %v931, %v956
    %v1003 = vadd.f32 %v932, %v956
    %v1004 = vadd.f32 %v933, %v956
    %v1005 = vadd.f32 %v934, %v956
    %v1006 = vadd.f32 %v935, %v956
    %v1007 = vadd.f32 %v936, %v956
    %v1008 = vadd.f32 %v937, %v956
    %v1009 = vadd.f32 %v938, %v956
    %v1010 = vadd.f32 %v939, %v956
    %v1011 = vadd.f32 %v940, %v956
    %v1012 = vadd.f32 %v941, %v956
    %v1013 = vadd.f32 %v942, %v956
    %v1014 = vadd.f32 %v943, %v956
    %v1015 = vadd.f32 %v944, %v956
    %v1016 = vadd.f32 %v945, %v956
    %v1017 = vadd.f32 %v946, %v956
    %v1018 = vadd.f32 %v947, %v956
    %v1019 = vadd.f32 %v948, %v956
    %v1020 = vadd.f32 %v949, %v956
    %v1021 = vadd.f32 %v950, %v956
    %1022 = vst [vmem:[%s3] sm:$0xff] %v958
    %1023 = vst [vmem:[%s3 + $0x8] sm:$0xff] %v959
    %1024 = vst [vmem:[%s3 + $0x10] sm:$0xff] %v960
    %1025 = vst [vmem:[%s3 + $0x18] sm:$0xff] %v961
    %1026 = vst [vmem:[%s3 + $0x20] sm:$0xff] %v962
    %1027 = vst [vmem:[%s3 + $0x28] sm:$0xff] %v963
    %1028 = vst [vmem:[%s3 + $0x30] sm:$0xff] %v964
    %1029 = vst [vmem:[%s3 + $0x38] sm:$0xff] %v965
    %1030 = vst [vmem:[%s3 + $0x40] sm:$0xff] %v966
    %1031 = vst [vmem:[%s3 + $0x48] sm:$0xff] %v967
    %1032 = vst [vmem:[%s3 + $0x50] sm:$0xff] %v968
    %1033 = vst [vmem:[%s3 + $0x58] sm:$0xff] %v969
    %1034 = vst [vmem:[%s3 + $0x60] sm:$0xff] %v970
    %1035 = vst [vmem:[%s3 + $0x68] sm:$0xff] %v971
    %1036 = vst [vmem:[%s3 + $0x70] sm:$0xff] %v972
    %1037 = vst [vmem:[%s3 + $0x78] sm:$0xff] %v973
    %1038 = vst [vmem:[%s3 + $0x80] sm:$0xff] %v974
    %1039 = vst [vmem:[%s3 + $0x88] sm:$0xff] %v975
    %1040 = vst [vmem:[%s3 + $0x90] sm:$0xff] %v976
    %1041 = vst [vmem:[%s3 + $0x98] sm:$0xff] %v977
    %1042 = vst [vmem:[%s3 + $0xa0] sm:$0xff] %v978
    %1043 = vst [vmem:[%s3 + $0xa8] sm:$0xff] %v979
    %1044 = vst [vmem:[%s3 + $0xb0] sm:$0xff] %v980
    %1045 = vst [vmem:[%s3 + $0xb8] sm:$0xff] %v981
    %1046 = vst [vmem:[%s3 + $0xc0] sm:$0xff] %v982
    %1047 = vst [vmem:[%s3 + $0xc8] sm:$0xff] %v983
    %1048 = vst [vmem:[%s3 + $0xd0] sm:$0xff] %v984
    %1049 = vst [vmem:[%s3 + $0xd8] sm:$0xff] %v985
    %1050 = vst [vmem:[%s3 + $0xe0] sm:$0xff] %v986
    %1051 = vst [vmem:[%s3 + $0xe8] sm:$0xff] %v987
    %1052 = vst [vmem:[%s3 + $0xf0] sm:$0xff] %v988
    %1053 = vst [vmem:[%s3 + $0xf8] sm:$0xff] %v989
    %1054 = vst [vmem:[%s3 + $0x100] sm:$0xff] %v990
    %1055 = vst [vmem:[%s3 + $0x108] sm:$0xff] %v991
    %1056 = vst [vmem:[%s3 + $0x110] sm:$0xff] %v992
    %1057 = vst [vmem:[%s3 + $0x118] sm:$0xff] %v993
    %1058 = vst [vmem:[%s3 + $0x120] sm:$0xff] %v994
    %1059 = vst [vmem:[%s3 + $0x128] sm:$0xff] %v995
    %1060 = vst [vmem:[%s3 + $0x130] sm:$0xff] %v996
    %1061 = vst [vmem:[%s3 + $0x138] sm:$0xff] %v997
    %1062 = vst [vmem:[%s3 + $0x140] sm:$0xff] %v998
    %1063 = vst [vmem:[%s3 + $0x148] sm:$0xff] %v999
    %1064 = vst [vmem:[%s3 + $0x150] sm:$0xff] %v1000
    %1065 = vst [vmem:[%s3 + $0x158] sm:$0xff] %v1001
    %1066 = vst [vmem:[%s3 + $0x160] sm:$0xff] %v1002
    %1067 = vst [vmem:[%s3 + $0x168] sm:$0xff] %v1003
    %1068 = vst [vmem:[%s3 + $0x170] sm:$0xff] %v1004
    %1069 = vst [vmem:[%s3 + $0x178] sm:$0xff] %v1005
    %1070 = vst [vmem:[%s3 + $0x180] sm:$0xff] %v1006
    %1071 = vst [vmem:[%s3 + $0x188] sm:$0xff] %v1007
    %1072 = vst [vmem:[%s3 + $0x190] sm:$0xff] %v1008
    %1073 = vst [vmem:[%s3 + $0x198] sm:$0xff] %v1009
    %1074 = vst [vmem:[%s3 + $0x1a0] sm:$0xff] %v1010
    %1075 = vst [vmem:[%s3 + $0x1a8] sm:$0xff] %v1011
    %1076 = vst [vmem:[%s3 + $0x1b0] sm:$0xff] %v1012
    %1077 = vst [vmem:[%s3 + $0x1b8] sm:$0xff] %v1013
    %1078 = vst [vmem:[%s3 + $0x1c0] sm:$0xff] %v1014
    %1079 = vst [vmem:[%s3 + $0x1c8] sm:$0xff] %v1015
    %1080 = vst [vmem:[%s3 + $0x1d0] sm:$0xff] %v1016
    %1081 = vst [vmem:[%s3 + $0x1d8] sm:$0xff] %v1017
    %1082 = vst [vmem:[%s3 + $0x1e0] sm:$0xff] %v1018
    %1083 = vst [vmem:[%s3 + $0x1e8] sm:$0xff] %v1019
    %1084 = vst [vmem:[%s3 + $0x1f0] sm:$0xff] %v1020
    %1085 = vst [vmem:[%s3 + $0x1f8] sm:$0xff] %v1021
  $region21: #{residual_block.4} parent=0 // pred_fallthru
    _
  // Predicated region
  $region22: #{residual_block.4} parent=0 // pred_check
    _
  $region23: #{residual_block.4} parent=0 // pred_check_branch
    %1087 = sbr.rel (0) target = $region25
  $region24: #{residual_block.4} parent=0 // pred_region
    _
  $region25: #{residual_block.4} parent=0 // pred_fallthru
    _
  // Predicated region
  $region26: #{residual_block.4} parent=0 // pred_check
    _
  $region27: #{residual_block.4} parent=0 // pred_check_branch
    %1089 = sbr.rel (0) target = $region29
  $region28: #{residual_block.4} parent=0 // pred_region
    _
  $region29: #{residual_block.4} parent=0 // pred_fallthru
    _

// kernel: residual_block.5
$region0: #{residual_block.5}
  #allocation0 [shape = 'u32[]', space=smem, size = 0x4, offset = 0x4, fixed_abs, tag = 'smem constant byte address 0x4 - core index']
  #allocation1 [shape = 'u32[144,128]{1,0:T(1,128)}', space=vmem, size = 0x12000, scoped, tag = 'internal scratch']
  #allocation2 [shape = 'f32[256,128]{1,0:T(8,128)}', space=vmem, size = 0x20000, scoped, tag = 'scratch operand']
  %s0 = inlined_call_operand.vmem [shape: bf16[2,256,384], index: 0, kind: input, shape index: {}]
  %s1 = inlined_call_operand.vmem [shape: bf16[384,128], index: 1, kind: input, shape index: {}]
  %s2 = inlined_call_operand.vmem [shape: f32[1,128], index: 2, kind: input, shape index: {}]
  %s3 = inlined_call_operand.vmem [shape: f32[2,256,128], index: 3, kind: input, shape index: {}]
  %s4 = inlined_call_operand.vmem [shape: f32[2,1,128], index: 4, kind: input, shape index: {}]
  %s5 = inlined_call_operand.hbm [shape: f32[2,256,128], index: 5, kind: output, shape index: {}]
  %s6 = sld [smem:[#allocation0]]
  $region102: #{residual_block.5} parent=0
    _
  %s8 = ssub.s32 1, %s6
  %s9 = scalar_select 0, %s8, %s6
  $region1: #{residual_block.5} parent=0
    #allocation3 [shape = 'u8[131072]{0}', space=vmem, size = 0x20000, scoped, tag = 'input window, operand 0']
    #allocation4 [shape = 'u8[262144]{0}', space=vmem, size = 0x40000, scoped, tag = 'output window, operand 0']
    #allocation5 [shape = 's32[2]{0}', space=sflag, size = 0x8, scoped, tag = 'scoped memory for residual_block.5']
    %10 = vsyncpa [#allocation5], 0
    %s11 = scalar_lea.sflag [#allocation5], 1
    %12 = vsyncpa %s11, 0
    loop: start=0, step=1, limit=8
    $region2: #{residual_block.5} parent=1 // loop_pre_header
      _
    $region3: #{residual_block.5} parent=1 // loop_header
      %s14 = sphi 0, %s18
      %p15 = scmp.ge.s32.totalorder %s14, 8
      %s21 = sphi 0, %s40
      %s22 = sphi 0, %s36
      %s23 = sphi 0, %s32
      %s24 = sphi 0, %s21
      %s25 = sphi 0, %s22
      %s26 = sphi 0, %s23
      %s27 = sphi 0, %s24
      %s28 = sphi 0, %s25
      %s29 = sphi 0, %s26
      %s47 = sphi 0, %s49
      %s50 = sphi 0, %s47
      %s51 = sphi 0, %s50
      %s67 = sphi 0, %s51
      %s73 = sphi 0, %s75
      %s76 = sphi 0, %s73
      %s77 = sphi 0, %s76
      %s93 = sphi 0, %s77
      %s97 = sphi 0, %s97
      %s99 = sphi 0, %s97
      %s100 = sphi 0, %s99
      %s114 = sphi 0, %s100
      %s122 = sphi 0, %s124
      %s125 = sphi 0, %s122
      %s126 = sphi 0, %s125
      %s142 = sphi 0, %s126
      %s148 = sphi 0, %s150
      %s151 = sphi 0, %s148
      %s152 = sphi 0, %s151
      %s168 = sphi 0, %s152
      %s176 = sphi 0, %s178
      %s179 = sphi 0, %s176
      %s180 = sphi 0, %s179
      %s196 = sphi 0, %s180
    $region4: #{residual_block.5} parent=1 // loop_header_branch
      %17 = sbr.rel (%p15) target = $region8
    $region5: #{residual_block.5} parent=1 // loop_body
      %s19 = ssub.s32 %s14, 1
      %s20 = ssub.s32 %s14, 2
      %s30 = sadd.s32 1, %s23
      %p31 = scmp.ge.s32.totalorder %s30, 3
      %s32 = scalar_select %p31, 0, %s30
      %s33 = sadd.s32 1, %s22
      %s34 = scalar_select %p31, %s33, %s22
      %p35 = scmp.ge.s32.totalorder %s34, 1
      %s36 = scalar_select %p35, 0, %s34
      %s37 = sadd.s32 1, %s21
      %s38 = scalar_select %p35, %s37, %s21
      %p39 = scmp.ge.s32.totalorder %s38, 2
      %s40 = scalar_select %p39, 0, %s38
      %s41 = ssub.s32 %s21, %s40
      %s42 = ssub.s32 %s22, %s36
      %s43 = sor.u32 %s41, %s42
      %s44 = ssub.s32 %s23, %s32
      %s45 = sor.u32 %s43, %s44
      %p46 = scmp.eq.s32.totalorder %s45, 0
      %s48 = sadd.s32 %s47, 1
      %s49 = scalar_select %p46, %s47, %s48
      %p52 = pneg %p46
      %p53 = scmp.eq.s32.totalorder %s14, 5
      %p54 = por %p52, %p53
      %p55 = scmp.ne.s32.totalorder %s47, %s50
      %p56 = scmp.eq.s32.totalorder %s14, 0
      %p57 = por %p55, %p56
      %p58 = scmp.ne.s32.totalorder %s47, %s50
      %p59 = scmp.eq.s32.totalorder %s19, 5
      %p60 = por %p58, %p59
      %p61 = scmp.ne.s32.totalorder %s50, %s51
      %p62 = scmp.eq.s32.totalorder %s19, 0
      %p63 = por %p61, %p62
      %p64 = scmp.ne.s32.totalorder %s50, %s51
      %p65 = scmp.eq.s32.totalorder %s20, 5
      %p66 = por %p64, %p65
      %p68 = scmp.ne.s32.totalorder %s51, %s67
      %p69 = scmp.eq.s32.totalorder %s20, 0
      %p70 = por %p68, %p69
      %s71 = ssub.s32 %s23, %s32
      %p72 = scmp.eq.s32.totalorder %s71, 0
      %s74 = sadd.s32 %s73, 1
      %s75 = scalar_select %p72, %s73, %s74
      %p78 = pneg %p72
      %p79 = scmp.eq.s32.totalorder %s14, 5
      %p80 = por %p78, %p79
      %p81 = scmp.ne.s32.totalorder %s73, %s76
      %p82 = scmp.eq.s32.totalorder %s14, 0
      %p83 = por %p81, %p82
      %p84 = scmp.ne.s32.totalorder %s73, %s76
      %p85 = scmp.eq.s32.totalorder %s19, 5
      %p86 = por %p84, %p85
      %p87 = scmp.ne.s32.totalorder %s76, %s77
      %p88 = scmp.eq.s32.totalorder %s19, 0
      %p89 = por %p87, %p88
      %p90 = scmp.ne.s32.totalorder %s76, %s77
      %p91 = scmp.eq.s32.totalorder %s20, 5
      %p92 = por %p90, %p91
      %p94 = scmp.ne.s32.totalorder %s77, %s93
      %p95 = scmp.eq.s32.totalorder %s20, 0
      %p96 = por %p94, %p95
      %s98 = sadd.s32 %s97, 1
      %p101 = scmp.eq.s32.totalorder %s14, 5
      %p102 = scmp.ne.s32.totalorder %s97, %s99
      %p103 = scmp.eq.s32.totalorder %s14, 0
      %p104 = por %p102, %p103
      %p105 = scmp.ne.s32.totalorder %s97, %s99
      %p106 = scmp.eq.s32.totalorder %s19, 5
      %p107 = por %p105, %p106
      %p108 = scmp.ne.s32.totalorder %s99, %s100
      %p109 = scmp.eq.s32.totalorder %s19, 0
      %p110 = por %p108, %p109
      %p111 = scmp.ne.s32.totalorder %s99, %s100
      %p112 = scmp.eq.s32.totalorder %s20, 5
      %p113 = por %p111, %p112
      %p115 = scmp.ne.s32.totalorder %s100, %s114
      %p116 = scmp.eq.s32.totalorder %s20, 0
      %p117 = por %p115, %p116
      %s118 = ssub.s32 %s21, %s40
      %s119 = ssub.s32 %s22, %s36
      %s120 = sor.u32 %s118, %s119
      %p121 = scmp.eq.s32.totalorder %s120, 0
      %s123 = sadd.s32 %s122, 1
      %s124 = scalar_select %p121, %s122, %s123
      %p127 = pneg %p121
      %p128 = scmp.eq.s32.totalorder %s14, 5
      %p129 = por %p127, %p128
      %p130 = scmp.ne.s32.totalorder %s122, %s125
      %p131 = scmp.eq.s32.totalorder %s14, 0
      %p132 = por %p130, %p131
      %p133 = scmp.ne.s32.totalorder %s122, %s125
      %p134 = scmp.eq.s32.totalorder %s19, 5
      %p135 = por %p133, %p134
      %p136 = scmp.ne.s32.totalorder %s125, %s126
      %p137 = scmp.eq.s32.totalorder %s19, 0
      %p138 = por %p136, %p137
      %p139 = scmp.ne.s32.totalorder %s125, %s126
      %p140 = scmp.eq.s32.totalorder %s20, 5
      %p141 = por %p139, %p140
      %p143 = scmp.ne.s32.totalorder %s126, %s142
      %p144 = scmp.eq.s32.totalorder %s20, 0
      %p145 = por %p143, %p144
      %s146 = ssub.s32 %s21, %s40
      %p147 = scmp.eq.s32.totalorder %s146, 0
      %s149 = sadd.s32 %s148, 1
      %s150 = scalar_select %p147, %s148, %s149
      %p153 = pneg %p147
      %p154 = scmp.eq.s32.totalorder %s14, 5
      %p155 = por %p153, %p154
      %p156 = scmp.ne.s32.totalorder %s148, %s151
      %p157 = scmp.eq.s32.totalorder %s14, 0
      %p158 = por %p156, %p157
      %p159 = scmp.ne.s32.totalorder %s148, %s151
      %p160 = scmp.eq.s32.totalorder %s19, 5
      %p161 = por %p159, %p160
      %p162 = scmp.ne.s32.totalorder %s151, %s152
      %p163 = scmp.eq.s32.totalorder %s19, 0
      %p164 = por %p162, %p163
      %p165 = scmp.ne.s32.totalorder %s151, %s152
      %p166 = scmp.eq.s32.totalorder %s20, 5
      %p167 = por %p165, %p166
      %p169 = scmp.ne.s32.totalorder %s152, %s168
      %p170 = scmp.eq.s32.totalorder %s20, 0
      %p171 = por %p169, %p170
      %s172 = ssub.s32 %s21, %s40
      %s173 = ssub.s32 %s22, %s36
      %s174 = sor.u32 %s172, %s173
      %p175 = scmp.eq.s32.totalorder %s174, 0
      %s177 = sadd.s32 %s176, 1
      %s178 = scalar_select %p175, %s176, %s177
      %p181 = pneg %p175
      %p182 = scmp.eq.s32.totalorder %s14, 5
      %p183 = por %p181, %p182
      %p184 = scmp.ne.s32.totalorder %s176, %s179
      %p185 = scmp.eq.s32.totalorder %s14, 0
      %p186 = por %p184, %p185
      %p187 = scmp.ne.s32.totalorder %s176, %s179
      %p188 = scmp.eq.s32.totalorder %s19, 5
      %p189 = por %p187, %p188
      %p190 = scmp.ne.s32.totalorder %s179, %s180
      %p191 = scmp.eq.s32.totalorder %s19, 0
      %p192 = por %p190, %p191
      %p193 = scmp.ne.s32.totalorder %s179, %s180
      %p194 = scmp.eq.s32.totalorder %s20, 5
      %p195 = por %p193, %p194
      %p197 = scmp.ne.s32.totalorder %s180, %s196
      %p198 = scmp.eq.s32.totalorder %s20, 0
      %p199 = por %p197, %p198
      %p200 = scmp.le.s32.totalorder 1, %s14
      %p201 = scmp.lt.s32.totalorder %s14, 7
      %p202 = pnand %p200, %p201
      %p203 = pneg %p202
      // Predicated region
      $region9: #{residual_block.5} parent=5 // pred_check
        _
      $region10: #{residual_block.5} parent=5 // pred_check_branch
        %205 = sbr.rel (%p202) target = $region12
      $region11: #{residual_block.5} parent=5 // pred_region
        %s206 = ssub.s32 %s14, 1
        // Predicated region
        $region13: #{residual_block.5} parent=11 // pred_check
          %p207 = pneg %p110
        $region14: #{residual_block.5} parent=11 // pred_check_branch
          %209 = sbr.rel (%p207) target = $region16
        $region15: #{residual_block.5} parent=11 // pred_region
          _
        $region16: #{residual_block.5} parent=11 // pred_fallthru
          _
      $region12: #{residual_block.5} parent=5 // pred_fallthru
        _
      %p210 = scmp.lt.s32.totalorder %s14, 6
      // Predicated region
      $region17: #{residual_block.5} parent=5 // pred_check
        %p211 = pneg %p210
      $region18: #{residual_block.5} parent=5 // pred_check_branch
        %213 = sbr.rel (%p211) target = $region20
      $region19: #{residual_block.5} parent=5 // pred_region
        // Predicated region
        $region21: #{residual_block.5} parent=19 // pred_check
          %p214 = pneg %p57
        $region22: #{residual_block.5} parent=19 // pred_check_branch
          %216 = sbr.rel (%p214) target = $region24
        $region23: #{residual_block.5} parent=19 // pred_region
          %s217 = sand.u32 %s47, 1
          %s218 = sand.u32 %s47, 1
          %s219 = smul.addr %s218, 128
          %s220 = scalar_lea.vmem [#allocation3], %s219
          %s221 = smul.u32 32, %s22
          %s222 = smul.addr %s221, 3
          %s223 = sadd.s32 %s23, %s222
          %s224 = smul.addr %s21, 96
          %s225 = sadd.s32 %s223, %s224
          %s226 = smul.addr %s225, 4
          %s227 = scalar_lea.vmem %s0, %s226
          // Predicated region
          $region25: #{residual_block.5} parent=23 // pred_check
            _
          $region26: #{residual_block.5} parent=23 // pred_check_branch
            %229 = sbr.rel (0) target = $region28
          $region27: #{residual_block.5} parent=23 // pred_region
            // Predicated region
            $region29: #{residual_block.5} parent=27 // pred_check
              _
            $region30: #{residual_block.5} parent=27 // pred_check_branch
              %231 = sbr.rel target = $region32
            $region31: #{residual_block.5} parent=27 // pred_region
              // Predicated region
              $region44: #{residual_block.5} parent=31 // pred_check
                _
              $region45: #{residual_block.5} parent=31 // pred_check_branch
                %309 = sbr.rel (0) target = $region47
              $region46: #{residual_block.5} parent=31 // pred_region
                loop: start=0, step=1, limit=1
                $region48: #{residual_block.5} parent=46 // loop_pre_header
                  _
                $region49: #{residual_block.5} parent=46 // loop_header
                  %s311 = sphi 0, %s315
                  %p312 = scmp.ge.s32.totalorder %s311, 1
                  %s316 = sphi %s227, %s227
                  %s317 = sphi %s220, %s220
                $region50: #{residual_block.5} parent=46 // loop_header_branch
                  %314 = sbr.rel (%p312) target = $region54
                $region51: #{residual_block.5} parent=46 // loop_body
                  _
                $region52: #{residual_block.5} parent=46 // loop_footer
                  %s315 = sadd.s32 1, %s311
                $region53: #{residual_block.5} parent=46 // loop_footer_branch
                  %310 = sbr.rel target = $region49
                $region54: #{residual_block.5} parent=46 // loop_exit
                  _
                %s319 = ssub.s32 16, 1
                loop: start=0, step=1, limit=1
                $region55: #{residual_block.5} parent=46 // loop_pre_header
                  _
                $region56: #{residual_block.5} parent=46 // loop_header
                  %s321 = sphi 0, %s325
                  %p322 = scmp.ge.s32.totalorder %s321, 1
                  %s326 = sphi %s227, %s227
                  %s327 = sphi %s220, %s220
                $region57: #{residual_block.5} parent=46 // loop_header_branch
                  %324 = sbr.rel (%p322) target = $region61
                $region58: #{residual_block.5} parent=46 // loop_body
                  %v328 = vld [vmem:[%s326] sm:%s319]
                  %329 = vst [vmem:[%s327] sm:%s319] %v328
                  %v330 = vld [vmem:[%s326 + $0xc] sm:%s319]
                  %331 = vst [vmem:[%s327 + $0x4] sm:%s319] %v330
                  %v332 = vld [vmem:[%s326 + $0x18] sm:%s319]
                  %333 = vst [vmem:[%s327 + $0x8] sm:%s319] %v332
                  %v334 = vld [vmem:[%s326 + $0x24] sm:%s319]
                  %335 = vst [vmem:[%s327 + $0xc] sm:%s319] %v334
                  %v336 = vld [vmem:[%s326 + $0x30] sm:%s319]
                  %337 = vst [vmem:[%s327 + $0x10] sm:%s319] %v336
                  %v338 = vld [vmem:[%s326 + $0x3c] sm:%s319]
                  %339 = vst [vmem:[%s327 + $0x14] sm:%s319] %v338
                  %v340 = vld [vmem:[%s326 + $0x48] sm:%s319]
                  %341 = vst [vmem:[%s327 + $0x18] sm:%s319] %v340
                  %v342 = vld [vmem:[%s326 + $0x54] sm:%s319]
                  %343 = vst [vmem:[%s327 + $0x1c] sm:%s319] %v342
                  %v344 = vld [vmem:[%s326 + $0x60] sm:%s319]
                  %345 = vst [vmem:[%s327 + $0x20] sm:%s319] %v344
                  %v346 = vld [vmem:[%s326 + $0x6c] sm:%s319]
                  %347 = vst [vmem:[%s327 + $0x24] sm:%s319] %v346
                  %v348 = vld [vmem:[%s326 + $0x78] sm:%s319]
                  %349 = vst [vmem:[%s327 + $0x28] sm:%s319] %v348
                  %v350 = vld [vmem:[%s326 + $0x84] sm:%s319]
                  %351 = vst [vmem:[%s327 + $0x2c] sm:%s319] %v350
                  %v352 = vld [vmem:[%s326 + $0x90] sm:%s319]
                  %353 = vst [vmem:[%s327 + $0x30] sm:%s319] %v352
                  %v354 = vld [vmem:[%s326 + $0x9c] sm:%s319]
                  %355 = vst [vmem:[%s327 + $0x34] sm:%s319] %v354
                  %v356 = vld [vmem:[%s326 + $0xa8] sm:%s319]
                  %357 = vst [vmem:[%s327 + $0x38] sm:%s319] %v356
                  %v358 = vld [vmem:[%s326 + $0xb4] sm:%s319]
                  %359 = vst [vmem:[%s327 + $0x3c] sm:%s319] %v358
                  %v360 = vld [vmem:[%s326 + $0xc0] sm:%s319]
                  %361 = vst [vmem:[%s327 + $0x40] sm:%s319] %v360
                  %v362 = vld [vmem:[%s326 + $0xcc] sm:%s319]
                  %363 = vst [vmem:[%s327 + $0x44] sm:%s319] %v362
                  %v364 = vld [vmem:[%s326 + $0xd8] sm:%s319]
                  %365 = vst [vmem:[%s327 + $0x48] sm:%s319] %v364
                  %v366 = vld [vmem:[%s326 + $0xe4] sm:%s319]
                  %367 = vst [vmem:[%s327 + $0x4c] sm:%s319] %v366
                  %v368 = vld [vmem:[%s326 + $0xf0] sm:%s319]
                  %369 = vst [vmem:[%s327 + $0x50] sm:%s319] %v368
                  %v370 = vld [vmem:[%s326 + $0xfc] sm:%s319]
                  %371 = vst [vmem:[%s327 + $0x54] sm:%s319] %v370
                  %v372 = vld [vmem:[%s326 + $0x108] sm:%s319]
                  %373 = vst [vmem:[%s327 + $0x58] sm:%s319] %v372
                  %v374 = vld [vmem:[%s326 + $0x114] sm:%s319]
                  %375 = vst [vmem:[%s327 + $0x5c] sm:%s319] %v374
                  %v376 = vld [vmem:[%s326 + $0x120] sm:%s319]
                  %377 = vst [vmem:[%s327 + $0x60] sm:%s319] %v376
                  %v378 = vld [vmem:[%s326 + $0x12c] sm:%s319]
                  %379 = vst [vmem:[%s327 + $0x64] sm:%s319] %v378
                  %v380 = vld [vmem:[%s326 + $0x138] sm:%s319]
                  %381 = vst [vmem:[%s327 + $0x68] sm:%s319] %v380
                  %v382 = vld [vmem:[%s326 + $0x144] sm:%s319]
                  %383 = vst [vmem:[%s327 + $0x6c] sm:%s319] %v382
                  %v384 = vld [vmem:[%s326 + $0x150] sm:%s319]
                  %385 = vst [vmem:[%s327 + $0x70] sm:%s319] %v384
                  %v386 = vld [vmem:[%s326 + $0x15c] sm:%s319]
                  %387 = vst [vmem:[%s327 + $0x74] sm:%s319] %v386
                  %v388 = vld [vmem:[%s326 + $0x168] sm:%s319]
                  %389 = vst [vmem:[%s327 + $0x78] sm:%s319] %v388
                  %v390 = vld [vmem:[%s326 + $0x174] sm:%s319]
                  %391 = vst [vmem:[%s327 + $0x7c] sm:%s319] %v390
                $region59: #{residual_block.5} parent=46 // loop_footer
                  %s325 = sadd.s32 1, %s321
                $region60: #{residual_block.5} parent=46 // loop_footer_branch
                  %320 = sbr.rel target = $region56
                $region61: #{residual_block.5} parent=46 // loop_exit
                  _
              $region47: #{residual_block.5} parent=31 // pred_fallthru
                _
            $region32: #{residual_block.5} parent=27 // pred_fallthru
              _
            // Predicated region
            $region33: #{residual_block.5} parent=27 // pred_check
              _
            $region34: #{residual_block.5} parent=27 // pred_check_branch
              %233 = sbr.rel (0) target = $region36
            $region35: #{residual_block.5} parent=27 // pred_region
              %s235 = ssub.s32 16, 1
              loop: start=0, step=1, limit=1
              $region37: #{residual_block.5} parent=35 // loop_pre_header
                _
              $region38: #{residual_block.5} parent=35 // loop_header
                %s237 = sphi 0, %s241
                %p238 = scmp.ge.s32.totalorder %s237, 1
                %s242 = sphi %s227, %s227
                %s243 = sphi %s220, %s220
              $region39: #{residual_block.5} parent=35 // loop_header_branch
                %240 = sbr.rel (%p238) target = $region43
              $region40: #{residual_block.5} parent=35 // loop_body
                %v244 = vld [vmem:[%s242] sm:%s235]
                %245 = vst [vmem:[%s243] sm:%s235] %v244
                %v246 = vld [vmem:[%s242 + $0xc] sm:%s235]
                %247 = vst [vmem:[%s243 + $0x4] sm:%s235] %v246
                %v248 = vld [vmem:[%s242 + $0x18] sm:%s235]
                %249 = vst [vmem:[%s243 + $0x8] sm:%s235] %v248
                %v250 = vld [vmem:[%s242 + $0x24] sm:%s235]
                %251 = vst [vmem:[%s243 + $0xc] sm:%s235] %v250
                %v252 = vld [vmem:[%s242 + $0x30] sm:%s235]
                %253 = vst [vmem:[%s243 + $0x10] sm:%s235] %v252
                %v254 = vld [vmem:[%s242 + $0x3c] sm:%s235]
                %255 = vst [vmem:[%s243 + $0x14] sm:%s235] %v254
                %v256 = vld [vmem:[%s242 + $0x48] sm:%s235]
                %257 = vst [vmem:[%s243 + $0x18] sm:%s235] %v256
                %v258 = vld [vmem:[%s242 + $0x54] sm:%s235]
                %259 = vst [vmem:[%s243 + $0x1c] sm:%s235] %v258
                %v260 = vld [vmem:[%s242 + $0x60] sm:%s235]
                %261 = vst [vmem:[%s243 + $0x20] sm:%s235] %v260
                %v262 = vld [vmem:[%s242 + $0x6c] sm:%s235]
                %263 = vst [vmem:[%s243 + $0x24] sm:%s235] %v262
                %v264 = vld [vmem:[%s242 + $0x78] sm:%s235]
                %265 = vst [vmem:[%s243 + $0x28] sm:%s235] %v264
                %v266 = vld [vmem:[%s242 + $0x84] sm:%s235]
                %267 = vst [vmem:[%s243 + $0x2c] sm:%s235] %v266
                %v268 = vld [vmem:[%s242 + $0x90] sm:%s235]
                %269 = vst [vmem:[%s243 + $0x30] sm:%s235] %v268
                %v270 = vld [vmem:[%s242 + $0x9c] sm:%s235]
                %271 = vst [vmem:[%s243 + $0x34] sm:%s235] %v270
                %v272 = vld [vmem:[%s242 + $0xa8] sm:%s235]
                %273 = vst [vmem:[%s243 + $0x38] sm:%s235] %v272
                %v274 = vld [vmem:[%s242 + $0xb4] sm:%s235]
                %275 = vst [vmem:[%s243 + $0x3c] sm:%s235] %v274
                %v276 = vld [vmem:[%s242 + $0xc0] sm:%s235]
                %277 = vst [vmem:[%s243 + $0x40] sm:%s235] %v276
                %v278 = vld [vmem:[%s242 + $0xcc] sm:%s235]
                %279 = vst [vmem:[%s243 + $0x44] sm:%s235] %v278
                %v280 = vld [vmem:[%s242 + $0xd8] sm:%s235]
                %281 = vst [vmem:[%s243 + $0x48] sm:%s235] %v280
                %v282 = vld [vmem:[%s242 + $0xe4] sm:%s235]
                %283 = vst [vmem:[%s243 + $0x4c] sm:%s235] %v282
                %v284 = vld [vmem:[%s242 + $0xf0] sm:%s235]
                %285 = vst [vmem:[%s243 + $0x50] sm:%s235] %v284
                %v286 = vld [vmem:[%s242 + $0xfc] sm:%s235]
                %287 = vst [vmem:[%s243 + $0x54] sm:%s235] %v286
                %v288 = vld [vmem:[%s242 + $0x108] sm:%s235]
                %289 = vst [vmem:[%s243 + $0x58] sm:%s235] %v288
                %v290 = vld [vmem:[%s242 + $0x114] sm:%s235]
                %291 = vst [vmem:[%s243 + $0x5c] sm:%s235] %v290
                %v292 = vld [vmem:[%s242 + $0x120] sm:%s235]
                %293 = vst [vmem:[%s243 + $0x60] sm:%s235] %v292
                %v294 = vld [vmem:[%s242 + $0x12c] sm:%s235]
                %295 = vst [vmem:[%s243 + $0x64] sm:%s235] %v294
                %v296 = vld [vmem:[%s242 + $0x138] sm:%s235]
                %297 = vst [vmem:[%s243 + $0x68] sm:%s235] %v296
                %v298 = vld [vmem:[%s242 + $0x144] sm:%s235]
                %299 = vst [vmem:[%s243 + $0x6c] sm:%s235] %v298
                %v300 = vld [vmem:[%s242 + $0x150] sm:%s235]
                %301 = vst [vmem:[%s243 + $0x70] sm:%s235] %v300
                %v302 = vld [vmem:[%s242 + $0x15c] sm:%s235]
                %303 = vst [vmem:[%s243 + $0x74] sm:%s235] %v302
                %v304 = vld [vmem:[%s242 + $0x168] sm:%s235]
                %305 = vst [vmem:[%s243 + $0x78] sm:%s235] %v304
                %v306 = vld [vmem:[%s242 + $0x174] sm:%s235]
                %307 = vst [vmem:[%s243 + $0x7c] sm:%s235] %v306
              $region41: #{residual_block.5} parent=35 // loop_footer
                %s241 = sadd.s32 1, %s237
              $region42: #{residual_block.5} parent=35 // loop_footer_branch
                %236 = sbr.rel target = $region38
              $region43: #{residual_block.5} parent=35 // loop_exit
                _
            $region36: #{residual_block.5} parent=27 // pred_fallthru
              _
          $region28: #{residual_block.5} parent=23 // pred_fallthru
            _
          %392 = vnop
        $region24: #{residual_block.5} parent=19 // pred_fallthru
          _
        // Predicated region
        $region62: #{residual_block.5} parent=19 // pred_check
          %p393 = pneg %p83
        $region63: #{residual_block.5} parent=19 // pred_check_branch
          %395 = sbr.rel (%p393) target = $region65
        $region64: #{residual_block.5} parent=19 // pred_region
          %s396 = smul.u32 16, %s23
          %p397 = scmp.lt.s32.totalorder %s396, 47
          %s398 = scalar_select %p397, %s396, 47
          %s399 = smul.addr %s398, 4
          %s400 = scalar_lea.vmem %s1, %s399
          %s401 = smul.u32 16, %s23
        $region65: #{residual_block.5} parent=19 // pred_fallthru
          _
        // Predicated region
        $region66: #{residual_block.5} parent=19 // pred_check
          %p402 = pneg %p132
        $region67: #{residual_block.5} parent=19 // pred_check_branch
          %404 = sbr.rel (%p402) target = $region69
        $region68: #{residual_block.5} parent=19 // pred_region
          %s405 = smul.u32 32, %s22
          %p406 = scmp.lt.s32.totalorder %s21, 1
          %s407 = scalar_select %p406, %s21, 1
          %p408 = scmp.lt.s32.totalorder %s405, 31
          %s409 = scalar_select %p408, %s405, 31
          %s410 = smul.addr %s407, 32
          %s411 = sadd.s32 %s409, %s410
          %s412 = smul.addr %s411, 8
          %s413 = scalar_lea.vmem %s3, %s412
          %s414 = smul.u32 32, %s22
        $region69: #{residual_block.5} parent=19 // pred_fallthru
          _
        // Predicated region
        $region70: #{residual_block.5} parent=19 // pred_check
          %p415 = pneg %p158
        $region71: #{residual_block.5} parent=19 // pred_check_branch
          %417 = sbr.rel (%p415) target = $region73
        $region72: #{residual_block.5} parent=19 // pred_region
          %p418 = scmp.lt.s32.totalorder %s21, 1
          %s419 = scalar_select %p418, %s21, 1
          %s420 = scalar_lea.vmem %s4, %s419
        $region73: #{residual_block.5} parent=19 // pred_fallthru
          _
      $region20: #{residual_block.5} parent=5 // pred_fallthru
        _
      %p421 = scmp.le.s32.totalorder 1, %s14
      %p422 = scmp.lt.s32.totalorder %s14, 7
      %p423 = pnand %p421, %p422
      %p424 = pneg %p423
      // Predicated region
      $region74: #{residual_block.5} parent=5 // pred_check
        _
      $region75: #{residual_block.5} parent=5 // pred_check_branch
        %426 = sbr.rel (%p423) target = $region77
      $region76: #{residual_block.5} parent=5 // pred_region
        %s427 = ssub.s32 %s14, 1
        %s428 = sand.u32 %s50, 1
        %s429 = sand.u32 %s50, 1
        %s430 = smul.addr %s429, 128
        %s431 = scalar_lea.vmem [#allocation3], %s430
        // Predicated region
        $region78: #{residual_block.5} parent=76 // pred_check
          %p432 = pneg %p63
        $region79: #{residual_block.5} parent=76 // pred_check_branch
          %434 = sbr.rel (%p432) target = $region81
        $region80: #{residual_block.5} parent=76 // pred_region
          _
        $region81: #{residual_block.5} parent=76 // pred_fallthru
          _
        %s435 = sand.u32 %s50, 1
        %s436 = sand.u32 %s50, 1
        %s437 = smul.addr %s436, 128
        %s438 = scalar_lea.vmem [#allocation3], %s437
        %p439 = pneg %p63
        %p440 = pneg %p60
        %s441 = smul.u32 16, %s26
        %p442 = scmp.lt.s32.totalorder %s441, 47
        %s443 = scalar_select %p442, %s441, 47
        %s444 = smul.addr %s443, 4
        %s445 = scalar_lea.vmem %s1, %s444
        %p446 = pneg %p89
        %p447 = pneg %p86
        %p448 = pneg %p110
        %p449 = pneg %p107
        %s450 = smul.u32 32, %s25
        %p451 = scmp.lt.s32.totalorder %s24, 1
        %s452 = scalar_select %p451, %s24, 1
        %p453 = scmp.lt.s32.totalorder %s450, 31
        %s454 = scalar_select %p453, %s450, 31
        %s455 = smul.addr %s452, 32
        %s456 = sadd.s32 %s454, %s455
        %s457 = smul.addr %s456, 8
        %s458 = scalar_lea.vmem %s3, %s457
        %p459 = pneg %p138
        %p460 = pneg %p135
        %p461 = scmp.lt.s32.totalorder %s24, 1
        %s462 = scalar_select %p461, %s24, 1
        %s463 = scalar_lea.vmem %s4, %s462
        %p464 = pneg %p164
        %p465 = pneg %p161
        %p466 = pneg %p192
        %p467 = pneg %p189
        %s468 = sand.u32 %s179, 1
        %s469 = scalar_lea.sflag [#allocation5], %s468
        %s470 = sand.u32 %s179, 1
        %s471 = smul.addr %s470, 256
        %s472 = scalar_lea.vmem [#allocation4], %s471
        %s473 = smul.u32 32, %s25
        %s474 = smul.u32 16, %s26
        %p475 = scmp.lt.s32.totalorder %s474, 47
        %s476 = scalar_select %p475, %s474, 47
        %s477 = smul.addr %s476, 4
        %s478 = scalar_lea.vmem %s1, %s477
        %s479 = smul.u32 16, %s26
        %s480 = smul.u32 32, %s25
        %p481 = scmp.lt.s32.totalorder %s24, 1
        %s482 = scalar_select %p481, %s24, 1
        %p483 = scmp.lt.s32.totalorder %s480, 31
        %s484 = scalar_select %p483, %s480, 31
        %s485 = smul.addr %s482, 32
        %s486 = sadd.s32 %s484, %s485
        %s487 = smul.addr %s486, 8
        %s488 = scalar_lea.vmem %s3, %s487
        %s489 = smul.u32 32, %s25
        %p490 = scmp.lt.s32.totalorder %s24, 1
        %s491 = scalar_select %p490, %s24, 1
        %s492 = scalar_lea.vmem %s4, %s491
        %s493 = smul.u32 32, %s25
        %p495 = scmp.eq.s32.totalorder %s26, 0
        // Predicated region
        $region82: #{residual_block.5} parent=76 // pred_check
          %p496 = pneg %p495
        $region83: #{residual_block.5} parent=76 // pred_check_branch
          %498 = sbr.rel (%p496) target = $region85
        $region84: #{residual_block.5} parent=76 // pred_region
          %499 = vst [vmem:[#allocation2] sm:$0xff] 0.0
          %500 = vst [vmem:[#allocation2 + $0x8] sm:$0xff] 0.0
          %501 = vst [vmem:[#allocation2 + $0x10] sm:$0xff] 0.0
          %502 = vst [vmem:[#allocation2 + $0x18] sm:$0xff] 0.0
          %503 = vst [vmem:[#allocation2 + $0x20] sm:$0xff] 0.0
          %504 = vst [vmem:[#allocation2 + $0x28] sm:$0xff] 0.0
          %505 = vst [vmem:[#allocation2 + $0x30] sm:$0xff] 0.0
          %506 = vst [vmem:[#allocation2 + $0x38] sm:$0xff] 0.0
          %507 = vst [vmem:[#allocation2 + $0x40] sm:$0xff] 0.0
          %508 = vst [vmem:[#allocation2 + $0x48] sm:$0xff] 0.0
          %509 = vst [vmem:[#allocation2 + $0x50] sm:$0xff] 0.0
          %510 = vst [vmem:[#allocation2 + $0x58] sm:$0xff] 0.0
          %511 = vst [vmem:[#allocation2 + $0x60] sm:$0xff] 0.0
          %512 = vst [vmem:[#allocation2 + $0x68] sm:$0xff] 0.0
          %513 = vst [vmem:[#allocation2 + $0x70] sm:$0xff] 0.0
          %514 = vst [vmem:[#allocation2 + $0x78] sm:$0xff] 0.0
          %515 = vst [vmem:[#allocation2 + $0x80] sm:$0xff] 0.0
          %516 = vst [vmem:[#allocation2 + $0x88] sm:$0xff] 0.0
          %517 = vst [vmem:[#allocation2 + $0x90] sm:$0xff] 0.0
          %518 = vst [vmem:[#allocation2 + $0x98] sm:$0xff] 0.0
          %519 = vst [vmem:[#allocation2 + $0xa0] sm:$0xff] 0.0
          %520 = vst [vmem:[#allocation2 + $0xa8] sm:$0xff] 0.0
          %521 = vst [vmem:[#allocation2 + $0xb0] sm:$0xff] 0.0
          %522 = vst [vmem:[#allocation2 + $0xb8] sm:$0xff] 0.0
          %523 = vst [vmem:[#allocation2 + $0xc0] sm:$0xff] 0.0
          %524 = vst [vmem:[#allocation2 + $0xc8] sm:$0xff] 0.0
          %525 = vst [vmem:[#allocation2 + $0xd0] sm:$0xff] 0.0
          %526 = vst [vmem:[#allocation2 + $0xd8] sm:$0xff] 0.0
          %527 = vst [vmem:[#allocation2 + $0xe0] sm:$0xff] 0.0
          %528 = vst [vmem:[#allocation2 + $0xe8] sm:$0xff] 0.0
          %529 = vst [vmem:[#allocation2 + $0xf0] sm:$0xff] 0.0
          %530 = vst [vmem:[#allocation2 + $0xf8] sm:$0xff] 0.0
        $region85: #{residual_block.5} parent=76 // pred_fallthru
          _
        %v531 = vld [vmem:[#allocation2] sm:$0xff]
        %v532 = vld [vmem:[#allocation2 + $0x8] sm:$0xff]
        %v533 = vld [vmem:[#allocation2 + $0x10] sm:$0xff]
        %v534 = vld [vmem:[#allocation2 + $0x18] sm:$0xff]
        %v535 = vld [vmem:[#allocation2 + $0x20] sm:$0xff]
        %v536 = vld [vmem:[#allocation2 + $0x28] sm:$0xff]
        %v537 = vld [vmem:[#allocation2 + $0x30] sm:$0xff]
        %v538 = vld [vmem:[#allocation2 + $0x38] sm:$0xff]
        %v539 = vld [vmem:[#allocation2 + $0x40] sm:$0xff]
        %v540 = vld [vmem:[#allocation2 + $0x48] sm:$0xff]
        %v541 = vld [vmem:[#allocation2 + $0x50] sm:$0xff]
        %v542 = vld [vmem:[#allocation2 + $0x58] sm:$0xff]
        %v543 = vld [vmem:[#allocation2 + $0x60] sm:$0xff]
        %v544 = vld [vmem:[#allocation2 + $0x68] sm:$0xff]
        %v545 = vld [vmem:[#allocation2 + $0x70] sm:$0xff]
        %v546 = vld [vmem:[#allocation2 + $0x78] sm:$0xff]
        %v547 = vld [vmem:[#allocation2 + $0x80] sm:$0xff]
        %v548 = vld [vmem:[#allocation2 + $0x88] sm:$0xff]
        %v549 = vld [vmem:[#allocation2 + $0x90] sm:$0xff]
        %v550 = vld [vmem:[#allocation2 + $0x98] sm:$0xff]
        %v551 = vld [vmem:[#allocation2 + $0xa0] sm:$0xff]
        %v552 = vld [vmem:[#allocation2 + $0xa8] sm:$0xff]
        %v553 = vld [vmem:[#allocation2 + $0xb0] sm:$0xff]
        %v554 = vld [vmem:[#allocation2 + $0xb8] sm:$0xff]
        %v555 = vld [vmem:[#allocation2 + $0xc0] sm:$0xff]
        %v556 = vld [vmem:[#allocation2 + $0xc8] sm:$0xff]
        %v557 = vld [vmem:[#allocation2 + $0xd0] sm:$0xff]
        %v558 = vld [vmem:[#allocation2 + $0xd8] sm:$0xff]
        %v559 = vld [vmem:[#allocation2 + $0xe0] sm:$0xff]
        %v560 = vld [vmem:[#allocation2 + $0xe8] sm:$0xff]
        %v561 = vld [vmem:[#allocation2 + $0xf0] sm:$0xff]
        %v562 = vld [vmem:[#allocation2 + $0xf8] sm:$0xff]
        %v563 = vld [vmem:[%s431] sm:$0xf]
        %v564 = vld [vmem:[%s431 + $0x4] sm:$0xf]
        %v565 = vld [vmem:[%s431 + $0x8] sm:$0xf]
        %v566 = vld [vmem:[%s431 + $0xc] sm:$0xf]
        %v567 = vld [vmem:[%s431 + $0x10] sm:$0xf]
        %v568 = vld [vmem:[%s431 + $0x14] sm:$0xf]
        %v569 = vld [vmem:[%s431 + $0x18] sm:$0xf]
        %v570 = vld [vmem:[%s431 + $0x1c] sm:$0xf]
        %v571 = vld [vmem:[%s431 + $0x20] sm:$0xf]
        %v572 = vld [vmem:[%s431 + $0x24] sm:$0xf]
        %v573 = vld [vmem:[%s431 + $0x28] sm:$0xf]
        %v574 = vld [vmem:[%s431 + $0x2c] sm:$0xf]
        %v575 = vld [vmem:[%s431 + $0x30] sm:$0xf]
        %v576 = vld [vmem:[%s431 + $0x34] sm:$0xf]
        %v577 = vld [vmem:[%s431 + $0x38] sm:$0xf]
        %v578 = vld [vmem:[%s431 + $0x3c] sm:$0xf]
        %v579 = vld [vmem:[%s431 + $0x40] sm:$0xf]
        %v580 = vld [vmem:[%s431 + $0x44] sm:$0xf]
        %v581 = vld [vmem:[%s431 + $0x48] sm:$0xf]
        %v582 = vld [vmem:[%s431 + $0x4c] sm:$0xf]
        %v583 = vld [vmem:[%s431 + $0x50] sm:$0xf]
        %v584 = vld [vmem:[%s431 + $0x54] sm:$0xf]
        %v585 = vld [vmem:[%s431 + $0x58] sm:$0xf]
        %v586 = vld [vmem:[%s431 + $0x5c] sm:$0xf]
        %v587 = vld [vmem:[%s431 + $0x60] sm:$0xf]
        %v588 = vld [vmem:[%s431 + $0x64] sm:$0xf]
        %v589 = vld [vmem:[%s431 + $0x68] sm:$0xf]
        %v590 = vld [vmem:[%s431 + $0x6c] sm:$0xf]
        %v591 = vld [vmem:[%s431 + $0x70] sm:$0xf]
        %v592 = vld [vmem:[%s431 + $0x74] sm:$0xf]
        %v593 = vld [vmem:[%s431 + $0x78] sm:$0xf]
        %v594 = vld [vmem:[%s431 + $0x7c] sm:$0xf]
        %v595 = vld [vmem:[%s478] sm:$0xf]
        %v596 = vld [vmem:[%s478 + $0x4] sm:$0xf]
        %v597 = vld [vmem:[%s478 + $0x8] sm:$0xf]
        %v598 = vld [vmem:[%s478 + $0xc] sm:$0xf]
        %v599 = vld [vmem:[%s478 + $0x10] sm:$0xf]
        %v600 = vld [vmem:[%s478 + $0x14] sm:$0xf]
        %v601 = vld [vmem:[%s478 + $0x18] sm:$0xf]
        %v602 = vld [vmem:[%s478 + $0x1c] sm:$0xf]
        %v603 = vld [vmem:[%s478 + $0x20] sm:$0xf]
        %v604 = vld [vmem:[%s478 + $0x24] sm:$0xf]
        %v605 = vld [vmem:[%s478 + $0x28] sm:$0xf]
        %v606 = vld [vmem:[%s478 + $0x2c] sm:$0xf]
        %v607 = vld [vmem:[%s478 + $0x30] sm:$0xf]
        %v608 = vld [vmem:[%s478 + $0x34] sm:$0xf]
        %v609 = vld [vmem:[%s478 + $0x38] sm:$0xf]
        %v610 = vld [vmem:[%s478 + $0x3c] sm:$0xf]
        %v643 = vunpack.c.l.b16 %v563
        %v644 = vunpack.c.l.b16 %v564
        %v645 = vunpack.c.l.b16 %v565
        %v646 = vunpack.c.l.b16 %v566
        %v647 = vunpack.c.l.b16 %v567
        %v648 = vunpack.c.l.b16 %v568
        %v649 = vunpack.c.l.b16 %v569
        %v650 = vunpack.c.l.b16 %v570
        %v651 = vunpack.c.l.b16 %v571
        %v652 = vunpack.c.l.b16 %v572
        %v653 = vunpack.c.l.b16 %v573
        %v654 = vunpack.c.l.b16 %v574
        %v655 = vunpack.c.l.b16 %v575
        %v656 = vunpack.c.l.b16 %v576
        %v657 = vunpack.c.l.b16 %v577
        %v658 = vunpack.c.l.b16 %v578
        %v659 = vunpack.c.l.b16 %v579
        %v660 = vunpack.c.l.b16 %v580
        %v661 = vunpack.c.l.b16 %v581
        %v662 = vunpack.c.l.b16 %v582
        %v663 = vunpack.c.l.b16 %v583
        %v664 = vunpack.c.l.b16 %v584
        %v665 = vunpack.c.l.b16 %v585
        %v666 = vunpack.c.l.b16 %v586
        %v667 = vunpack.c.l.b16 %v587
        %v668 = vunpack.c.l.b16 %v588
        %v669 = vunpack.c.l.b16 %v589
        %v670 = vunpack.c.l.b16 %v590
        %v671 = vunpack.c.l.b16 %v591
        %v672 = vunpack.c.l.b16 %v592
        %v673 = vunpack.c.l.b16 %v593
        %v674 = vunpack.c.l.b16 %v594
        %v675 = vpack.c.b16 %v644, %v643
        %v676 = vpack.c.b16 %v646, %v645
        %v677 = vpack.c.b16 %v648, %v647
        %v678 = vpack.c.b16 %v650, %v649
        %v679 = vpack.c.b16 %v652, %v651
        %v680 = vpack.c.b16 %v654, %v653
        %v681 = vpack.c.b16 %v656, %v655
        %v682 = vpack.c.b16 %v658, %v657
        %v683 = vpack.c.b16 %v660, %v659
        %v684 = vpack.c.b16 %v662, %v661
        %v685 = vpack.c.b16 %v664, %v663
        %v686 = vpack.c.b16 %v666, %v665
        %v687 = vpack.c.b16 %v668, %v667
        %v688 = vpack.c.b16 %v670, %v669
        %v689 = vpack.c.b16 %v672, %v671
        %v690 = vpack.c.b16 %v674, %v673
        %v723 = vunpack.c.l.b16 %v595
        %v724 = vunpack.c.l.b16 %v596
        %v725 = vunpack.c.l.b16 %v597
        %v726 = vunpack.c.l.b16 %v598
        %v727 = vunpack.c.l.b16 %v599
        %v728 = vunpack.c.l.b16 %v600
        %v729 = vunpack.c.l.b16 %v601
        %v730 = vunpack.c.l.b16 %v602
        %v731 = vunpack.c.l.b16 %v603
        %v732 = vunpack.c.l.b16 %v604
        %v733 = vunpack.c.l.b16 %v605
        %v734 = vunpack.c.l.b16 %v606
        %v735 = vunpack.c.l.b16 %v607
        %v736 = vunpack.c.l.b16 %v608
        %v737 = vunpack.c.l.b16 %v609
        %v738 = vunpack.c.l.b16 %v610
        %v739 = vpack.c.b16 %v724, %v723
        %v740 = vpack.c.b16 %v726, %v725
        %v741 = vpack.c.b16 %v728, %v727
        %v742 = vpack.c.b16 %v730, %v729
        %v743 = vpack.c.b16 %v732, %v731
        %v744 = vpack.c.b16 %v734, %v733
        %v745 = vpack.c.b16 %v736, %v735
        %v746 = vpack.c.b16 %v738, %v737
        %755 = vmatprep.subr.bf16.mxu0 0
        %756 = vmatpush1.bf16.msra.mxu0 %v746
        %757 = vmatprep.subr.bf16.mxu0 0
        %758 = vmatpush1.bf16.msra.mxu0 %v745
        %759 = vmatprep.subr.bf16.mxu0 0
        %760 = vmatpush1.bf16.msra.mxu0 %v744
        %761 = vmatprep.subr.bf16.mxu0 0
        %762 = vmatpush1.bf16.msra.mxu0 %v743
        %763 = vmatprep.subr.bf16.mxu0 0
        %764 = vmatpush1.bf16.msra.mxu0 %v742
        %765 = vmatprep.subr.bf16.mxu0 0
        %766 = vmatpush1.bf16.msra.mxu0 %v741
        %767 = vmatprep.subr.bf16.mxu0 0
        %768 = vmatpush1.bf16.msra.mxu0 %v740
        %769 = vmatprep.subr.bf16.mxu0 0
        %770 = vmatpush1.bf16.msra.mxu0 %v739
        %771 = vmatprep.subr.bf16.mxu0 0
        %772 = vmatpush2.bf16.msra.mxu0 0
        %773 = vmatprep.subr.bf16.mxu0 0
        %774 = vmatpush2.bf16.msra.mxu0 0
        %775 = vmatprep.subr.bf16.mxu0 0
        %776 = vmatpush2.bf16.msra.mxu0 0
        %777 = vmatprep.subr.bf16.mxu0 0
        %778 = vmatpush2.bf16.msra.mxu0 0
        %779 = vmatprep.subr.bf16.mxu0 0
        %780 = vmatpush2.bf16.msra.mxu0 0
        %781 = vmatprep.subr.bf16.mxu0 0
        %782 = vmatpush2.bf16.msra.mxu0 0
        %783 = vmatprep.subr.bf16.mxu0 0
        %784 = vmatpush2.bf16.msra.mxu0 0
        %785 = vmatprep.subr.bf16.mxu0 0
        %786 = vmatpush2.bf16.msra.mxu0 0
        %787 = vmatprep.mubr.bf16.mxu0 0
        %788 = vmatmul.mubr.bf16.gmra.mxu0 %v675
        %v789 = vpop.f32.mrf.mxu0
        %v790 = vadd.f32 0.0, %v789
        %v791 = vpop.f32.mrf.mxu0
        %v792 = vpop.f32.mrf.mxu0
        %v793 = vadd.f32 0.0, %v792
        %v794 = vpop.f32.mrf.mxu0
        %795 = vmatprep.mubr.bf16.mxu0 0
        %796 = vmatmul.mubr.bf16.gmra.mxu0 %v676
        %v797 = vpop.f32.mrf.mxu0
        %v798 = vadd.f32 0.0, %v797
        %v799 = vpop.f32.mrf.mxu0
        %v800 = vpop.f32.mrf.mxu0
        %v801 = vadd.f32 0.0, %v800
        %v802 = vpop.f32.mrf.mxu0
        %803 = vmatprep.mubr.bf16.mxu0 0
        %804 = vmatmul.mubr.bf16.gmra.mxu0 %v677
        %v805 = vpop.f32.mrf.mxu0
        %v806 = vadd.f32 0.0, %v805
        %v807 = vpop.f32.mrf.mxu0
        %v808 = vpop.f32.mrf.mxu0
        %v809 = vadd.f32 0.0, %v808
        %v810 = vpop.f32.mrf.mxu0
        %811 = vmatprep.mubr.bf16.mxu0 0
        %812 = vmatmul.mubr.bf16.gmra.mxu0 %v678
        %v813 = vpop.f32.mrf.mxu0
        %v814 = vadd.f32 0.0, %v813
        %v815 = vpop.f32.mrf.mxu0
        %v816 = vpop.f32.mrf.mxu0
        %v817 = vadd.f32 0.0, %v816
        %v818 = vpop.f32.mrf.mxu0
        %819 = vmatprep.mubr.bf16.mxu0 0
        %820 = vmatmul.mubr.bf16.gmra.mxu0 %v679
        %v821 = vpop.f32.mrf.mxu0
        %v822 = vadd.f32 0.0, %v821
        %v823 = vpop.f32.mrf.mxu0
        %v824 = vpop.f32.mrf.mxu0
        %v825 = vadd.f32 0.0, %v824
        %v826 = vpop.f32.mrf.mxu0
        %827 = vmatprep.mubr.bf16.mxu0 0
        %828 = vmatmul.mubr.bf16.gmra.mxu0 %v680
        %v829 = vpop.f32.mrf.mxu0
        %v830 = vadd.f32 0.0, %v829
        %v831 = vpop.f32.mrf.mxu0
        %v832 = vpop.f32.mrf.mxu0
        %v833 = vadd.f32 0.0, %v832
        %v834 = vpop.f32.mrf.mxu0
        %835 = vmatprep.mubr.bf16.mxu0 0
        %836 = vmatmul.mubr.bf16.gmra.mxu0 %v681
        %v837 = vpop.f32.mrf.mxu0
        %v838 = vadd.f32 0.0, %v837
        %v839 = vpop.f32.mrf.mxu0
        %v840 = vpop.f32.mrf.mxu0
        %v841 = vadd.f32 0.0, %v840
        %v842 = vpop.f32.mrf.mxu0
        %843 = vmatprep.mubr.bf16.mxu0 0
        %844 = vmatmul.mubr.bf16.gmra.mxu0 %v682
        %v845 = vpop.f32.mrf.mxu0
        %v846 = vadd.f32 0.0, %v845
        %v847 = vpop.f32.mrf.mxu0
        %v848 = vpop.f32.mrf.mxu0
        %v849 = vadd.f32 0.0, %v848
        %v850 = vpop.f32.mrf.mxu0
        %851 = vmatprep.mubr.bf16.mxu0 0
        %852 = vmatmul.mubr.bf16.gmra.mxu0 %v683
        %v853 = vpop.f32.mrf.mxu0
        %v854 = vadd.f32 0.0, %v853
        %v855 = vpop.f32.mrf.mxu0
        %v856 = vpop.f32.mrf.mxu0
        %v857 = vadd.f32 0.0, %v856
        %v858 = vpop.f32.mrf.mxu0
        %859 = vmatprep.mubr.bf16.mxu0 0
        %860 = vmatmul.mubr.bf16.gmra.mxu0 %v684
        %v861 = vpop.f32.mrf.mxu0
        %v862 = vadd.f32 0.0, %v861
        %v863 = vpop.f32.mrf.mxu0
        %v864 = vpop.f32.mrf.mxu0
        %v865 = vadd.f32 0.0, %v864
        %v866 = vpop.f32.mrf.mxu0
        %867 = vmatprep.mubr.bf16.mxu0 0
        %868 = vmatmul.mubr.bf16.gmra.mxu0 %v685
        %v869 = vpop.f32.mrf.mxu0
        %v870 = vadd.f32 0.0, %v869
        %v871 = vpop.f32.mrf.mxu0
        %v872 = vpop.f32.mrf.mxu0
        %v873 = vadd.f32 0.0, %v872
        %v874 = vpop.f32.mrf.mxu0
        %875 = vmatprep.mubr.bf16.mxu0 0
        %876 = vmatmul.mubr.bf16.gmra.mxu0 %v686
        %v877 = vpop.f32.mrf.mxu0
        %v878 = vadd.f32 0.0, %v877
        %v879 = vpop.f32.mrf.mxu0
        %v880 = vpop.f32.mrf.mxu0
        %v881 = vadd.f32 0.0, %v880
        %v882 = vpop.f32.mrf.mxu0
        %883 = vmatprep.mubr.bf16.mxu0 0
        %884 = vmatmul.mubr.bf16.gmra.mxu0 %v687
        %v885 = vpop.f32.mrf.mxu0
        %v886 = vadd.f32 0.0, %v885
        %v887 = vpop.f32.mrf.mxu0
        %v888 = vpop.f32.mrf.mxu0
        %v889 = vadd.f32 0.0, %v888
        %v890 = vpop.f32.mrf.mxu0
        %891 = vmatprep.mubr.bf16.mxu0 0
        %892 = vmatmul.mubr.bf16.gmra.mxu0 %v688
        %v893 = vpop.f32.mrf.mxu0
        %v894 = vadd.f32 0.0, %v893
        %v895 = vpop.f32.mrf.mxu0
        %v896 = vpop.f32.mrf.mxu0
        %v897 = vadd.f32 0.0, %v896
        %v898 = vpop.f32.mrf.mxu0
        %899 = vmatprep.mubr.bf16.mxu0 0
        %900 = vmatmul.mubr.bf16.gmra.mxu0 %v689
        %v901 = vpop.f32.mrf.mxu0
        %v902 = vadd.f32 0.0, %v901
        %v903 = vpop.f32.mrf.mxu0
        %v904 = vpop.f32.mrf.mxu0
        %v905 = vadd.f32 0.0, %v904
        %v906 = vpop.f32.mrf.mxu0
        %907 = vmatprep.mubr.bf16.mxu0 0
        %908 = vmatmul.mubr.bf16.gmra.mxu0 %v690
        %v909 = vpop.f32.mrf.mxu0
        %v910 = vadd.f32 0.0, %v909
        %v911 = vpop.f32.mrf.mxu0
        %v912 = vpop.f32.mrf.mxu0
        %v913 = vadd.f32 0.0, %v912
        %v914 = vpop.f32.mrf.mxu0
        %915 = vdwg.mxu0
        %v916 = vadd.f32 %v531, %v790
        %v917 = vadd.f32 %v532, %v793
        %v918 = vadd.f32 %v533, %v798
        %v919 = vadd.f32 %v534, %v801
        %v920 = vadd.f32 %v535, %v806
        %v921 = vadd.f32 %v536, %v809
        %v922 = vadd.f32 %v537, %v814
        %v923 = vadd.f32 %v538, %v817
        %v924 = vadd.f32 %v539, %v822
        %v925 = vadd.f32 %v540, %v825
        %v926 = vadd.f32 %v541, %v830
        %v927 = vadd.f32 %v542, %v833
        %v928 = vadd.f32 %v543, %v838
        %v929 = vadd.f32 %v544, %v841
        %v930 = vadd.f32 %v545, %v846
        %v931 = vadd.f32 %v546, %v849
        %v932 = vadd.f32 %v547, %v854
        %v933 = vadd.f32 %v548, %v857
        %v934 = vadd.f32 %v549, %v862
        %v935 = vadd.f32 %v550, %v865
        %v936 = vadd.f32 %v551, %v870
        %v937 = vadd.f32 %v552, %v873
        %v938 = vadd.f32 %v553, %v878
        %v939 = vadd.f32 %v554, %v881
        %v940 = vadd.f32 %v555, %v886
        %v941 = vadd.f32 %v556, %v889
        %v942 = vadd.f32 %v557, %v894
        %v943 = vadd.f32 %v558, %v897
        %v944 = vadd.f32 %v559, %v902
        %v945 = vadd.f32 %v560, %v905
        %v946 = vadd.f32 %v561, %v910
        %v947 = vadd.f32 %v562, %v913
        %948 = vst [vmem:[#allocation2] sm:$0xff] %v916
        %949 = vst [vmem:[#allocation2 + $0x8] sm:$0xff] %v917
        %950 = vst [vmem:[#allocation2 + $0x10] sm:$0xff] %v918
        %951 = vst [vmem:[#allocation2 + $0x18] sm:$0xff] %v919
        %952 = vst [vmem:[#allocation2 + $0x20] sm:$0xff] %v920
        %953 = vst [vmem:[#allocation2 + $0x28] sm:$0xff] %v921
        %954 = vst [vmem:[#allocation2 + $0x30] sm:$0xff] %v922
        %955 = vst [vmem:[#allocation2 + $0x38] sm:$0xff] %v923
        %956 = vst [vmem:[#allocation2 + $0x40] sm:$0xff] %v924
        %957 = vst [vmem:[#allocation2 + $0x48] sm:$0xff] %v925
        %958 = vst [vmem:[#allocation2 + $0x50] sm:$0xff] %v926
        %959 = vst [vmem:[#allocation2 + $0x58] sm:$0xff] %v927
        %960 = vst [vmem:[#allocation2 + $0x60] sm:$0xff] %v928
        %961 = vst [vmem:[#allocation2 + $0x68] sm:$0xff] %v929
        %962 = vst [vmem:[#allocation2 + $0x70] sm:$0xff] %v930
        %963 = vst [vmem:[#allocation2 + $0x78] sm:$0xff] %v931
        %964 = vst [vmem:[#allocation2 + $0x80] sm:$0xff] %v932
        %965 = vst [vmem:[#allocation2 + $0x88] sm:$0xff] %v933
        %966 = vst [vmem:[#allocation2 + $0x90] sm:$0xff] %v934
        %967 = vst [vmem:[#allocation2 + $0x98] sm:$0xff] %v935
        %968 = vst [vmem:[#allocation2 + $0xa0] sm:$0xff] %v936
        %969 = vst [vmem:[#allocation2 + $0xa8] sm:$0xff] %v937
        %970 = vst [vmem:[#allocation2 + $0xb0] sm:$0xff] %v938
        %971 = vst [vmem:[#allocation2 + $0xb8] sm:$0xff] %v939
        %972 = vst [vmem:[#allocation2 + $0xc0] sm:$0xff] %v940
        %973 = vst [vmem:[#allocation2 + $0xc8] sm:$0xff] %v941
        %974 = vst [vmem:[#allocation2 + $0xd0] sm:$0xff] %v942
        %975 = vst [vmem:[#allocation2 + $0xd8] sm:$0xff] %v943
        %976 = vst [vmem:[#allocation2 + $0xe0] sm:$0xff] %v944
        %977 = vst [vmem:[#allocation2 + $0xe8] sm:$0xff] %v945
        %978 = vst [vmem:[#allocation2 + $0xf0] sm:$0xff] %v946
        %979 = vst [vmem:[#allocation2 + $0xf8] sm:$0xff] %v947
        %p980 = scmp.eq.s32.totalorder %s26, 2
        // Predicated region
        $region86: #{residual_block.5} parent=76 // pred_check
          %p981 = pneg %p980
        $region87: #{residual_block.5} parent=76 // pred_check_branch
          %983 = sbr.rel (%p981) target = $region89
        $region88: #{residual_block.5} parent=76 // pred_region
          %v984 = vld [vmem:[#allocation2] sm:$0xff]
          %v985 = vld [vmem:[#allocation2 + $0x8] sm:$0xff]
          %v986 = vld [vmem:[#allocation2 + $0x10] sm:$0xff]
          %v987 = vld [vmem:[#allocation2 + $0x18] sm:$0xff]
          %v988 = vld [vmem:[#allocation2 + $0x20] sm:$0xff]
          %v989 = vld [vmem:[#allocation2 + $0x28] sm:$0xff]
          %v990 = vld [vmem:[#allocation2 + $0x30] sm:$0xff]
          %v991 = vld [vmem:[#allocation2 + $0x38] sm:$0xff]
          %v992 = vld [vmem:[#allocation2 + $0x40] sm:$0xff]
          %v993 = vld [vmem:[#allocation2 + $0x48] sm:$0xff]
          %v994 = vld [vmem:[#allocation2 + $0x50] sm:$0xff]
          %v995 = vld [vmem:[#allocation2 + $0x58] sm:$0xff]
          %v996 = vld [vmem:[#allocation2 + $0x60] sm:$0xff]
          %v997 = vld [vmem:[#allocation2 + $0x68] sm:$0xff]
          %v998 = vld [vmem:[#allocation2 + $0x70] sm:$0xff]
          %v999 = vld [vmem:[#allocation2 + $0x78] sm:$0xff]
          %v1000 = vld [vmem:[#allocation2 + $0x80] sm:$0xff]
          %v1001 = vld [vmem:[#allocation2 + $0x88] sm:$0xff]
          %v1002 = vld [vmem:[#allocation2 + $0x90] sm:$0xff]
          %v1003 = vld [vmem:[#allocation2 + $0x98] sm:$0xff]
          %v1004 = vld [vmem:[#allocation2 + $0xa0] sm:$0xff]
          %v1005 = vld [vmem:[#allocation2 + $0xa8] sm:$0xff]
          %v1006 = vld [vmem:[#allocation2 + $0xb0] sm:$0xff]
          %v1007 = vld [vmem:[#allocation2 + $0xb8] sm:$0xff]
          %v1008 = vld [vmem:[#allocation2 + $0xc0] sm:$0xff]
          %v1009 = vld [vmem:[#allocation2 + $0xc8] sm:$0xff]
          %v1010 = vld [vmem:[#allocation2 + $0xd0] sm:$0xff]
          %v1011 = vld [vmem:[#allocation2 + $0xd8] sm:$0xff]
          %v1012 = vld [vmem:[#allocation2 + $0xe0] sm:$0xff]
          %v1013 = vld [vmem:[#allocation2 + $0xe8] sm:$0xff]
          %v1014 = vld [vmem:[#allocation2 + $0xf0] sm:$0xff]
          %v1015 = vld [vmem:[#allocation2 + $0xf8] sm:$0xff]
          %v1016 = vld [vmem:[%s2] sm:$0x1]
          %v1018 = vlaneseq
          %v1019 = vshrl.u32 %v1018, 7
          %v1020 = vsub.s32 0, %v1019
          %v1021 = vrot.slane %v1016, %v1020
          %v1023 = vadd.f32 %v984, %v1021
          %v1024 = vadd.f32 %v985, %v1021
          %v1025 = vadd.f32 %v986, %v1021
          %v1026 = vadd.f32 %v987, %v1021
          %v1027 = vadd.f32 %v988, %v1021
          %v1028 = vadd.f32 %v989, %v1021
          %v1029 = vadd.f32 %v990, %v1021
          %v1030 = vadd.f32 %v991, %v1021
          %v1031 = vadd.f32 %v992, %v1021
          %v1032 = vadd.f32 %v993, %v1021
          %v1033 = vadd.f32 %v994, %v1021
          %v1034 = vadd.f32 %v995, %v1021
          %v1035 = vadd.f32 %v996, %v1021
          %v1036 = vadd.f32 %v997, %v1021
          %v1037 = vadd.f32 %v998, %v1021
          %v1038 = vadd.f32 %v999, %v1021
          %v1039 = vadd.f32 %v1000, %v1021
          %v1040 = vadd.f32 %v1001, %v1021
          %v1041 = vadd.f32 %v1002, %v1021
          %v1042 = vadd.f32 %v1003, %v1021
          %v1043 = vadd.f32 %v1004, %v1021
          %v1044 = vadd.f32 %v1005, %v1021
          %v1045 = vadd.f32 %v1006, %v1021
          %v1046 = vadd.f32 %v1007, %v1021
          %v1047 = vadd.f32 %v1008, %v1021
          %v1048 = vadd.f32 %v1009, %v1021
          %v1049 = vadd.f32 %v1010, %v1021
          %v1050 = vadd.f32 %v1011, %v1021
          %v1051 = vadd.f32 %v1012, %v1021
          %v1052 = vadd.f32 %v1013, %v1021
          %v1053 = vadd.f32 %v1014, %v1021
          %v1054 = vadd.f32 %v1015, %v1021
          %v1055 = vld [vmem:[%s488] sm:$0xff]
          %v1056 = vld [vmem:[%s488 + $0x8] sm:$0xff]
          %v1057 = vld [vmem:[%s488 + $0x10] sm:$0xff]
          %v1058 = vld [vmem:[%s488 + $0x18] sm:$0xff]
          %v1059 = vld [vmem:[%s488 + $0x20] sm:$0xff]
          %v1060 = vld [vmem:[%s488 + $0x28] sm:$0xff]
          %v1061 = vld [vmem:[%s488 + $0x30] sm:$0xff]
          %v1062 = vld [vmem:[%s488 + $0x38] sm:$0xff]
          %v1063 = vld [vmem:[%s488 + $0x40] sm:$0xff]
          %v1064 = vld [vmem:[%s488 + $0x48] sm:$0xff]
          %v1065 = vld [vmem:[%s488 + $0x50] sm:$0xff]
          %v1066 = vld [vmem:[%s488 + $0x58] sm:$0xff]
          %v1067 = vld [vmem:[%s488 + $0x60] sm:$0xff]
          %v1068 = vld [vmem:[%s488 + $0x68] sm:$0xff]
          %v1069 = vld [vmem:[%s488 + $0x70] sm:$0xff]
          %v1070 = vld [vmem:[%s488 + $0x78] sm:$0xff]
          %v1071 = vld [vmem:[%s488 + $0x80] sm:$0xff]
          %v1072 = vld [vmem:[%s488 + $0x88] sm:$0xff]
          %v1073 = vld [vmem:[%s488 + $0x90] sm:$0xff]
          %v1074 = vld [vmem:[%s488 + $0x98] sm:$0xff]
          %v1075 = vld [vmem:[%s488 + $0xa0] sm:$0xff]
          %v1076 = vld [vmem:[%s488 + $0xa8] sm:$0xff]
          %v1077 = vld [vmem:[%s488 + $0xb0] sm:$0xff]
          %v1078 = vld [vmem:[%s488 + $0xb8] sm:$0xff]
          %v1079 = vld [vmem:[%s488 + $0xc0] sm:$0xff]
          %v1080 = vld [vmem:[%s488 + $0xc8] sm:$0xff]
          %v1081 = vld [vmem:[%s488 + $0xd0] sm:$0xff]
          %v1082 = vld [vmem:[%s488 + $0xd8] sm:$0xff]
          %v1083 = vld [vmem:[%s488 + $0xe0] sm:$0xff]
          %v1084 = vld [vmem:[%s488 + $0xe8] sm:$0xff]
          %v1085 = vld [vmem:[%s488 + $0xf0] sm:$0xff]
          %v1086 = vld [vmem:[%s488 + $0xf8] sm:$0xff]
          %v1087 = vld [vmem:[%s492] sm:$0x1]
          %v1089 = vlaneseq
          %v1090 = vshrl.u32 %v1089, 7
          %v1091 = vsub.s32 0, %v1090
          %v1092 = vrot.slane %v1087, %v1091
          %v1094 = vmul.f32 %v1055, %v1092
          %v1095 = vmul.f32 %v1056, %v1092
          %v1096 = vmul.f32 %v1057, %v1092
          %v1097 = vmul.f32 %v1058, %v1092
          %v1098 = vmul.f32 %v1059, %v1092
          %v1099 = vmul.f32 %v1060, %v1092
          %v1100 = vmul.f32 %v1061, %v1092
          %v1101 = vmul.f32 %v1062, %v1092
          %v1102 = vmul.f32 %v1063, %v1092
          %v1103 = vmul.f32 %v1064, %v1092
          %v1104 = vmul.f32 %v1065, %v1092
          %v1105 = vmul.f32 %v1066, %v1092
          %v1106 = vmul.f32 %v1067, %v1092
          %v1107 = vmul.f32 %v1068, %v1092
          %v1108 = vmul.f32 %v1069, %v1092
          %v1109 = vmul.f32 %v1070, %v1092
          %v1110 = vmul.f32 %v1071, %v1092
          %v1111 = vmul.f32 %v1072, %v1092
          %v1112 = vmul.f32 %v1073, %v1092
          %v1113 = vmul.f32 %v1074, %v1092
          %v1114 = vmul.f32 %v1075, %v1092
          %v1115 = vmul.f32 %v1076, %v1092
          %v1116 = vmul.f32 %v1077, %v1092
          %v1117 = vmul.f32 %v1078, %v1092
          %v1118 = vmul.f32 %v1079, %v1092
          %v1119 = vmul.f32 %v1080, %v1092
          %v1120 = vmul.f32 %v1081, %v1092
          %v1121 = vmul.f32 %v1082, %v1092
          %v1122 = vmul.f32 %v1083, %v1092
          %v1123 = vmul.f32 %v1084, %v1092
          %v1124 = vmul.f32 %v1085, %v1092
          %v1125 = vmul.f32 %v1086, %v1092
          %v1126 = vadd.f32 %v1023, %v1094
          %v1127 = vadd.f32 %v1024, %v1095
          %v1128 = vadd.f32 %v1025, %v1096
          %v1129 = vadd.f32 %v1026, %v1097
          %v1130 = vadd.f32 %v1027, %v1098
          %v1131 = vadd.f32 %v1028, %v1099
          %v1132 = vadd.f32 %v1029, %v1100
          %v1133 = vadd.f32 %v1030, %v1101
          %v1134 = vadd.f32 %v1031, %v1102
          %v1135 = vadd.f32 %v1032, %v1103
          %v1136 = vadd.f32 %v1033, %v1104
          %v1137 = vadd.f32 %v1034, %v1105
          %v1138 = vadd.f32 %v1035, %v1106
          %v1139 = vadd.f32 %v1036, %v1107
          %v1140 = vadd.f32 %v1037, %v1108
          %v1141 = vadd.f32 %v1038, %v1109
          %v1142 = vadd.f32 %v1039, %v1110
          %v1143 = vadd.f32 %v1040, %v1111
          %v1144 = vadd.f32 %v1041, %v1112
          %v1145 = vadd.f32 %v1042, %v1113
          %v1146 = vadd.f32 %v1043, %v1114
          %v1147 = vadd.f32 %v1044, %v1115
          %v1148 = vadd.f32 %v1045, %v1116
          %v1149 = vadd.f32 %v1046, %v1117
          %v1150 = vadd.f32 %v1047, %v1118
          %v1151 = vadd.f32 %v1048, %v1119
          %v1152 = vadd.f32 %v1049, %v1120
          %v1153 = vadd.f32 %v1050, %v1121
          %v1154 = vadd.f32 %v1051, %v1122
          %v1155 = vadd.f32 %v1052, %v1123
          %v1156 = vadd.f32 %v1053, %v1124
          %v1157 = vadd.f32 %v1054, %v1125
          %v1158 = vmax.f32 %v1126, 0.0
          %v1159 = vmax.f32 %v1127, 0.0
          %v1160 = vmax.f32 %v1128, 0.0
          %v1161 = vmax.f32 %v1129, 0.0
          %v1162 = vmax.f32 %v1130, 0.0
          %v1163 = vmax.f32 %v1131, 0.0
          %v1164 = vmax.f32 %v1132, 0.0
          %v1165 = vmax.f32 %v1133, 0.0
          %v1166 = vmax.f32 %v1134, 0.0
          %v1167 = vmax.f32 %v1135, 0.0
          %v1168 = vmax.f32 %v1136, 0.0
          %v1169 = vmax.f32 %v1137, 0.0
          %v1170 = vmax.f32 %v1138, 0.0
          %v1171 = vmax.f32 %v1139, 0.0
          %v1172 = vmax.f32 %v1140, 0.0
          %v1173 = vmax.f32 %v1141, 0.0
          %v1174 = vmax.f32 %v1142, 0.0
          %v1175 = vmax.f32 %v1143, 0.0
          %v1176 = vmax.f32 %v1144, 0.0
          %v1177 = vmax.f32 %v1145, 0.0
          %v1178 = vmax.f32 %v1146, 0.0
          %v1179 = vmax.f32 %v1147, 0.0
          %v1180 = vmax.f32 %v1148, 0.0
          %v1181 = vmax.f32 %v1149, 0.0
          %v1182 = vmax.f32 %v1150, 0.0
          %v1183 = vmax.f32 %v1151, 0.0
          %v1184 = vmax.f32 %v1152, 0.0
          %v1185 = vmax.f32 %v1153, 0.0
          %v1186 = vmax.f32 %v1154, 0.0
          %v1187 = vmax.f32 %v1155, 0.0
          %v1188 = vmax.f32 %v1156, 0.0
          %v1189 = vmax.f32 %v1157, 0.0
          %1190 = vst [vmem:[%s472] sm:$0xff] %v1158
          %1191 = vst [vmem:[%s472 + $0x8] sm:$0xff] %v1159
          %1192 = vst [vmem:[%s472 + $0x10] sm:$0xff] %v1160
          %1193 = vst [vmem:[%s472 + $0x18] sm:$0xff] %v1161
          %1194 = vst [vmem:[%s472 + $0x20] sm:$0xff] %v1162
          %1195 = vst [vmem:[%s472 + $0x28] sm:$0xff] %v1163
          %1196 = vst [vmem:[%s472 + $0x30] sm:$0xff] %v1164
          %1197 = vst [vmem:[%s472 + $0x38] sm:$0xff] %v1165
          %1198 = vst [vmem:[%s472 + $0x40] sm:$0xff] %v1166
          %1199 = vst [vmem:[%s472 + $0x48] sm:$0xff] %v1167
          %1200 = vst [vmem:[%s472 + $0x50] sm:$0xff] %v1168
          %1201 = vst [vmem:[%s472 + $0x58] sm:$0xff] %v1169
          %1202 = vst [vmem:[%s472 + $0x60] sm:$0xff] %v1170
          %1203 = vst [vmem:[%s472 + $0x68] sm:$0xff] %v1171
          %1204 = vst [vmem:[%s472 + $0x70] sm:$0xff] %v1172
          %1205 = vst [vmem:[%s472 + $0x78] sm:$0xff] %v1173
          %1206 = vst [vmem:[%s472 + $0x80] sm:$0xff] %v1174
          %1207 = vst [vmem:[%s472 + $0x88] sm:$0xff] %v1175
          %1208 = vst [vmem:[%s472 + $0x90] sm:$0xff] %v1176
          %1209 = vst [vmem:[%s472 + $0x98] sm:$0xff] %v1177
          %1210 = vst [vmem:[%s472 + $0xa0] sm:$0xff] %v1178
          %1211 = vst [vmem:[%s472 + $0xa8] sm:$0xff] %v1179
          %1212 = vst [vmem:[%s472 + $0xb0] sm:$0xff] %v1180
          %1213 = vst [vmem:[%s472 + $0xb8] sm:$0xff] %v1181
          %1214 = vst [vmem:[%s472 + $0xc0] sm:$0xff] %v1182
          %1215 = vst [vmem:[%s472 + $0xc8] sm:$0xff] %v1183
          %1216 = vst [vmem:[%s472 + $0xd0] sm:$0xff] %v1184
          %1217 = vst [vmem:[%s472 + $0xd8] sm:$0xff] %v1185
          %1218 = vst [vmem:[%s472 + $0xe0] sm:$0xff] %v1186
          %1219 = vst [vmem:[%s472 + $0xe8] sm:$0xff] %v1187
          %1220 = vst [vmem:[%s472 + $0xf0] sm:$0xff] %v1188
          %1221 = vst [vmem:[%s472 + $0xf8] sm:$0xff] %v1189
        $region89: #{residual_block.5} parent=76 // pred_fallthru
          _
        %s1222 = sand.u32 %s179, 1
        %s1223 = scalar_lea.sflag [#allocation5], %s1222
        %s1224 = sand.u32 %s179, 1
        %s1225 = smul.addr %s1224, 256
        %s1226 = scalar_lea.vmem [#allocation4], %s1225
        // Predicated region
        $region90: #{residual_block.5} parent=76 // pred_check
          %p1227 = pneg %p189
        $region91: #{residual_block.5} parent=76 // pred_check_branch
          %1229 = sbr.rel (%p1227) target = $region93
        $region92: #{residual_block.5} parent=76 // pred_region
          %s1230 = smul.u32 32, %s25
          %s1232 = ssub.s32 4096, 4096
          %1233 = vsyncadd %s1223, %s1232
          %s1234 = smul.addr %s24, 32
          %s1235 = sadd.s32 %s1230, %s1234
          %s1236 = smul.addr %s1235, 128
          %s1237 = scalar_lea.hbm %s5, %s1236
          %s1238 = sshll.u32 %s1226, 4
          %s1239 = int_to_ptr.vmem [resolvable:$true] %s1238
          %1244 = dma.vmem_to_hbm [thread:$0]  %s1239, 4096, %s1237, %s1223, 128, 128, 8
        $region93: #{residual_block.5} parent=76 // pred_fallthru
          _
      $region77: #{residual_block.5} parent=5 // pred_fallthru
        _
      %p1245 = scmp.le.s32.totalorder 2, %s14
      // Predicated region
      $region94: #{residual_block.5} parent=5 // pred_check
        %p1246 = pneg %p1245
      $region95: #{residual_block.5} parent=5 // pred_check_branch
        %1248 = sbr.rel (%p1246) target = $region97
      $region96: #{residual_block.5} parent=5 // pred_region
        %s1249 = ssub.s32 %s14, 2
        // Predicated region
        $region98: #{residual_block.5} parent=96 // pred_check
          %p1250 = pneg %p195
        $region99: #{residual_block.5} parent=96 // pred_check_branch
          %1252 = sbr.rel (%p1250) target = $region101
        $region100: #{residual_block.5} parent=96 // pred_region
          %s1253 = sand.u32 %s180, 1
          %s1254 = scalar_lea.sflag [#allocation5], %s1253
          %s1255 = sand.u32 %s180, 1
          %s1256 = smul.addr %s1255, 256
          %s1257 = scalar_lea.vmem [#allocation4], %s1256
          %1258 = dma.done %s1254, 4096
        $region101: #{residual_block.5} parent=96 // pred_fallthru
          _
      $region97: #{residual_block.5} parent=5 // pred_fallthru
        _
    $region6: #{residual_block.5} parent=1 // loop_footer
      %s18 = sadd.s32 1, %s14
    $region7: #{residual_block.5} parent=1 // loop_footer_branch
      %13 = sbr.rel target = $region3
    $region8: #{residual_block.5} parent=1 // loop_exit
      _
    %1259 = vsyncpa [#allocation5], 1
    %s1260 = scalar_lea.sflag [#allocation5], 1
    %1261 = vsyncpa %s1260, 1

</llo_original>
